<compile_context>
chip_gen: v7x
topology: tpu7x:2x2x1
jax: 0.10.0
libtpu: 0.0.40
codegen_flags: <defaults>
</compile_context>

<pallas_src>
import functools

import jax
import jax.numpy as jnp
from jax.experimental import pallas as pl
from jax.experimental.pallas import tpu as pltpu


_CO1_PAD = 128  # conv1 output channels padded to one full lane width


# ----------------------------- Pallas kernels ------------------------------

def _conv1_pool_kernel(p_ref, w_ref, b_ref, o_ref, y_ref, *, oh, ow):
    # p_ref: (1, oh*ow, K) bf16  im2col patches of one sample
    # w_ref: (K, 128)     bf16  conv1 weight, Cout zero-padded to 128
    # b_ref: (1, 128)     f32
    # o_ref: (1, oh-1, ow-1, 128) bf16  pooled output
    # y_ref: (oh*ow, 128) f32  VMEM scratch holding the pre-pool conv output
    y = jnp.dot(p_ref[0], w_ref[...], preferred_element_type=jnp.float32)
    y_ref[...] = jnp.maximum(y + b_ref[...], 0.0)              # bias + ReLU
    # F.max_pool2d(x, 2, 1): 2x2 window, stride 1 (rows of y are (h, w) major).
    for r in range(oh - 1):
        top = y_ref[r * ow:(r + 1) * ow, :]
        bot = y_ref[(r + 1) * ow:(r + 2) * ow, :]
        v = jnp.maximum(top, bot)                               # (ow, 128)
        o_ref[0, r] = jnp.maximum(v[:ow - 1, :], v[1:, :]).astype(o_ref.dtype)


def _conv2_pool_fc_kernel(p_ref, w2_ref, b2_ref, w_fc1_ref, b_fc1_ref,
                          w_fc2_ref, b_fc2_ref, o_ref, *, oh, ow):
    # p_ref:     (1, oh*ow, K2)          bf16  im2col patches of one sample
    # w2_ref:    (K2, C2)                bf16  conv2 weight (Cin padded to 128)
    # b2_ref:    (1, C2)                 f32
    # w_fc1_ref: ((oh-1)*(ow-1), C2, F1) bf16  fc1 weight, (h*w, C, out) layout
    # b_fc1_ref: (1, F1)                 f32
    # w_fc2_ref: (F1, NC) bf16;  b_fc2_ref: (1, NC) f32
    # o_ref:     (1, 1, NC)              f32   logits for this sample
    y = jnp.dot(p_ref[0], w2_ref[...], preferred_element_type=jnp.float32)
    y = jnp.maximum(y + b2_ref[...], 0.0)                       # (oh*ow, C2)
    acc = b_fc1_ref[...]                                        # (1, F1) f32
    for r in range(oh - 1):                                     # fused pool + fc1
        top = y[r * ow:(r + 1) * ow, :]
        bot = y[(r + 1) * ow:(r + 2) * ow, :]
        v = jnp.maximum(top, bot)                               # (ow, C2)
        prow = jnp.maximum(v[:ow - 1, :], v[1:, :]).astype(w_fc1_ref.dtype)
        for c in range(ow - 1):
            # flatten order (h, w, C) -> one (1,C2)@(C2,F1) dot per spatial tap
            acc = acc + jnp.dot(prow[c:c + 1, :],
                                w_fc1_ref[r * (ow - 1) + c],
                                preferred_element_type=jnp.float32)
    hidden = jnp.maximum(acc, 0.0).astype(w_fc2_ref.dtype)      # ReLU(fc1)
    o_ref[0] = (jnp.dot(hidden, w_fc2_ref[...],
                        preferred_element_type=jnp.float32) + b_fc2_ref[...])


# ----------------------------- Pallas wrappers ------------------------------

def _conv1_pool(patches, w, b, oh, ow):
    B, M, K = patches.shape
    CO = w.shape[1]
    kernel = functools.partial(_conv1_pool_kernel, oh=oh, ow=ow)
    return pl.pallas_call(
        kernel,
        out_shape=jax.ShapeDtypeStruct((B, oh - 1, ow - 1, CO), jnp.bfloat16),
        grid=(B,),
        in_specs=[pl.BlockSpec((1, M, K), lambda i: (i, 0, 0)),
                  pl.BlockSpec((K, CO), lambda i: (0, 0)),
                  pl.BlockSpec((1, CO), lambda i: (0, 0))],
        out_specs=pl.BlockSpec((1, oh - 1, ow - 1, CO), lambda i: (i, 0, 0, 0)),
        scratch_shapes=[pltpu.VMEM((M, CO), jnp.float32)],
        compiler_params=pltpu.CompilerParams(
            dimension_semantics=("parallel",)),
    )(patches, w, b)


def _conv2_pool_fc(patches, w2, b2, w_fc1, b_fc1, w_fc2, b_fc2, oh, ow):
    B, M, K = patches.shape
    NC = w_fc2.shape[1]
    kernel = functools.partial(_conv2_pool_fc_kernel, oh=oh, ow=ow)
    out = pl.pallas_call(
        kernel,
        out_shape=jax.ShapeDtypeStruct((B, 1, NC), jnp.float32),
        grid=(B,),
        in_specs=[pl.BlockSpec((1, M, K), lambda i: (i, 0, 0)),
                  pl.BlockSpec(w2.shape, lambda i: (0, 0)),
                  pl.BlockSpec(b2.shape, lambda i: (0, 0)),
                  pl.BlockSpec(w_fc1.shape, lambda i: (0, 0, 0)),
                  pl.BlockSpec(b_fc1.shape, lambda i: (0, 0)),
                  pl.BlockSpec(w_fc2.shape, lambda i: (0, 0)),
                  pl.BlockSpec(b_fc2.shape, lambda i: (0, 0))],
        out_specs=pl.BlockSpec((1, 1, NC), lambda i: (i, 0, 0)),
        compiler_params=pltpu.CompilerParams(
            dimension_semantics=("parallel",)),
    )(patches, w2, b2, w_fc1, b_fc1, w_fc2, b_fc2)
    return out.reshape(B, NC)


# ------------------------------- XLA glue -----------------------------------

def _extract_patches(x, ksize, stride):
    """NHWC im2col: (B, H, W, C) -> (B, OH*OW, ksize*ksize*C).

    Feature order is (kh, kw, C) with C fastest (matched by prepare_params).
    Thin glue: k*k strided slices + one concat (no 6-D stack/transpose)."""
    B, H, W, C = x.shape
    oh = (H - ksize) // stride + 1
    ow = (W - ksize) // stride + 1
    taps = []
    for i in range(ksize):
        for j in range(ksize):
            taps.append(x[:, i:i + (oh - 1) * stride + 1:stride,
                          j:j + (ow - 1) * stride + 1:stride, :])
    patches = jnp.concatenate(taps, axis=-1)          # (B, oh, ow, k*k*C)
    return patches.reshape(B, oh * ow, ksize * ksize * C), oh, ow


def cnn_mnist_forward(x, params):
    """x: (B, num_channels, 28, 28) float32, PyTorch NCHW layout."""
    x = jnp.transpose(x, (0, 2, 3, 1)).astype(jnp.bfloat16)   # NHWC
    x = jnp.pad(x, ((0, 0), (3, 3), (3, 3), (0, 0)))          # conv1 padding=3
    # conv1 (8x8, stride 2) + ReLU + max_pool2d(2, 1)  -> (B, 13, 13, 128) bf16
    p1, oh1, ow1 = _extract_patches(x, 8, 2)
    h1 = _conv1_pool(p1, params["w1"], params["b1"], oh1, ow1)
    # conv2 (4x4, stride 2) + ReLU + pool + flatten + fc1 + ReLU + fc2
    p2, oh2, ow2 = _extract_patches(h1, 4, 2)
    return _conv2_pool_fc(p2, params["w2"], params["b2"],
                          params["w_fc1"], params["b_fc1"],
                          params["w_fc2"], params["b_fc2"], oh2, ow2)


# --------------------------- parameter handling ------------------------------

def init_torch_params(key, num_channels=1, num_classes=10):
    """Parameters in the original PyTorch layouts."""
    ks = jax.random.split(key, 8)

    def rnd(k, shape, scale=0.05):
        return (scale * jax.random.normal(k, shape)).astype(jnp.float32)

    return {
        "conv1_w": rnd(ks[0], (16, num_channels, 8, 8)),
        "conv1_b": rnd(ks[1], (16,)),
        "conv2_w": rnd(ks[2], (32, 16, 4, 4)),
        "conv2_b": rnd(ks[3], (32,)),
        "fc1_w":   rnd(ks[4], (32, 32 * 4 * 4)),
        "fc1_b":   rnd(ks[5], (32,)),
        "fc2_w":   rnd(ks[6], (num_classes, 32)),
        "fc2_b":   rnd(ks[7], (num_classes,)),
    }


def prepare_params(tp):
    """One-time conversion of PyTorch-layout weights to kernel layouts."""
    bf16 = jnp.bfloat16

    # conv1: (Cout, Cin, kh, kw) -> (kh*kw*Cin, Cout) matching patch order,
    # Cout zero-padded to 128 for lane-dense stores of the HBM intermediate.
    w1 = tp["conv1_w"]
    co1, cin1, kh1, kw1 = w1.shape
    w1 = jnp.transpose(w1, (2, 3, 1, 0)).reshape(kh1 * kw1 * cin1, co1)
    w1 = jnp.pad(w1, ((0, 0), (0, _CO1_PAD - co1)))
    b1 = jnp.pad(tp["conv1_b"], (0, _CO1_PAD - co1)).reshape(1, _CO1_PAD)

    # conv2: pad Cin 16 -> 128 to consume the padded conv1 output directly.
    w2 = tp["conv2_w"]
    co2, cin2, kh2, kw2 = w2.shape
    w2 = jnp.transpose(w2, (2, 3, 1, 0))                       # (kh, kw, Cin, Cout)
    w2 = jnp.pad(w2, ((0, 0), (0, 0), (0, _CO1_PAD - cin2), (0, 0)))
    w2 = w2.reshape(kh2 * kw2 * _CO1_PAD, co2)
    b2 = tp["conv2_b"].reshape(1, co2)

    # fc1: torch flattens NCHW (C, H, W); the kernel consumes (H, W, C), one
    # (C -> out) matmul per spatial tap -> store as (H*W, C, out).
    fw1 = tp["fc1_w"]                                          # (out, C*H*W)
    fo = fw1.shape[0]
    fw1 = fw1.reshape(fo, co2, 4, 4)                           # (out, C, H, W)
    fw1 = jnp.transpose(fw1, (2, 3, 1, 0)).reshape(4 * 4, co2, fo)
    fb1 = tp["fc1_b"].reshape(1, fo)

    fw2 = jnp.transpose(tp["fc2_w"], (1, 0))                   # (32, num_classes)
    fb2 = tp["fc2_b"].reshape(1, -1)

    return {
        "w1": w1.astype(bf16), "b1": b1.astype(jnp.float32),
        "w2": w2.astype(bf16), "b2": b2.astype(jnp.float32),
        "w_fc1": fw1.astype(bf16), "b_fc1": fb1.astype(jnp.float32),
        "w_fc2": fw2.astype(bf16), "b_fc2": fb2.astype(jnp.float32),
    }


if __name__ == "__main__":
    key = jax.random.PRNGKey(0)
    pkey, xkey = jax.random.split(key)
    torch_params = init_torch_params(pkey, num_channels=1, num_classes=10)
    params = prepare_params(torch_params)
    # The hard-coded 32*4*4 flatten in forward() implies 28x28 inputs (MNIST).
    x = jax.random.normal(xkey, (2, 1, 28, 28), dtype=jnp.float32)
    out = jax.jit(cnn_mnist_forward)(x, params)
    jax.block_until_ready(out)
    assert out.shape == (2, 10) and out.dtype == jnp.float32
    print("KERNEL_OK")
</pallas_src>

<mosaic_0001>
module attributes {stable_mosaic.version = 11 : i64} {
  func.func @_conv1_pool_kernel(%arg0: i32, %arg1: memref<1x196x64xbf16, #tpu.memory_space<vmem>>, %arg2: memref<64x128xbf16, #tpu.memory_space<vmem>>, %arg3: memref<1x128xf32, #tpu.memory_space<vmem>>, %arg4: memref<1x13x13x128xbf16, #tpu.memory_space<vmem>>, %arg5: memref<196x128xf32, #tpu.memory_space<vmem>>) attributes {dimension_semantics = [#tpu.dimension_semantics<parallel>], iteration_bounds = array<i64: 2>, scalar_prefetch = 0 : i64, scratch_operands = 1 : i64, tpu.core_type = #tpu.core_type<tc>, window_params = [{transform_indices = @transform_0, window_bounds = array<i64: 1, 196, 64>}, {pipeline_mode = #tpu.pipeline_mode<synchronous>, transform_indices = @transform_1, window_bounds = array<i64: 64, 128>}, {pipeline_mode = #tpu.pipeline_mode<synchronous>, transform_indices = @transform_2, window_bounds = array<i64: 1, 128>}, {transform_indices = @transform_3, window_bounds = array<i64: 1, 13, 13, 128>}]} {
    %c0 = arith.constant 0 : index
    %c0_0 = arith.constant 0 : index
    %c0_1 = arith.constant 0 : index
    %0 = vector.load %arg1[%c0, %c0_0, %c0_1] : memref<1x196x64xbf16, #tpu.memory_space<vmem>>, vector<1x196x64xbf16>
    %1 = vector.shape_cast %0 : vector<1x196x64xbf16> to vector<196x64xbf16>
    %c0_2 = arith.constant 0 : index
    %c0_3 = arith.constant 0 : index
    %2 = vector.load %arg2[%c0_2, %c0_3] : memref<64x128xbf16, #tpu.memory_space<vmem>>, vector<64x128xbf16>
    %cst = arith.constant dense<0.000000e+00> : vector<196x128xf32>
    %3 = tpu.matmul %1, %2, %cst {dimension_numbers = #tpu.dot_dimension_numbers<[1], [0], [0], [1], [0, 0, 1, 1], [], []>} : vector<196x64xbf16>, vector<64x128xbf16>, vector<196x128xf32> -> vector<196x128xf32>
    %c0_4 = arith.constant 0 : index
    %c0_5 = arith.constant 0 : index
    %4 = vector.load %arg3[%c0_4, %c0_5] : memref<1x128xf32, #tpu.memory_space<vmem>>, vector<1x128xf32>
    %5 = vector.broadcast %4 : vector<1x128xf32> to vector<196x128xf32>
    %6 = arith.addf %3, %5 : vector<196x128xf32>
    %cst_6 = arith.constant 0.000000e+00 : f32
    %7 = vector.broadcast %cst_6 : f32 to vector<196x128xf32>
    %8 = arith.maximumf %6, %7 : vector<196x128xf32>
    %c0_7 = arith.constant 0 : index
    %c0_8 = arith.constant 0 : index
    %9 = vector.load %arg5[%c0_7, %c0_8] : memref<196x128xf32, #tpu.memory_space<vmem>>, vector<196x128xf32>
    tpu.vector_store %arg5[%c0_7, %c0_8], %8 {strides = array<i32>} : memref<196x128xf32, #tpu.memory_space<vmem>>, vector<196x128xf32>,
    %c0_9 = arith.constant 0 : index
    %c0_10 = arith.constant 0 : index
    %10 = vector.load %arg5[%c0_9, %c0_10] : memref<196x128xf32, #tpu.memory_space<vmem>>, vector<14x128xf32>
    %c14 = arith.constant 14 : index
    %c0_11 = arith.constant 0 : index
    %11 = vector.load %arg5[%c14, %c0_11] : memref<196x128xf32, #tpu.memory_space<vmem>>, vector<14x128xf32>
    %12 = arith.maximumf %10, %11 : vector<14x128xf32>
    %13 = vector.extract_strided_slice %12 {offsets = [0, 0], sizes = [13, 128], strides = [1, 1]} : vector<14x128xf32> to vector<13x128xf32>
    %14 = vector.extract_strided_slice %12 {offsets = [1, 0], sizes = [13, 128], strides = [1, 1]} : vector<14x128xf32> to vector<13x128xf32>
    %15 = arith.maximumf %13, %14 : vector<13x128xf32>
    %16 = arith.truncf %15 : vector<13x128xf32> to vector<13x128xbf16>
    %c0_12 = arith.constant 0 : index
    %c0_13 = arith.constant 0 : index
    %c0_14 = arith.constant 0 : index
    %c0_15 = arith.constant 0 : index
    %17 = vector.load %arg4[%c0_12, %c0_13, %c0_14, %c0_15] : memref<1x13x13x128xbf16, #tpu.memory_space<vmem>>, vector<1x1x13x128xbf16>
    %18 = vector.shape_cast %17 : vector<1x1x13x128xbf16> to vector<13x128xbf16>
    %19 = vector.shape_cast %16 : vector<13x128xbf16> to vector<1x1x13x128xbf16>
    tpu.vector_store %arg4[%c0_12, %c0_13, %c0_14, %c0_15], %19 {strides = array<i32>} : memref<1x13x13x128xbf16, #tpu.memory_space<vmem>>, vector<1x1x13x128xbf16>,
    %c14_16 = arith.constant 14 : index
    %c0_17 = arith.constant 0 : index
    %20 = vector.load %arg5[%c14_16, %c0_17] : memref<196x128xf32, #tpu.memory_space<vmem>>, vector<14x128xf32>
    %c28 = arith.constant 28 : index
    %c0_18 = arith.constant 0 : index
    %21 = vector.load %arg5[%c28, %c0_18] : memref<196x128xf32, #tpu.memory_space<vmem>>, vector<14x128xf32>
    %22 = arith.maximumf %20, %21 : vector<14x128xf32>
    %23 = vector.extract_strided_slice %22 {offsets = [0, 0], sizes = [13, 128], strides = [1, 1]} : vector<14x128xf32> to vector<13x128xf32>
    %24 = vector.extract_strided_slice %22 {offsets = [1, 0], sizes = [13, 128], strides = [1, 1]} : vector<14x128xf32> to vector<13x128xf32>
    %25 = arith.maximumf %23, %24 : vector<13x128xf32>
    %26 = arith.truncf %25 : vector<13x128xf32> to vector<13x128xbf16>
    %c0_19 = arith.constant 0 : index
    %c1 = arith.constant 1 : index
    %c0_20 = arith.constant 0 : index
    %c0_21 = arith.constant 0 : index
    %27 = vector.load %arg4[%c0_19, %c1, %c0_20, %c0_21] : memref<1x13x13x128xbf16, #tpu.memory_space<vmem>>, vector<1x1x13x128xbf16>
    %28 = vector.shape_cast %27 : vector<1x1x13x128xbf16> to vector<13x128xbf16>
    %29 = vector.shape_cast %26 : vector<13x128xbf16> to vector<1x1x13x128xbf16>
    tpu.vector_store %arg4[%c0_19, %c1, %c0_20, %c0_21], %29 {strides = array<i32>} : memref<1x13x13x128xbf16, #tpu.memory_space<vmem>>, vector<1x1x13x128xbf16>,
    %c28_22 = arith.constant 28 : index
    %c0_23 = arith.constant 0 : index
    %30 = vector.load %arg5[%c28_22, %c0_23] : memref<196x128xf32, #tpu.memory_space<vmem>>, vector<14x128xf32>
    %c42 = arith.constant 42 : index
    %c0_24 = arith.constant 0 : index
    %31 = vector.load %arg5[%c42, %c0_24] : memref<196x128xf32, #tpu.memory_space<vmem>>, vector<14x128xf32>
    %32 = arith.maximumf %30, %31 : vector<14x128xf32>
    %33 = vector.extract_strided_slice %32 {offsets = [0, 0], sizes = [13, 128], strides = [1, 1]} : vector<14x128xf32> to vector<13x128xf32>
    %34 = vector.extract_strided_slice %32 {offsets = [1, 0], sizes = [13, 128], strides = [1, 1]} : vector<14x128xf32> to vector<13x128xf32>
    %35 = arith.maximumf %33, %34 : vector<13x128xf32>
    %36 = arith.truncf %35 : vector<13x128xf32> to vector<13x128xbf16>
    %c0_25 = arith.constant 0 : index
    %c2 = arith.constant 2 : index
    %c0_26 = arith.constant 0 : index
    %c0_27 = arith.constant 0 : index
    %37 = vector.load %arg4[%c0_25, %c2, %c0_26, %c0_27] : memref<1x13x13x128xbf16, #tpu.memory_space<vmem>>, vector<1x1x13x128xbf16>
    %38 = vector.shape_cast %37 : vector<1x1x13x128xbf16> to vector<13x128xbf16>
    %39 = vector.shape_cast %36 : vector<13x128xbf16> to vector<1x1x13x128xbf16>
    tpu.vector_store %arg4[%c0_25, %c2, %c0_26, %c0_27], %39 {strides = array<i32>} : memref<1x13x13x128xbf16, #tpu.memory_space<vmem>>, vector<1x1x13x128xbf16>,
    %c42_28 = arith.constant 42 : index
    %c0_29 = arith.constant 0 : index
    %40 = vector.load %arg5[%c42_28, %c0_29] : memref<196x128xf32, #tpu.memory_space<vmem>>, vector<14x128xf32>
    %c56 = arith.constant 56 : index
    %c0_30 = arith.constant 0 : index
    %41 = vector.load %arg5[%c56, %c0_30] : memref<196x128xf32, #tpu.memory_space<vmem>>, vector<14x128xf32>
    %42 = arith.maximumf %40, %41 : vector<14x128xf32>
    %43 = vector.extract_strided_slice %42 {offsets = [0, 0], sizes = [13, 128], strides = [1, 1]} : vector<14x128xf32> to vector<13x128xf32>
    %44 = vector.extract_strided_slice %42 {offsets = [1, 0], sizes = [13, 128], strides = [1, 1]} : vector<14x128xf32> to vector<13x128xf32>
    %45 = arith.maximumf %43, %44 : vector<13x128xf32>
    %46 = arith.truncf %45 : vector<13x128xf32> to vector<13x128xbf16>
    %c0_31 = arith.constant 0 : index
    %c3 = arith.constant 3 : index
    %c0_32 = arith.constant 0 : index
    %c0_33 = arith.constant 0 : index
    %47 = vector.load %arg4[%c0_31, %c3, %c0_32, %c0_33] : memref<1x13x13x128xbf16, #tpu.memory_space<vmem>>, vector<1x1x13x128xbf16>
    %48 = vector.shape_cast %47 : vector<1x1x13x128xbf16> to vector<13x128xbf16>
    %49 = vector.shape_cast %46 : vector<13x128xbf16> to vector<1x1x13x128xbf16>
    tpu.vector_store %arg4[%c0_31, %c3, %c0_32, %c0_33], %49 {strides = array<i32>} : memref<1x13x13x128xbf16, #tpu.memory_space<vmem>>, vector<1x1x13x128xbf16>,
    %c56_34 = arith.constant 56 : index
    %c0_35 = arith.constant 0 : index
    %50 = vector.load %arg5[%c56_34, %c0_35] : memref<196x128xf32, #tpu.memory_space<vmem>>, vector<14x128xf32>
    %c70 = arith.constant 70 : index
    %c0_36 = arith.constant 0 : index
    %51 = vector.load %arg5[%c70, %c0_36] : memref<196x128xf32, #tpu.memory_space<vmem>>, vector<14x128xf32>
    %52 = arith.maximumf %50, %51 : vector<14x128xf32>
    %53 = vector.extract_strided_slice %52 {offsets = [0, 0], sizes = [13, 128], strides = [1, 1]} : vector<14x128xf32> to vector<13x128xf32>
    %54 = vector.extract_strided_slice %52 {offsets = [1, 0], sizes = [13, 128], strides = [1, 1]} : vector<14x128xf32> to vector<13x128xf32>
    %55 = arith.maximumf %53, %54 : vector<13x128xf32>
    %56 = arith.truncf %55 : vector<13x128xf32> to vector<13x128xbf16>
    %c0_37 = arith.constant 0 : index
    %c4 = arith.constant 4 : index
    %c0_38 = arith.constant 0 : index
    %c0_39 = arith.constant 0 : index
    %57 = vector.load %arg4[%c0_37, %c4, %c0_38, %c0_39] : memref<1x13x13x128xbf16, #tpu.memory_space<vmem>>, vector<1x1x13x128xbf16>
    %58 = vector.shape_cast %57 : vector<1x1x13x128xbf16> to vector<13x128xbf16>
    %59 = vector.shape_cast %56 : vector<13x128xbf16> to vector<1x1x13x128xbf16>
    tpu.vector_store %arg4[%c0_37, %c4, %c0_38, %c0_39], %59 {strides = array<i32>} : memref<1x13x13x128xbf16, #tpu.memory_space<vmem>>, vector<1x1x13x128xbf16>,
    %c70_40 = arith.constant 70 : index
    %c0_41 = arith.constant 0 : index
    %60 = vector.load %arg5[%c70_40, %c0_41] : memref<196x128xf32, #tpu.memory_space<vmem>>, vector<14x128xf32>
    %c84 = arith.constant 84 : index
    %c0_42 = arith.constant 0 : index
    %61 = vector.load %arg5[%c84, %c0_42] : memref<196x128xf32, #tpu.memory_space<vmem>>, vector<14x128xf32>
    %62 = arith.maximumf %60, %61 : vector<14x128xf32>
    %63 = vector.extract_strided_slice %62 {offsets = [0, 0], sizes = [13, 128], strides = [1, 1]} : vector<14x128xf32> to vector<13x128xf32>
    %64 = vector.extract_strided_slice %62 {offsets = [1, 0], sizes = [13, 128], strides = [1, 1]} : vector<14x128xf32> to vector<13x128xf32>
    %65 = arith.maximumf %63, %64 : vector<13x128xf32>
    %66 = arith.truncf %65 : vector<13x128xf32> to vector<13x128xbf16>
    %c0_43 = arith.constant 0 : index
    %c5 = arith.constant 5 : index
    %c0_44 = arith.constant 0 : index
    %c0_45 = arith.constant 0 : index
    %67 = vector.load %arg4[%c0_43, %c5, %c0_44, %c0_45] : memref<1x13x13x128xbf16, #tpu.memory_space<vmem>>, vector<1x1x13x128xbf16>
    %68 = vector.shape_cast %67 : vector<1x1x13x128xbf16> to vector<13x128xbf16>
    %69 = vector.shape_cast %66 : vector<13x128xbf16> to vector<1x1x13x128xbf16>
    tpu.vector_store %arg4[%c0_43, %c5, %c0_44, %c0_45], %69 {strides = array<i32>} : memref<1x13x13x128xbf16, #tpu.memory_space<vmem>>, vector<1x1x13x128xbf16>,
    %c84_46 = arith.constant 84 : index
    %c0_47 = arith.constant 0 : index
    %70 = vector.load %arg5[%c84_46, %c0_47] : memref<196x128xf32, #tpu.memory_space<vmem>>, vector<14x128xf32>
    %c98 = arith.constant 98 : index
    %c0_48 = arith.constant 0 : index
    %71 = vector.load %arg5[%c98, %c0_48] : memref<196x128xf32, #tpu.memory_space<vmem>>, vector<14x128xf32>
    %72 = arith.maximumf %70, %71 : vector<14x128xf32>
    %73 = vector.extract_strided_slice %72 {offsets = [0, 0], sizes = [13, 128], strides = [1, 1]} : vector<14x128xf32> to vector<13x128xf32>
    %74 = vector.extract_strided_slice %72 {offsets = [1, 0], sizes = [13, 128], strides = [1, 1]} : vector<14x128xf32> to vector<13x128xf32>
    %75 = arith.maximumf %73, %74 : vector<13x128xf32>
    %76 = arith.truncf %75 : vector<13x128xf32> to vector<13x128xbf16>
    %c0_49 = arith.constant 0 : index
    %c6 = arith.constant 6 : index
    %c0_50 = arith.constant 0 : index
    %c0_51 = arith.constant 0 : index
    %77 = vector.load %arg4[%c0_49, %c6, %c0_50, %c0_51] : memref<1x13x13x128xbf16, #tpu.memory_space<vmem>>, vector<1x1x13x128xbf16>
    %78 = vector.shape_cast %77 : vector<1x1x13x128xbf16> to vector<13x128xbf16>
    %79 = vector.shape_cast %76 : vector<13x128xbf16> to vector<1x1x13x128xbf16>
    tpu.vector_store %arg4[%c0_49, %c6, %c0_50, %c0_51], %79 {strides = array<i32>} : memref<1x13x13x128xbf16, #tpu.memory_space<vmem>>, vector<1x1x13x128xbf16>,
    %c98_52 = arith.constant 98 : index
    %c0_53 = arith.constant 0 : index
    %80 = vector.load %arg5[%c98_52, %c0_53] : memref<196x128xf32, #tpu.memory_space<vmem>>, vector<14x128xf32>
    %c112 = arith.constant 112 : index
    %c0_54 = arith.constant 0 : index
    %81 = vector.load %arg5[%c112, %c0_54] : memref<196x128xf32, #tpu.memory_space<vmem>>, vector<14x128xf32>
    %82 = arith.maximumf %80, %81 : vector<14x128xf32>
    %83 = vector.extract_strided_slice %82 {offsets = [0, 0], sizes = [13, 128], strides = [1, 1]} : vector<14x128xf32> to vector<13x128xf32>
    %84 = vector.extract_strided_slice %82 {offsets = [1, 0], sizes = [13, 128], strides = [1, 1]} : vector<14x128xf32> to vector<13x128xf32>
    %85 = arith.maximumf %83, %84 : vector<13x128xf32>
    %86 = arith.truncf %85 : vector<13x128xf32> to vector<13x128xbf16>
    %c0_55 = arith.constant 0 : index
    %c7 = arith.constant 7 : index
    %c0_56 = arith.constant 0 : index
    %c0_57 = arith.constant 0 : index
    %87 = vector.load %arg4[%c0_55, %c7, %c0_56, %c0_57] : memref<1x13x13x128xbf16, #tpu.memory_space<vmem>>, vector<1x1x13x128xbf16>
    %88 = vector.shape_cast %87 : vector<1x1x13x128xbf16> to vector<13x128xbf16>
    %89 = vector.shape_cast %86 : vector<13x128xbf16> to vector<1x1x13x128xbf16>
    tpu.vector_store %arg4[%c0_55, %c7, %c0_56, %c0_57], %89 {strides = array<i32>} : memref<1x13x13x128xbf16, #tpu.memory_space<vmem>>, vector<1x1x13x128xbf16>,
    %c112_58 = arith.constant 112 : index
    %c0_59 = arith.constant 0 : index
    %90 = vector.load %arg5[%c112_58, %c0_59] : memref<196x128xf32, #tpu.memory_space<vmem>>, vector<14x128xf32>
    %c126 = arith.constant 126 : index
    %c0_60 = arith.constant 0 : index
    %91 = vector.load %arg5[%c126, %c0_60] : memref<196x128xf32, #tpu.memory_space<vmem>>, vector<14x128xf32>
    %92 = arith.maximumf %90, %91 : vector<14x128xf32>
    %93 = vector.extract_strided_slice %92 {offsets = [0, 0], sizes = [13, 128], strides = [1, 1]} : vector<14x128xf32> to vector<13x128xf32>
    %94 = vector.extract_strided_slice %92 {offsets = [1, 0], sizes = [13, 128], strides = [1, 1]} : vector<14x128xf32> to vector<13x128xf32>
    %95 = arith.maximumf %93, %94 : vector<13x128xf32>
    %96 = arith.truncf %95 : vector<13x128xf32> to vector<13x128xbf16>
    %c0_61 = arith.constant 0 : index
    %c8 = arith.constant 8 : index
    %c0_62 = arith.constant 0 : index
    %c0_63 = arith.constant 0 : index
    %97 = vector.load %arg4[%c0_61, %c8, %c0_62, %c0_63] : memref<1x13x13x128xbf16, #tpu.memory_space<vmem>>, vector<1x1x13x128xbf16>
    %98 = vector.shape_cast %97 : vector<1x1x13x128xbf16> to vector<13x128xbf16>
    %99 = vector.shape_cast %96 : vector<13x128xbf16> to vector<1x1x13x128xbf16>
    tpu.vector_store %arg4[%c0_61, %c8, %c0_62, %c0_63], %99 {strides = array<i32>} : memref<1x13x13x128xbf16, #tpu.memory_space<vmem>>, vector<1x1x13x128xbf16>,
    %c126_64 = arith.constant 126 : index
    %c0_65 = arith.constant 0 : index
    %100 = vector.load %arg5[%c126_64, %c0_65] : memref<196x128xf32, #tpu.memory_space<vmem>>, vector<14x128xf32>
    %c140 = arith.constant 140 : index
    %c0_66 = arith.constant 0 : index
    %101 = vector.load %arg5[%c140, %c0_66] : memref<196x128xf32, #tpu.memory_space<vmem>>, vector<14x128xf32>
    %102 = arith.maximumf %100, %101 : vector<14x128xf32>
    %103 = vector.extract_strided_slice %102 {offsets = [0, 0], sizes = [13, 128], strides = [1, 1]} : vector<14x128xf32> to vector<13x128xf32>
    %104 = vector.extract_strided_slice %102 {offsets = [1, 0], sizes = [13, 128], strides = [1, 1]} : vector<14x128xf32> to vector<13x128xf32>
    %105 = arith.maximumf %103, %104 : vector<13x128xf32>
    %106 = arith.truncf %105 : vector<13x128xf32> to vector<13x128xbf16>
    %c0_67 = arith.constant 0 : index
    %c9 = arith.constant 9 : index
    %c0_68 = arith.constant 0 : index
    %c0_69 = arith.constant 0 : index
    %107 = vector.load %arg4[%c0_67, %c9, %c0_68, %c0_69] : memref<1x13x13x128xbf16, #tpu.memory_space<vmem>>, vector<1x1x13x128xbf16>
    %108 = vector.shape_cast %107 : vector<1x1x13x128xbf16> to vector<13x128xbf16>
    %109 = vector.shape_cast %106 : vector<13x128xbf16> to vector<1x1x13x128xbf16>
    tpu.vector_store %arg4[%c0_67, %c9, %c0_68, %c0_69], %109 {strides = array<i32>} : memref<1x13x13x128xbf16, #tpu.memory_space<vmem>>, vector<1x1x13x128xbf16>,
    %c140_70 = arith.constant 140 : index
    %c0_71 = arith.constant 0 : index
    %110 = vector.load %arg5[%c140_70, %c0_71] : memref<196x128xf32, #tpu.memory_space<vmem>>, vector<14x128xf32>
    %c154 = arith.constant 154 : index
    %c0_72 = arith.constant 0 : index
    %111 = vector.load %arg5[%c154, %c0_72] : memref<196x128xf32, #tpu.memory_space<vmem>>, vector<14x128xf32>
    %112 = arith.maximumf %110, %111 : vector<14x128xf32>
    %113 = vector.extract_strided_slice %112 {offsets = [0, 0], sizes = [13, 128], strides = [1, 1]} : vector<14x128xf32> to vector<13x128xf32>
    %114 = vector.extract_strided_slice %112 {offsets = [1, 0], sizes = [13, 128], strides = [1, 1]} : vector<14x128xf32> to vector<13x128xf32>
    %115 = arith.maximumf %113, %114 : vector<13x128xf32>
    %116 = arith.truncf %115 : vector<13x128xf32> to vector<13x128xbf16>
    %c0_73 = arith.constant 0 : index
    %c10 = arith.constant 10 : index
    %c0_74 = arith.constant 0 : index
    %c0_75 = arith.constant 0 : index
    %117 = vector.load %arg4[%c0_73, %c10, %c0_74, %c0_75] : memref<1x13x13x128xbf16, #tpu.memory_space<vmem>>, vector<1x1x13x128xbf16>
    %118 = vector.shape_cast %117 : vector<1x1x13x128xbf16> to vector<13x128xbf16>
    %119 = vector.shape_cast %116 : vector<13x128xbf16> to vector<1x1x13x128xbf16>
    tpu.vector_store %arg4[%c0_73, %c10, %c0_74, %c0_75], %119 {strides = array<i32>} : memref<1x13x13x128xbf16, #tpu.memory_space<vmem>>, vector<1x1x13x128xbf16>,
    %c154_76 = arith.constant 154 : index
    %c0_77 = arith.constant 0 : index
    %120 = vector.load %arg5[%c154_76, %c0_77] : memref<196x128xf32, #tpu.memory_space<vmem>>, vector<14x128xf32>
    %c168 = arith.constant 168 : index
    %c0_78 = arith.constant 0 : index
    %121 = vector.load %arg5[%c168, %c0_78] : memref<196x128xf32, #tpu.memory_space<vmem>>, vector<14x128xf32>
    %122 = arith.maximumf %120, %121 : vector<14x128xf32>
    %123 = vector.extract_strided_slice %122 {offsets = [0, 0], sizes = [13, 128], strides = [1, 1]} : vector<14x128xf32> to vector<13x128xf32>
    %124 = vector.extract_strided_slice %122 {offsets = [1, 0], sizes = [13, 128], strides = [1, 1]} : vector<14x128xf32> to vector<13x128xf32>
    %125 = arith.maximumf %123, %124 : vector<13x128xf32>
    %126 = arith.truncf %125 : vector<13x128xf32> to vector<13x128xbf16>
    %c0_79 = arith.constant 0 : index
    %c11 = arith.constant 11 : index
    %c0_80 = arith.constant 0 : index
    %c0_81 = arith.constant 0 : index
    %127 = vector.load %arg4[%c0_79, %c11, %c0_80, %c0_81] : memref<1x13x13x128xbf16, #tpu.memory_space<vmem>>, vector<1x1x13x128xbf16>
    %128 = vector.shape_cast %127 : vector<1x1x13x128xbf16> to vector<13x128xbf16>
    %129 = vector.shape_cast %126 : vector<13x128xbf16> to vector<1x1x13x128xbf16>
    tpu.vector_store %arg4[%c0_79, %c11, %c0_80, %c0_81], %129 {strides = array<i32>} : memref<1x13x13x128xbf16, #tpu.memory_space<vmem>>, vector<1x1x13x128xbf16>,
    %c168_82 = arith.constant 168 : index
    %c0_83 = arith.constant 0 : index
    %130 = vector.load %arg5[%c168_82, %c0_83] : memref<196x128xf32, #tpu.memory_space<vmem>>, vector<14x128xf32>
    %c182 = arith.constant 182 : index
    %c0_84 = arith.constant 0 : index
    %131 = vector.load %arg5[%c182, %c0_84] : memref<196x128xf32, #tpu.memory_space<vmem>>, vector<14x128xf32>
    %132 = arith.maximumf %130, %131 : vector<14x128xf32>
    %133 = vector.extract_strided_slice %132 {offsets = [0, 0], sizes = [13, 128], strides = [1, 1]} : vector<14x128xf32> to vector<13x128xf32>
    %134 = vector.extract_strided_slice %132 {offsets = [1, 0], sizes = [13, 128], strides = [1, 1]} : vector<14x128xf32> to vector<13x128xf32>
    %135 = arith.maximumf %133, %134 : vector<13x128xf32>
    %136 = arith.truncf %135 : vector<13x128xf32> to vector<13x128xbf16>
    %c0_85 = arith.constant 0 : index
    %c12 = arith.constant 12 : index
    %c0_86 = arith.constant 0 : index
    %c0_87 = arith.constant 0 : index
    %137 = vector.load %arg4[%c0_85, %c12, %c0_86, %c0_87] : memref<1x13x13x128xbf16, #tpu.memory_space<vmem>>, vector<1x1x13x128xbf16>
    %138 = vector.shape_cast %137 : vector<1x1x13x128xbf16> to vector<13x128xbf16>
    %139 = vector.shape_cast %136 : vector<13x128xbf16> to vector<1x1x13x128xbf16>
    tpu.vector_store %arg4[%c0_85, %c12, %c0_86, %c0_87], %139 {strides = array<i32>} : memref<1x13x13x128xbf16, #tpu.memory_space<vmem>>, vector<1x1x13x128xbf16>,
    return
  }
  func.func @transform_0(%arg0: i32) -> (i32, i32, i32) {
    %c0_i32 = arith.constant 0 : i32
    %c0_i32_0 = arith.constant 0 : i32
    %c0_i32_1 = arith.constant 0 : i32
    return %arg0, %c0_i32, %c0_i32_0 : i32, i32, i32
  }
  func.func @transform_1(%arg0: i32) -> (i32, i32) {
    %c0_i32 = arith.constant 0 : i32
    %c0_i32_0 = arith.constant 0 : i32
    %c0_i32_1 = arith.constant 0 : i32
    return %c0_i32, %c0_i32_0 : i32, i32
  }
  func.func @transform_2(%arg0: i32) -> (i32, i32) {
    %c0_i32 = arith.constant 0 : i32
    %c0_i32_0 = arith.constant 0 : i32
    %c0_i32_1 = arith.constant 0 : i32
    return %c0_i32, %c0_i32_0 : i32, i32
  }
  func.func @transform_3(%arg0: i32) -> (i32, i32, i32, i32) {
    %c0_i32 = arith.constant 0 : i32
    %c0_i32_0 = arith.constant 0 : i32
    %c0_i32_1 = arith.constant 0 : i32
    %c0_i32_2 = arith.constant 0 : i32
    return %arg0, %c0_i32, %c0_i32_0, %c0_i32_1 : i32, i32, i32, i32
  }
}

module attributes {stable_mosaic.version = 11 : i64} {
  func.func @_conv2_pool_fc_kernel(%arg0: i32, %arg1: memref<1x25x2048xbf16, #tpu.memory_space<vmem>>, %arg2: memref<2048x32xbf16, #tpu.memory_space<vmem>>, %arg3: memref<1x32xf32, #tpu.memory_space<vmem>>, %arg4: memref<16x32x32xbf16, #tpu.memory_space<vmem>>, %arg5: memref<1x32xf32, #tpu.memory_space<vmem>>, %arg6: memref<32x10xbf16, #tpu.memory_space<vmem>>, %arg7: memref<1x10xf32, #tpu.memory_space<vmem>>, %arg8: memref<1x1x10xf32, #tpu.memory_space<vmem>>) attributes {dimension_semantics = [#tpu.dimension_semantics<parallel>], iteration_bounds = array<i64: 2>, scalar_prefetch = 0 : i64, scratch_operands = 0 : i64, tpu.core_type = #tpu.core_type<tc>, window_params = [{transform_indices = @transform_0, window_bounds = array<i64: 1, 25, 2048>}, {pipeline_mode = #tpu.pipeline_mode<synchronous>, transform_indices = @transform_1, window_bounds = array<i64: 2048, 32>}, {pipeline_mode = #tpu.pipeline_mode<synchronous>, transform_indices = @transform_2, window_bounds = array<i64: 1, 32>}, {pipeline_mode = #tpu.pipeline_mode<synchronous>, transform_indices = @transform_3, window_bounds = array<i64: 16, 32, 32>}, {pipeline_mode = #tpu.pipeline_mode<synchronous>, transform_indices = @transform_4, window_bounds = array<i64: 1, 32>}, {pipeline_mode = #tpu.pipeline_mode<synchronous>, transform_indices = @transform_5, window_bounds = array<i64: 32, 10>}, {pipeline_mode = #tpu.pipeline_mode<synchronous>, transform_indices = @transform_6, window_bounds = array<i64: 1, 10>}, {transform_indices = @transform_7, window_bounds = array<i64: 1, 1, 10>}]} {
    %c0 = arith.constant 0 : index
    %c0_0 = arith.constant 0 : index
    %c0_1 = arith.constant 0 : index
    %0 = vector.load %arg1[%c0, %c0_0, %c0_1] : memref<1x25x2048xbf16, #tpu.memory_space<vmem>>, vector<1x25x2048xbf16>
    %1 = vector.shape_cast %0 : vector<1x25x2048xbf16> to vector<25x2048xbf16>
    %c0_2 = arith.constant 0 : index
    %c0_3 = arith.constant 0 : index
    %2 = vector.load %arg2[%c0_2, %c0_3] : memref<2048x32xbf16, #tpu.memory_space<vmem>>, vector<2048x32xbf16>
    %cst = arith.constant dense<0.000000e+00> : vector<25x32xf32>
    %3 = tpu.matmul %1, %2, %cst {dimension_numbers = #tpu.dot_dimension_numbers<[1], [0], [0], [1], [0, 0, 1, 1], [], []>} : vector<25x2048xbf16>, vector<2048x32xbf16>, vector<25x32xf32> -> vector<25x32xf32>
    %c0_4 = arith.constant 0 : index
    %c0_5 = arith.constant 0 : index
    %4 = vector.load %arg3[%c0_4, %c0_5] : memref<1x32xf32, #tpu.memory_space<vmem>>, vector<1x32xf32>
    %5 = vector.broadcast %4 : vector<1x32xf32> to vector<25x32xf32>
    %6 = arith.addf %3, %5 : vector<25x32xf32>
    %cst_6 = arith.constant 0.000000e+00 : f32
    %7 = vector.broadcast %cst_6 : f32 to vector<25x32xf32>
    %8 = arith.maximumf %6, %7 : vector<25x32xf32>
    %c0_7 = arith.constant 0 : index
    %c0_8 = arith.constant 0 : index
    %9 = vector.load %arg5[%c0_7, %c0_8] : memref<1x32xf32, #tpu.memory_space<vmem>>, vector<1x32xf32>
    %10 = vector.extract_strided_slice %8 {offsets = [0, 0], sizes = [5, 32], strides = [1, 1]} : vector<25x32xf32> to vector<5x32xf32>
    %11 = vector.extract_strided_slice %8 {offsets = [5, 0], sizes = [5, 32], strides = [1, 1]} : vector<25x32xf32> to vector<5x32xf32>
    %12 = arith.maximumf %10, %11 : vector<5x32xf32>
    %13 = vector.extract_strided_slice %12 {offsets = [0, 0], sizes = [4, 32], strides = [1, 1]} : vector<5x32xf32> to vector<4x32xf32>
    %14 = vector.extract_strided_slice %12 {offsets = [1, 0], sizes = [4, 32], strides = [1, 1]} : vector<5x32xf32> to vector<4x32xf32>
    %15 = arith.maximumf %13, %14 : vector<4x32xf32>
    %16 = arith.truncf %15 : vector<4x32xf32> to vector<4x32xbf16>
    %17 = vector.extract_strided_slice %16 {offsets = [0, 0], sizes = [1, 32], strides = [1, 1]} : vector<4x32xbf16> to vector<1x32xbf16>
    %c0_9 = arith.constant 0 : index
    %c0_10 = arith.constant 0 : index
    %c0_11 = arith.constant 0 : index
    %18 = vector.load %arg4[%c0_9, %c0_10, %c0_11] : memref<16x32x32xbf16, #tpu.memory_space<vmem>>, vector<1x32x32xbf16>
    %19 = vector.shape_cast %18 : vector<1x32x32xbf16> to vector<32x32xbf16>
    %cst_12 = arith.constant dense<0.000000e+00> : vector<1x32xf32>
    %20 = tpu.matmul %17, %19, %cst_12 {dimension_numbers = #tpu.dot_dimension_numbers<[1], [0], [0], [1], [0, 0, 1, 1], [], []>} : vector<1x32xbf16>, vector<32x32xbf16>, vector<1x32xf32> -> vector<1x32xf32>
    %21 = arith.addf %9, %20 : vector<1x32xf32>
    %22 = vector.extract_strided_slice %16 {offsets = [1, 0], sizes = [1, 32], strides = [1, 1]} : vector<4x32xbf16> to vector<1x32xbf16>
    %c1 = arith.constant 1 : index
    %c0_13 = arith.constant 0 : index
    %c0_14 = arith.constant 0 : index
    %23 = vector.load %arg4[%c1, %c0_13, %c0_14] : memref<16x32x32xbf16, #tpu.memory_space<vmem>>, vector<1x32x32xbf16>
    %24 = vector.shape_cast %23 : vector<1x32x32xbf16> to vector<32x32xbf16>
    %cst_15 = arith.constant dense<0.000000e+00> : vector<1x32xf32>
    %25 = tpu.matmul %22, %24, %cst_15 {dimension_numbers = #tpu.dot_dimension_numbers<[1], [0], [0], [1], [0, 0, 1, 1], [], []>} : vector<1x32xbf16>, vector<32x32xbf16>, vector<1x32xf32> -> vector<1x32xf32>
    %26 = arith.addf %21, %25 : vector<1x32xf32>
    %27 = vector.extract_strided_slice %16 {offsets = [2, 0], sizes = [1, 32], strides = [1, 1]} : vector<4x32xbf16> to vector<1x32xbf16>
    %c2 = arith.constant 2 : index
    %c0_16 = arith.constant 0 : index
    %c0_17 = arith.constant 0 : index
    %28 = vector.load %arg4[%c2, %c0_16, %c0_17] : memref<16x32x32xbf16, #tpu.memory_space<vmem>>, vector<1x32x32xbf16>
    %29 = vector.shape_cast %28 : vector<1x32x32xbf16> to vector<32x32xbf16>
    %cst_18 = arith.constant dense<0.000000e+00> : vector<1x32xf32>
    %30 = tpu.matmul %27, %29, %cst_18 {dimension_numbers = #tpu.dot_dimension_numbers<[1], [0], [0], [1], [0, 0, 1, 1], [], []>} : vector<1x32xbf16>, vector<32x32xbf16>, vector<1x32xf32> -> vector<1x32xf32>
    %31 = arith.addf %26, %30 : vector<1x32xf32>
    %32 = vector.extract_strided_slice %16 {offsets = [3, 0], sizes = [1, 32], strides = [1, 1]} : vector<4x32xbf16> to vector<1x32xbf16>
    %c3 = arith.constant 3 : index
    %c0_19 = arith.constant 0 : index
    %c0_20 = arith.constant 0 : index
    %33 = vector.load %arg4[%c3, %c0_19, %c0_20] : memref<16x32x32xbf16, #tpu.memory_space<vmem>>, vector<1x32x32xbf16>
    %34 = vector.shape_cast %33 : vector<1x32x32xbf16> to vector<32x32xbf16>
    %cst_21 = arith.constant dense<0.000000e+00> : vector<1x32xf32>
    %35 = tpu.matmul %32, %34, %cst_21 {dimension_numbers = #tpu.dot_dimension_numbers<[1], [0], [0], [1], [0, 0, 1, 1], [], []>} : vector<1x32xbf16>, vector<32x32xbf16>, vector<1x32xf32> -> vector<1x32xf32>
    %36 = arith.addf %31, %35 : vector<1x32xf32>
    %37 = vector.extract_strided_slice %8 {offsets = [5, 0], sizes = [5, 32], strides = [1, 1]} : vector<25x32xf32> to vector<5x32xf32>
    %38 = vector.extract_strided_slice %8 {offsets = [10, 0], sizes = [5, 32], strides = [1, 1]} : vector<25x32xf32> to vector<5x32xf32>
    %39 = arith.maximumf %37, %38 : vector<5x32xf32>
    %40 = vector.extract_strided_slice %39 {offsets = [0, 0], sizes = [4, 32], strides = [1, 1]} : vector<5x32xf32> to vector<4x32xf32>
    %41 = vector.extract_strided_slice %39 {offsets = [1, 0], sizes = [4, 32], strides = [1, 1]} : vector<5x32xf32> to vector<4x32xf32>
    %42 = arith.maximumf %40, %41 : vector<4x32xf32>
    %43 = arith.truncf %42 : vector<4x32xf32> to vector<4x32xbf16>
    %44 = vector.extract_strided_slice %43 {offsets = [0, 0], sizes = [1, 32], strides = [1, 1]} : vector<4x32xbf16> to vector<1x32xbf16>
    %c4 = arith.constant 4 : index
    %c0_22 = arith.constant 0 : index
    %c0_23 = arith.constant 0 : index
    %45 = vector.load %arg4[%c4, %c0_22, %c0_23] : memref<16x32x32xbf16, #tpu.memory_space<vmem>>, vector<1x32x32xbf16>
    %46 = vector.shape_cast %45 : vector<1x32x32xbf16> to vector<32x32xbf16>
    %cst_24 = arith.constant dense<0.000000e+00> : vector<1x32xf32>
    %47 = tpu.matmul %44, %46, %cst_24 {dimension_numbers = #tpu.dot_dimension_numbers<[1], [0], [0], [1], [0, 0, 1, 1], [], []>} : vector<1x32xbf16>, vector<32x32xbf16>, vector<1x32xf32> -> vector<1x32xf32>
    %48 = arith.addf %36, %47 : vector<1x32xf32>
    %49 = vector.extract_strided_slice %43 {offsets = [1, 0], sizes = [1, 32], strides = [1, 1]} : vector<4x32xbf16> to vector<1x32xbf16>
    %c5 = arith.constant 5 : index
    %c0_25 = arith.constant 0 : index
    %c0_26 = arith.constant 0 : index
    %50 = vector.load %arg4[%c5, %c0_25, %c0_26] : memref<16x32x32xbf16, #tpu.memory_space<vmem>>, vector<1x32x32xbf16>
    %51 = vector.shape_cast %50 : vector<1x32x32xbf16> to vector<32x32xbf16>
    %cst_27 = arith.constant dense<0.000000e+00> : vector<1x32xf32>
    %52 = tpu.matmul %49, %51, %cst_27 {dimension_numbers = #tpu.dot_dimension_numbers<[1], [0], [0], [1], [0, 0, 1, 1], [], []>} : vector<1x32xbf16>, vector<32x32xbf16>, vector<1x32xf32> -> vector<1x32xf32>
    %53 = arith.addf %48, %52 : vector<1x32xf32>
    %54 = vector.extract_strided_slice %43 {offsets = [2, 0], sizes = [1, 32], strides = [1, 1]} : vector<4x32xbf16> to vector<1x32xbf16>
    %c6 = arith.constant 6 : index
    %c0_28 = arith.constant 0 : index
    %c0_29 = arith.constant 0 : index
    %55 = vector.load %arg4[%c6, %c0_28, %c0_29] : memref<16x32x32xbf16, #tpu.memory_space<vmem>>, vector<1x32x32xbf16>
    %56 = vector.shape_cast %55 : vector<1x32x32xbf16> to vector<32x32xbf16>
    %cst_30 = arith.constant dense<0.000000e+00> : vector<1x32xf32>
    %57 = tpu.matmul %54, %56, %cst_30 {dimension_numbers = #tpu.dot_dimension_numbers<[1], [0], [0], [1], [0, 0, 1, 1], [], []>} : vector<1x32xbf16>, vector<32x32xbf16>, vector<1x32xf32> -> vector<1x32xf32>
    %58 = arith.addf %53, %57 : vector<1x32xf32>
    %59 = vector.extract_strided_slice %43 {offsets = [3, 0], sizes = [1, 32], strides = [1, 1]} : vector<4x32xbf16> to vector<1x32xbf16>
    %c7 = arith.constant 7 : index
    %c0_31 = arith.constant 0 : index
    %c0_32 = arith.constant 0 : index
    %60 = vector.load %arg4[%c7, %c0_31, %c0_32] : memref<16x32x32xbf16, #tpu.memory_space<vmem>>, vector<1x32x32xbf16>
    %61 = vector.shape_cast %60 : vector<1x32x32xbf16> to vector<32x32xbf16>
    %cst_33 = arith.constant dense<0.000000e+00> : vector<1x32xf32>
    %62 = tpu.matmul %59, %61, %cst_33 {dimension_numbers = #tpu.dot_dimension_numbers<[1], [0], [0], [1], [0, 0, 1, 1], [], []>} : vector<1x32xbf16>, vector<32x32xbf16>, vector<1x32xf32> -> vector<1x32xf32>
    %63 = arith.addf %58, %62 : vector<1x32xf32>
    %64 = vector.extract_strided_slice %8 {offsets = [10, 0], sizes = [5, 32], strides = [1, 1]} : vector<25x32xf32> to vector<5x32xf32>
    %65 = vector.extract_strided_slice %8 {offsets = [15, 0], sizes = [5, 32], strides = [1, 1]} : vector<25x32xf32> to vector<5x32xf32>
    %66 = arith.maximumf %64, %65 : vector<5x32xf32>
    %67 = vector.extract_strided_slice %66 {offsets = [0, 0], sizes = [4, 32], strides = [1, 1]} : vector<5x32xf32> to vector<4x32xf32>
    %68 = vector.extract_strided_slice %66 {offsets = [1, 0], sizes = [4, 32], strides = [1, 1]} : vector<5x32xf32> to vector<4x32xf32>
    %69 = arith.maximumf %67, %68 : vector<4x32xf32>
    %70 = arith.truncf %69 : vector<4x32xf32> to vector<4x32xbf16>
    %71 = vector.extract_strided_slice %70 {offsets = [0, 0], sizes = [1, 32], strides = [1, 1]} : vector<4x32xbf16> to vector<1x32xbf16>
    %c8 = arith.constant 8 : index
    %c0_34 = arith.constant 0 : index
    %c0_35 = arith.constant 0 : index
    %72 = vector.load %arg4[%c8, %c0_34, %c0_35] : memref<16x32x32xbf16, #tpu.memory_space<vmem>>, vector<1x32x32xbf16>
    %73 = vector.shape_cast %72 : vector<1x32x32xbf16> to vector<32x32xbf16>
    %cst_36 = arith.constant dense<0.000000e+00> : vector<1x32xf32>
    %74 = tpu.matmul %71, %73, %cst_36 {dimension_numbers = #tpu.dot_dimension_numbers<[1], [0], [0], [1], [0, 0, 1, 1], [], []>} : vector<1x32xbf16>, vector<32x32xbf16>, vector<1x32xf32> -> vector<1x32xf32>
    %75 = arith.addf %63, %74 : vector<1x32xf32>
    %76 = vector.extract_strided_slice %70 {offsets = [1, 0], sizes = [1, 32], strides = [1, 1]} : vector<4x32xbf16> to vector<1x32xbf16>
    %c9 = arith.constant 9 : index
    %c0_37 = arith.constant 0 : index
    %c0_38 = arith.constant 0 : index
    %77 = vector.load %arg4[%c9, %c0_37, %c0_38] : memref<16x32x32xbf16, #tpu.memory_space<vmem>>, vector<1x32x32xbf16>
    %78 = vector.shape_cast %77 : vector<1x32x32xbf16> to vector<32x32xbf16>
    %cst_39 = arith.constant dense<0.000000e+00> : vector<1x32xf32>
    %79 = tpu.matmul %76, %78, %cst_39 {dimension_numbers = #tpu.dot_dimension_numbers<[1], [0], [0], [1], [0, 0, 1, 1], [], []>} : vector<1x32xbf16>, vector<32x32xbf16>, vector<1x32xf32> -> vector<1x32xf32>
    %80 = arith.addf %75, %79 : vector<1x32xf32>
    %81 = vector.extract_strided_slice %70 {offsets = [2, 0], sizes = [1, 32], strides = [1, 1]} : vector<4x32xbf16> to vector<1x32xbf16>
    %c10 = arith.constant 10 : index
    %c0_40 = arith.constant 0 : index
    %c0_41 = arith.constant 0 : index
    %82 = vector.load %arg4[%c10, %c0_40, %c0_41] : memref<16x32x32xbf16, #tpu.memory_space<vmem>>, vector<1x32x32xbf16>
    %83 = vector.shape_cast %82 : vector<1x32x32xbf16> to vector<32x32xbf16>
    %cst_42 = arith.constant dense<0.000000e+00> : vector<1x32xf32>
    %84 = tpu.matmul %81, %83, %cst_42 {dimension_numbers = #tpu.dot_dimension_numbers<[1], [0], [0], [1], [0, 0, 1, 1], [], []>} : vector<1x32xbf16>, vector<32x32xbf16>, vector<1x32xf32> -> vector<1x32xf32>
    %85 = arith.addf %80, %84 : vector<1x32xf32>
    %86 = vector.extract_strided_slice %70 {offsets = [3, 0], sizes = [1, 32], strides = [1, 1]} : vector<4x32xbf16> to vector<1x32xbf16>
    %c11 = arith.constant 11 : index
    %c0_43 = arith.constant 0 : index
    %c0_44 = arith.constant 0 : index
    %87 = vector.load %arg4[%c11, %c0_43, %c0_44] : memref<16x32x32xbf16, #tpu.memory_space<vmem>>, vector<1x32x32xbf16>
    %88 = vector.shape_cast %87 : vector<1x32x32xbf16> to vector<32x32xbf16>
    %cst_45 = arith.constant dense<0.000000e+00> : vector<1x32xf32>
    %89 = tpu.matmul %86, %88, %cst_45 {dimension_numbers = #tpu.dot_dimension_numbers<[1], [0], [0], [1], [0, 0, 1, 1], [], []>} : vector<1x32xbf16>, vector<32x32xbf16>, vector<1x32xf32> -> vector<1x32xf32>
    %90 = arith.addf %85, %89 : vector<1x32xf32>
    %91 = vector.extract_strided_slice %8 {offsets = [15, 0], sizes = [5, 32], strides = [1, 1]} : vector<25x32xf32> to vector<5x32xf32>
    %92 = vector.extract_strided_slice %8 {offsets = [20, 0], sizes = [5, 32], strides = [1, 1]} : vector<25x32xf32> to vector<5x32xf32>
    %93 = arith.maximumf %91, %92 : vector<5x32xf32>
    %94 = vector.extract_strided_slice %93 {offsets = [0, 0], sizes = [4, 32], strides = [1, 1]} : vector<5x32xf32> to vector<4x32xf32>
    %95 = vector.extract_strided_slice %93 {offsets = [1, 0], sizes = [4, 32], strides = [1, 1]} : vector<5x32xf32> to vector<4x32xf32>
    %96 = arith.maximumf %94, %95 : vector<4x32xf32>
    %97 = arith.truncf %96 : vector<4x32xf32> to vector<4x32xbf16>
    %98 = vector.extract_strided_slice %97 {offsets = [0, 0], sizes = [1, 32], strides = [1, 1]} : vector<4x32xbf16> to vector<1x32xbf16>
    %c12 = arith.constant 12 : index
    %c0_46 = arith.constant 0 : index
    %c0_47 = arith.constant 0 : index
    %99 = vector.load %arg4[%c12, %c0_46, %c0_47] : memref<16x32x32xbf16, #tpu.memory_space<vmem>>, vector<1x32x32xbf16>
    %100 = vector.shape_cast %99 : vector<1x32x32xbf16> to vector<32x32xbf16>
    %cst_48 = arith.constant dense<0.000000e+00> : vector<1x32xf32>
    %101 = tpu.matmul %98, %100, %cst_48 {dimension_numbers = #tpu.dot_dimension_numbers<[1], [0], [0], [1], [0, 0, 1, 1], [], []>} : vector<1x32xbf16>, vector<32x32xbf16>, vector<1x32xf32> -> vector<1x32xf32>
    %102 = arith.addf %90, %101 : vector<1x32xf32>
    %103 = vector.extract_strided_slice %97 {offsets = [1, 0], sizes = [1, 32], strides = [1, 1]} : vector<4x32xbf16> to vector<1x32xbf16>
    %c13 = arith.constant 13 : index
    %c0_49 = arith.constant 0 : index
    %c0_50 = arith.constant 0 : index
    %104 = vector.load %arg4[%c13, %c0_49, %c0_50] : memref<16x32x32xbf16, #tpu.memory_space<vmem>>, vector<1x32x32xbf16>
    %105 = vector.shape_cast %104 : vector<1x32x32xbf16> to vector<32x32xbf16>
    %cst_51 = arith.constant dense<0.000000e+00> : vector<1x32xf32>
    %106 = tpu.matmul %103, %105, %cst_51 {dimension_numbers = #tpu.dot_dimension_numbers<[1], [0], [0], [1], [0, 0, 1, 1], [], []>} : vector<1x32xbf16>, vector<32x32xbf16>, vector<1x32xf32> -> vector<1x32xf32>
    %107 = arith.addf %102, %106 : vector<1x32xf32>
    %108 = vector.extract_strided_slice %97 {offsets = [2, 0], sizes = [1, 32], strides = [1, 1]} : vector<4x32xbf16> to vector<1x32xbf16>
    %c14 = arith.constant 14 : index
    %c0_52 = arith.constant 0 : index
    %c0_53 = arith.constant 0 : index
    %109 = vector.load %arg4[%c14, %c0_52, %c0_53] : memref<16x32x32xbf16, #tpu.memory_space<vmem>>, vector<1x32x32xbf16>
    %110 = vector.shape_cast %109 : vector<1x32x32xbf16> to vector<32x32xbf16>
    %cst_54 = arith.constant dense<0.000000e+00> : vector<1x32xf32>
    %111 = tpu.matmul %108, %110, %cst_54 {dimension_numbers = #tpu.dot_dimension_numbers<[1], [0], [0], [1], [0, 0, 1, 1], [], []>} : vector<1x32xbf16>, vector<32x32xbf16>, vector<1x32xf32> -> vector<1x32xf32>
    %112 = arith.addf %107, %111 : vector<1x32xf32>
    %113 = vector.extract_strided_slice %97 {offsets = [3, 0], sizes = [1, 32], strides = [1, 1]} : vector<4x32xbf16> to vector<1x32xbf16>
    %c15 = arith.constant 15 : index
    %c0_55 = arith.constant 0 : index
    %c0_56 = arith.constant 0 : index
    %114 = vector.load %arg4[%c15, %c0_55, %c0_56] : memref<16x32x32xbf16, #tpu.memory_space<vmem>>, vector<1x32x32xbf16>
    %115 = vector.shape_cast %114 : vector<1x32x32xbf16> to vector<32x32xbf16>
    %cst_57 = arith.constant dense<0.000000e+00> : vector<1x32xf32>
    %116 = tpu.matmul %113, %115, %cst_57 {dimension_numbers = #tpu.dot_dimension_numbers<[1], [0], [0], [1], [0, 0, 1, 1], [], []>} : vector<1x32xbf16>, vector<32x32xbf16>, vector<1x32xf32> -> vector<1x32xf32>
    %117 = arith.addf %112, %116 : vector<1x32xf32>
    %cst_58 = arith.constant 0.000000e+00 : f32
    %118 = vector.broadcast %cst_58 : f32 to vector<1x32xf32>
    %119 = arith.maximumf %117, %118 : vector<1x32xf32>
    %120 = arith.truncf %119 : vector<1x32xf32> to vector<1x32xbf16>
    %c0_59 = arith.constant 0 : index
    %c0_60 = arith.constant 0 : index
    %121 = vector.load %arg6[%c0_59, %c0_60] : memref<32x10xbf16, #tpu.memory_space<vmem>>, vector<32x10xbf16>
    %cst_61 = arith.constant dense<0.000000e+00> : vector<1x10xf32>
    %122 = tpu.matmul %120, %121, %cst_61 {dimension_numbers = #tpu.dot_dimension_numbers<[1], [0], [0], [1], [0, 0, 1, 1], [], []>} : vector<1x32xbf16>, vector<32x10xbf16>, vector<1x10xf32> -> vector<1x10xf32>
    %c0_62 = arith.constant 0 : index
    %c0_63 = arith.constant 0 : index
    %123 = vector.load %arg7[%c0_62, %c0_63] : memref<1x10xf32, #tpu.memory_space<vmem>>, vector<1x10xf32>
    %124 = arith.addf %122, %123 : vector<1x10xf32>
    %c0_64 = arith.constant 0 : index
    %c0_65 = arith.constant 0 : index
    %c0_66 = arith.constant 0 : index
    %125 = vector.load %arg8[%c0_64, %c0_65, %c0_66] : memref<1x1x10xf32, #tpu.memory_space<vmem>>, vector<1x1x10xf32>
    %126 = vector.shape_cast %125 : vector<1x1x10xf32> to vector<1x10xf32>
    %127 = vector.shape_cast %124 : vector<1x10xf32> to vector<1x1x10xf32>
    tpu.vector_store %arg8[%c0_64, %c0_65, %c0_66], %127 {strides = array<i32>} : memref<1x1x10xf32, #tpu.memory_space<vmem>>, vector<1x1x10xf32>,
    return
  }
  func.func @transform_0(%arg0: i32) -> (i32, i32, i32) {
    %c0_i32 = arith.constant 0 : i32
    %c0_i32_0 = arith.constant 0 : i32
    %c0_i32_1 = arith.constant 0 : i32
    return %arg0, %c0_i32, %c0_i32_0 : i32, i32, i32
  }
  func.func @transform_1(%arg0: i32) -> (i32, i32) {
    %c0_i32 = arith.constant 0 : i32
    %c0_i32_0 = arith.constant 0 : i32
    %c0_i32_1 = arith.constant 0 : i32
    return %c0_i32, %c0_i32_0 : i32, i32
  }
  func.func @transform_2(%arg0: i32) -> (i32, i32) {
    %c0_i32 = arith.constant 0 : i32
    %c0_i32_0 = arith.constant 0 : i32
    %c0_i32_1 = arith.constant 0 : i32
    return %c0_i32, %c0_i32_0 : i32, i32
  }
  func.func @transform_3(%arg0: i32) -> (i32, i32, i32) {
    %c0_i32 = arith.constant 0 : i32
    %c0_i32_0 = arith.constant 0 : i32
    %c0_i32_1 = arith.constant 0 : i32
    %c0_i32_2 = arith.constant 0 : i32
    return %c0_i32, %c0_i32_0, %c0_i32_1 : i32, i32, i32
  }
  func.func @transform_4(%arg0: i32) -> (i32, i32) {
    %c0_i32 = arith.constant 0 : i32
    %c0_i32_0 = arith.constant 0 : i32
    %c0_i32_1 = arith.constant 0 : i32
    return %c0_i32, %c0_i32_0 : i32, i32
  }
  func.func @transform_5(%arg0: i32) -> (i32, i32) {
    %c0_i32 = arith.constant 0 : i32
    %c0_i32_0 = arith.constant 0 : i32
    %c0_i32_1 = arith.constant 0 : i32
    return %c0_i32, %c0_i32_0 : i32, i32
  }
  func.func @transform_6(%arg0: i32) -> (i32, i32) {
    %c0_i32 = arith.constant 0 : i32
    %c0_i32_0 = arith.constant 0 : i32
    %c0_i32_1 = arith.constant 0 : i32
    return %c0_i32, %c0_i32_0 : i32, i32
  }
  func.func @transform_7(%arg0: i32) -> (i32, i32, i32) {
    %c0_i32 = arith.constant 0 : i32
    %c0_i32_0 = arith.constant 0 : i32
    %c0_i32_1 = arith.constant 0 : i32
    return %arg0, %c0_i32, %c0_i32_0 : i32, i32, i32
  }
}

</mosaic_0001>

<llo_original>
// kernel: cnn_mnist_forward.2
$region0: #{cnn_mnist_forward.2}
  #allocation0 [shape = 'u32[]', space=smem, size = 0x4, offset = 0x4, fixed_abs, tag = 'smem constant byte address 0x4 - core index']
  #allocation1 [shape = 'u32[144,128]{1,0:T(1,128)}', space=vmem, size = 0x12000, scoped, tag = 'internal scratch']
  #allocation2 [shape = 'f32[196,128]{1,0:T(8,128)}', space=vmem, size = 0x19000, scoped, tag = 'scratch operand']
  %s0 = inlined_call_operand.vmem [shape: bf16[2,196,64], index: 0, kind: input, shape index: {}]
  %s1 = inlined_call_operand.vmem [shape: bf16[64,128], index: 1, kind: input, shape index: {}]
  %s2 = inlined_call_operand.vmem [shape: f32[1,128], index: 2, kind: input, shape index: {}]
  %s3 = inlined_call_operand.vmem [shape: bf16[2,13,13,128], index: 3, kind: output, shape index: {}]
  %s4 = sld [smem:[#allocation0]]
  $region45: #{cnn_mnist_forward.2} parent=0
    _
  %s6 = ssub.s32 1, %s4
  %s7 = scalar_select 0, %s6, %s4
  loop: start=0, step=1, limit=4
  $region2: #{cnn_mnist_forward.2} parent=0 // loop_pre_header
    _
  $region3: #{cnn_mnist_forward.2} parent=0 // loop_header
    %s9 = sphi 0, %s13
    %p10 = scmp.ge.s32.totalorder %s9, 4
    %s19 = sphi 0, %s21
    %s22 = sphi 0, %s19
    %s23 = sphi 0, %s22
    %s39 = sphi 0, %s23
    %s43 = sphi 0, %s43
    %s45 = sphi 0, %s43
    %s46 = sphi 0, %s45
    %s60 = sphi 0, %s46
    %s64 = sphi 0, %s64
    %s66 = sphi 0, %s64
    %s67 = sphi 0, %s66
    %s81 = sphi 0, %s67
    %s87 = sphi 0, %s89
    %s90 = sphi 0, %s87
    %s91 = sphi 0, %s90
    %s107 = sphi 0, %s91
  $region4: #{cnn_mnist_forward.2} parent=0 // loop_header_branch
    %12 = sbr.rel (%p10) target = $region8
  $region5: #{cnn_mnist_forward.2} parent=0 // loop_body
    %s14 = ssub.s32 %s9, 1
    %s15 = ssub.s32 %s9, 2
    %s16 = sadd.s32 %s9, 1
    %s17 = ssub.s32 %s9, %s16
    %p18 = scmp.eq.s32.totalorder %s17, 0
    %s20 = sadd.s32 %s19, 1
    %s21 = scalar_select %p18, %s19, %s20
    %p24 = pneg %p18
    %p25 = scmp.eq.s32.totalorder %s9, 1
    %p26 = por %p24, %p25
    %p27 = scmp.ne.s32.totalorder %s19, %s22
    %p28 = scmp.eq.s32.totalorder %s9, 0
    %p29 = por %p27, %p28
    %p30 = scmp.ne.s32.totalorder %s19, %s22
    %p31 = scmp.eq.s32.totalorder %s14, 1
    %p32 = por %p30, %p31
    %p33 = scmp.ne.s32.totalorder %s22, %s23
    %p34 = scmp.eq.s32.totalorder %s14, 0
    %p35 = por %p33, %p34
    %p36 = scmp.ne.s32.totalorder %s22, %s23
    %p37 = scmp.eq.s32.totalorder %s15, 1
    %p38 = por %p36, %p37
    %p40 = scmp.ne.s32.totalorder %s23, %s39
    %p41 = scmp.eq.s32.totalorder %s15, 0
    %p42 = por %p40, %p41
    %s44 = sadd.s32 %s43, 1
    %p47 = scmp.eq.s32.totalorder %s9, 1
    %p48 = scmp.ne.s32.totalorder %s43, %s45
    %p49 = scmp.eq.s32.totalorder %s9, 0
    %p50 = por %p48, %p49
    %p51 = scmp.ne.s32.totalorder %s43, %s45
    %p52 = scmp.eq.s32.totalorder %s14, 1
    %p53 = por %p51, %p52
    %p54 = scmp.ne.s32.totalorder %s45, %s46
    %p55 = scmp.eq.s32.totalorder %s14, 0
    %p56 = por %p54, %p55
    %p57 = scmp.ne.s32.totalorder %s45, %s46
    %p58 = scmp.eq.s32.totalorder %s15, 1
    %p59 = por %p57, %p58
    %p61 = scmp.ne.s32.totalorder %s46, %s60
    %p62 = scmp.eq.s32.totalorder %s15, 0
    %p63 = por %p61, %p62
    %s65 = sadd.s32 %s64, 1
    %p68 = scmp.eq.s32.totalorder %s9, 1
    %p69 = scmp.ne.s32.totalorder %s64, %s66
    %p70 = scmp.eq.s32.totalorder %s9, 0
    %p71 = por %p69, %p70
    %p72 = scmp.ne.s32.totalorder %s64, %s66
    %p73 = scmp.eq.s32.totalorder %s14, 1
    %p74 = por %p72, %p73
    %p75 = scmp.ne.s32.totalorder %s66, %s67
    %p76 = scmp.eq.s32.totalorder %s14, 0
    %p77 = por %p75, %p76
    %p78 = scmp.ne.s32.totalorder %s66, %s67
    %p79 = scmp.eq.s32.totalorder %s15, 1
    %p80 = por %p78, %p79
    %p82 = scmp.ne.s32.totalorder %s67, %s81
    %p83 = scmp.eq.s32.totalorder %s15, 0
    %p84 = por %p82, %p83
    %s85 = ssub.s32 %s9, %s16
    %p86 = scmp.eq.s32.totalorder %s85, 0
    %s88 = sadd.s32 %s87, 1
    %s89 = scalar_select %p86, %s87, %s88
    %p92 = pneg %p86
    %p93 = scmp.eq.s32.totalorder %s9, 1
    %p94 = por %p92, %p93
    %p95 = scmp.ne.s32.totalorder %s87, %s90
    %p96 = scmp.eq.s32.totalorder %s9, 0
    %p97 = por %p95, %p96
    %p98 = scmp.ne.s32.totalorder %s87, %s90
    %p99 = scmp.eq.s32.totalorder %s14, 1
    %p100 = por %p98, %p99
    %p101 = scmp.ne.s32.totalorder %s90, %s91
    %p102 = scmp.eq.s32.totalorder %s14, 0
    %p103 = por %p101, %p102
    %p104 = scmp.ne.s32.totalorder %s90, %s91
    %p105 = scmp.eq.s32.totalorder %s15, 1
    %p106 = por %p104, %p105
    %p108 = scmp.ne.s32.totalorder %s91, %s107
    %p109 = scmp.eq.s32.totalorder %s15, 0
    %p110 = por %p108, %p109
    %p111 = scmp.le.s32.totalorder 1, %s9
    %p112 = scmp.lt.s32.totalorder %s9, 3
    %p113 = pnand %p111, %p112
    %p114 = pneg %p113
    // Predicated region
    $region9: #{cnn_mnist_forward.2} parent=5 // pred_check
      _
    $region10: #{cnn_mnist_forward.2} parent=5 // pred_check_branch
      %116 = sbr.rel (%p113) target = $region12
    $region11: #{cnn_mnist_forward.2} parent=5 // pred_region
      %s117 = ssub.s32 %s9, 1
      // Predicated region
      $region13: #{cnn_mnist_forward.2} parent=11 // pred_check
        %p118 = pneg %p56
      $region14: #{cnn_mnist_forward.2} parent=11 // pred_check_branch
        %120 = sbr.rel (%p118) target = $region16
      $region15: #{cnn_mnist_forward.2} parent=11 // pred_region
        _
      $region16: #{cnn_mnist_forward.2} parent=11 // pred_fallthru
        _
      // Predicated region
      $region17: #{cnn_mnist_forward.2} parent=11 // pred_check
        %p121 = pneg %p77
      $region18: #{cnn_mnist_forward.2} parent=11 // pred_check_branch
        %123 = sbr.rel (%p121) target = $region20
      $region19: #{cnn_mnist_forward.2} parent=11 // pred_region
        _
      $region20: #{cnn_mnist_forward.2} parent=11 // pred_fallthru
        _
    $region12: #{cnn_mnist_forward.2} parent=5 // pred_fallthru
      _
    %p124 = scmp.lt.s32.totalorder %s9, 2
    // Predicated region
    $region21: #{cnn_mnist_forward.2} parent=5 // pred_check
      %p125 = pneg %p124
    $region22: #{cnn_mnist_forward.2} parent=5 // pred_check_branch
      %127 = sbr.rel (%p125) target = $region24
    $region23: #{cnn_mnist_forward.2} parent=5 // pred_region
      // Predicated region
      $region25: #{cnn_mnist_forward.2} parent=23 // pred_check
        %p128 = pneg %p29
      $region26: #{cnn_mnist_forward.2} parent=23 // pred_check_branch
        %130 = sbr.rel (%p128) target = $region28
      $region27: #{cnn_mnist_forward.2} parent=23 // pred_region
        %p131 = scmp.lt.s32.totalorder %s9, 1
        %s132 = scalar_select %p131, %s9, 1
        %s133 = smul.addr %s132, 25
        %s134 = smul.addr %s133, 4
        %s135 = scalar_lea.vmem %s0, %s134
      $region28: #{cnn_mnist_forward.2} parent=23 // pred_fallthru
        _
    $region24: #{cnn_mnist_forward.2} parent=5 // pred_fallthru
      _
    %p136 = scmp.le.s32.totalorder 1, %s9
    %p137 = scmp.lt.s32.totalorder %s9, 3
    %p138 = pnand %p136, %p137
    %p139 = pneg %p138
    // Predicated region
    $region29: #{cnn_mnist_forward.2} parent=5 // pred_check
      _
    $region30: #{cnn_mnist_forward.2} parent=5 // pred_check_branch
      %141 = sbr.rel (%p138) target = $region32
    $region31: #{cnn_mnist_forward.2} parent=5 // pred_region
      %s142 = ssub.s32 %s9, 1
      %p143 = scmp.lt.s32.totalorder %s14, 1
      %s144 = scalar_select %p143, %s14, 1
      %s145 = smul.addr %s144, 25
      %s146 = smul.addr %s145, 4
      %s147 = scalar_lea.vmem %s0, %s146
      %p148 = pneg %p35
      %p149 = pneg %p32
      %p150 = pneg %p56
      %p151 = pneg %p53
      %p152 = pneg %p77
      %p153 = pneg %p74
      %p154 = pneg %p103
      %p155 = pneg %p100
      %p156 = scmp.lt.s32.totalorder %s14, 1
      %s157 = scalar_select %p156, %s14, 1
      %s158 = smul.addr %s157, 26
      %s159 = smul.addr %s158, 4
      %s160 = scalar_lea.vmem %s3, %s159
      %p161 = scmp.lt.s32.totalorder %s14, 1
      %s162 = scalar_select %p161, %s14, 1
      %s163 = smul.addr %s162, 25
      %s164 = smul.addr %s163, 4
      %s165 = scalar_lea.vmem %s0, %s164
      %p166 = scmp.lt.s32.totalorder %s14, 1
      %s167 = scalar_select %p166, %s14, 1
      %s168 = smul.addr %s167, 26
      %s169 = smul.addr %s168, 4
      %s170 = scalar_lea.vmem %s3, %s169
      %v172 = vld [vmem:[%s165] sm:$0xf]
      %v173 = vld [vmem:[%s165 + $0x4] sm:$0xf]
      %v174 = vld [vmem:[%s165 + $0x8] sm:$0xf]
      %v175 = vld [vmem:[%s165 + $0xc] sm:$0xf]
      %v176 = vld [vmem:[%s165 + $0x10] sm:$0xf]
      %v177 = vld [vmem:[%s165 + $0x14] sm:$0xf]
      %v178 = vld [vmem:[%s165 + $0x18] sm:$0xf]
      %v179 = vld [vmem:[%s165 + $0x1c] sm:$0xf]
      %v180 = vld [vmem:[%s165 + $0x20] sm:$0xf]
      %v181 = vld [vmem:[%s165 + $0x24] sm:$0xf]
      %v182 = vld [vmem:[%s165 + $0x28] sm:$0xf]
      %v183 = vld [vmem:[%s165 + $0x2c] sm:$0xf]
      %v184 = vld [vmem:[%s165 + $0x30] sm:$0xf]
      %v185 = vld [vmem:[%s165 + $0x34] sm:$0xf]
      %v186 = vld [vmem:[%s165 + $0x38] sm:$0xf]
      %v187 = vld [vmem:[%s165 + $0x3c] sm:$0xf]
      %v188 = vld [vmem:[%s165 + $0x40] sm:$0xf]
      %v189 = vld [vmem:[%s165 + $0x44] sm:$0xf]
      %v190 = vld [vmem:[%s165 + $0x48] sm:$0xf]
      %v191 = vld [vmem:[%s165 + $0x4c] sm:$0xf]
      %v192 = vld [vmem:[%s165 + $0x50] sm:$0xf]
      %v193 = vld [vmem:[%s165 + $0x54] sm:$0xf]
      %v194 = vld [vmem:[%s165 + $0x58] sm:$0xf]
      %v195 = vld [vmem:[%s165 + $0x5c] sm:$0xf]
      %v196 = vld [vmem:[%s165 + $0x60] sm:$0x3]
      %v197 = vld [vmem:[%s1] sm:$0xf]
      %v198 = vld [vmem:[%s1 + $0x4] sm:$0xf]
      %v199 = vld [vmem:[%s1 + $0x8] sm:$0xf]
      %v200 = vld [vmem:[%s1 + $0xc] sm:$0xf]
      %v201 = vld [vmem:[%s1 + $0x10] sm:$0xf]
      %v202 = vld [vmem:[%s1 + $0x14] sm:$0xf]
      %v203 = vld [vmem:[%s1 + $0x18] sm:$0xf]
      %v204 = vld [vmem:[%s1 + $0x1c] sm:$0xf]
      %v205 = vld [vmem:[%s2] sm:$0x1]
      %v207 = vlaneseq
      %v208 = vshrl.u32 %v207, 7
      %v209 = vsub.s32 0, %v208
      %v210 = vrot.slane %v205, %v209
      %v237 = vunpack.c.l.b16 %v172
      %v238 = vunpack.c.l.b16 %v173
      %v239 = vunpack.c.l.b16 %v174
      %v240 = vunpack.c.l.b16 %v175
      %v241 = vunpack.c.l.b16 %v176
      %v242 = vunpack.c.l.b16 %v177
      %v243 = vunpack.c.l.b16 %v178
      %v244 = vunpack.c.l.b16 %v179
      %v245 = vunpack.c.l.b16 %v180
      %v246 = vunpack.c.l.b16 %v181
      %v247 = vunpack.c.l.b16 %v182
      %v248 = vunpack.c.l.b16 %v183
      %v249 = vunpack.c.l.b16 %v184
      %v250 = vunpack.c.l.b16 %v185
      %v251 = vunpack.c.l.b16 %v186
      %v252 = vunpack.c.l.b16 %v187
      %v253 = vunpack.c.l.b16 %v188
      %v254 = vunpack.c.l.b16 %v189
      %v255 = vunpack.c.l.b16 %v190
      %v256 = vunpack.c.l.b16 %v191
      %v257 = vunpack.c.l.b16 %v192
      %v258 = vunpack.c.l.b16 %v193
      %v259 = vunpack.c.l.b16 %v194
      %v260 = vunpack.c.l.b16 %v195
      %v261 = vunpack.c.l.b16 %v196
      %v262 = vpack.c.b16 %v238, %v237
      %v263 = vpack.c.b16 %v240, %v239
      %v264 = vpack.c.b16 %v242, %v241
      %v265 = vpack.c.b16 %v244, %v243
      %v266 = vpack.c.b16 %v246, %v245
      %v267 = vpack.c.b16 %v248, %v247
      %v268 = vpack.c.b16 %v250, %v249
      %v269 = vpack.c.b16 %v252, %v251
      %v270 = vpack.c.b16 %v254, %v253
      %v271 = vpack.c.b16 %v256, %v255
      %v272 = vpack.c.b16 %v258, %v257
      %v273 = vpack.c.b16 %v260, %v259
      %v274 = vpack.c.b16 %v261, %v261
      %v283 = vunpack.c.l.b16 %v197
      %v284 = vunpack.c.l.b16 %v198
      %v285 = vunpack.c.l.b16 %v199
      %v286 = vunpack.c.l.b16 %v200
      %v287 = vunpack.c.l.b16 %v201
      %v288 = vunpack.c.l.b16 %v202
      %v289 = vunpack.c.l.b16 %v203
      %v290 = vunpack.c.l.b16 %v204
      %v291 = vpack.c.b16 %v284, %v283
      %v292 = vpack.c.b16 %v286, %v285
      %v293 = vpack.c.b16 %v288, %v287
      %v294 = vpack.c.b16 %v290, %v289
      %vm299 = vcmask 523264
      %v301 = vsel %vm299, %v262, 0
      %v304 = vsel %vm299, %v263, 0
      %v307 = vsel %vm299, %v264, 0
      %v310 = vsel %vm299, %v265, 0
      %v313 = vsel %vm299, %v266, 0
      %v316 = vsel %vm299, %v267, 0
      %v319 = vsel %vm299, %v268, 0
      %v322 = vsel %vm299, %v269, 0
      %v325 = vsel %vm299, %v270, 0
      %v328 = vsel %vm299, %v271, 0
      %v331 = vsel %vm299, %v272, 0
      %v334 = vsel %vm299, %v273, 0
      %v337 = vsel %vm299, %v274, 0
      %339 = vmatprep.subr.bf16.mxu0 0
      %340 = vmatpush1.bf16.msra.mxu0 %v291
      %341 = vmatprep.subr.bf16.mxu0 0
      %342 = vmatpush1.bf16.msra.mxu0 %v292
      %343 = vmatprep.subr.bf16.mxu0 0
      %344 = vmatpush1.bf16.msra.mxu0 %v293
      %345 = vmatprep.subr.bf16.mxu0 0
      %346 = vmatpush1.bf16.msra.mxu0 %v294
      %347 = vmatprep.subr.bf16.mxu0 0
      %348 = vmatpush1.bf16.msra.mxu0 0
      %349 = vmatprep.subr.bf16.mxu0 0
      %350 = vmatpush1.bf16.msra.mxu0 0
      %351 = vmatprep.subr.bf16.mxu0 0
      %352 = vmatpush1.bf16.msra.mxu0 0
      %353 = vmatprep.subr.bf16.mxu0 0
      %354 = vmatpush1.bf16.msra.mxu0 0
      %355 = vmatprep.subr.bf16.mxu0 0
      %356 = vmatpush1.bf16.msra.mxu0 0
      %357 = vmatprep.subr.bf16.mxu0 0
      %358 = vmatpush1.bf16.msra.mxu0 0
      %359 = vmatprep.subr.bf16.mxu0 0
      %360 = vmatpush1.bf16.msra.mxu0 0
      %361 = vmatprep.subr.bf16.mxu0 0
      %362 = vmatpush1.bf16.msra.mxu0 0
      %363 = vmatprep.subr.bf16.mxu0 0
      %364 = vmatpush1.bf16.msra.mxu0 0
      %365 = vmatprep.subr.bf16.mxu0 0
      %366 = vmatpush1.bf16.msra.mxu0 0
      %367 = vmatprep.subr.bf16.mxu0 0
      %368 = vmatpush1.bf16.msra.mxu0 0
      %369 = vmatprep.subr.bf16.mxu0 0
      %370 = vmatpush1.bf16.msra.mxu0 0
      %371 = vmatprep.mubr.bf16.mxu0 0
      %372 = vmatmul.mubr.bf16.gmra.mrb[0].mxu0 %v301
      %v373 = vpop.f32.mrb[0].mxu0
      %v374 = vadd.f32 %v210, %v373
      %v375 = vpop.f32.mrb[0].mxu0
      %v376 = vpop.f32.mrb[0].mxu0
      %v377 = vadd.f32 %v210, %v376
      %v378 = vpop.f32.mrb[0].mxu0
      %379 = vmatprep.mubr.bf16.mxu0 0
      %380 = vmatmul.mubr.bf16.gmra.mrb[0].mxu0 %v304
      %v381 = vpop.f32.mrb[0].mxu0
      %v382 = vadd.f32 %v210, %v381
      %v383 = vpop.f32.mrb[0].mxu0
      %v384 = vpop.f32.mrb[0].mxu0
      %v385 = vadd.f32 %v210, %v384
      %v386 = vpop.f32.mrb[0].mxu0
      %387 = vmatprep.mubr.bf16.mxu0 0
      %388 = vmatmul.mubr.bf16.gmra.mrb[0].mxu0 %v307
      %v389 = vpop.f32.mrb[0].mxu0
      %v390 = vadd.f32 %v210, %v389
      %v391 = vpop.f32.mrb[0].mxu0
      %v392 = vpop.f32.mrb[0].mxu0
      %v393 = vadd.f32 %v210, %v392
      %v394 = vpop.f32.mrb[0].mxu0
      %395 = vmatprep.mubr.bf16.mxu0 0
      %396 = vmatmul.mubr.bf16.gmra.mrb[0].mxu0 %v310
      %v397 = vpop.f32.mrb[0].mxu0
      %v398 = vadd.f32 %v210, %v397
      %v399 = vpop.f32.mrb[0].mxu0
      %v400 = vpop.f32.mrb[0].mxu0
      %v401 = vadd.f32 %v210, %v400
      %v402 = vpop.f32.mrb[0].mxu0
      %403 = vmatprep.mubr.bf16.mxu0 0
      %404 = vmatmul.mubr.bf16.gmra.mrb[0].mxu0 %v313
      %v405 = vpop.f32.mrb[0].mxu0
      %v406 = vadd.f32 %v210, %v405
      %v407 = vpop.f32.mrb[0].mxu0
      %v408 = vpop.f32.mrb[0].mxu0
      %v409 = vadd.f32 %v210, %v408
      %v410 = vpop.f32.mrb[0].mxu0
      %411 = vmatprep.mubr.bf16.mxu0 0
      %412 = vmatmul.mubr.bf16.gmra.mrb[0].mxu0 %v316
      %v413 = vpop.f32.mrb[0].mxu0
      %v414 = vadd.f32 %v210, %v413
      %v415 = vpop.f32.mrb[0].mxu0
      %v416 = vpop.f32.mrb[0].mxu0
      %v417 = vadd.f32 %v210, %v416
      %v418 = vpop.f32.mrb[0].mxu0
      %419 = vmatprep.mubr.bf16.mxu0 0
      %420 = vmatmul.mubr.bf16.gmra.mrb[0].mxu0 %v319
      %v421 = vpop.f32.mrb[0].mxu0
      %v422 = vadd.f32 %v210, %v421
      %v423 = vpop.f32.mrb[0].mxu0
      %v424 = vpop.f32.mrb[0].mxu0
      %v425 = vadd.f32 %v210, %v424
      %v426 = vpop.f32.mrb[0].mxu0
      %427 = vmatprep.mubr.bf16.mxu0 0
      %428 = vmatmul.mubr.bf16.gmra.mrb[0].mxu0 %v322
      %v429 = vpop.f32.mrb[0].mxu0
      %v430 = vadd.f32 %v210, %v429
      %v431 = vpop.f32.mrb[0].mxu0
      %v432 = vpop.f32.mrb[0].mxu0
      %v433 = vadd.f32 %v210, %v432
      %v434 = vpop.f32.mrb[0].mxu0
      %435 = vmatprep.mubr.bf16.mxu0 0
      %436 = vmatmul.mubr.bf16.gmra.mrb[0].mxu0 %v325
      %v437 = vpop.f32.mrb[0].mxu0
      %v438 = vadd.f32 %v210, %v437
      %v439 = vpop.f32.mrb[0].mxu0
      %v440 = vpop.f32.mrb[0].mxu0
      %v441 = vadd.f32 %v210, %v440
      %v442 = vpop.f32.mrb[0].mxu0
      %443 = vmatprep.mubr.bf16.mxu0 0
      %444 = vmatmul.mubr.bf16.gmra.mrb[0].mxu0 %v328
      %v445 = vpop.f32.mrb[0].mxu0
      %v446 = vadd.f32 %v210, %v445
      %v447 = vpop.f32.mrb[0].mxu0
      %v448 = vpop.f32.mrb[0].mxu0
      %v449 = vadd.f32 %v210, %v448
      %v450 = vpop.f32.mrb[0].mxu0
      %451 = vmatprep.mubr.bf16.mxu0 0
      %452 = vmatmul.mubr.bf16.gmra.mrb[0].mxu0 %v331
      %v453 = vpop.f32.mrb[0].mxu0
      %v454 = vadd.f32 %v210, %v453
      %v455 = vpop.f32.mrb[0].mxu0
      %v456 = vpop.f32.mrb[0].mxu0
      %v457 = vadd.f32 %v210, %v456
      %v458 = vpop.f32.mrb[0].mxu0
      %459 = vmatprep.mubr.bf16.mxu0 0
      %460 = vmatmul.mubr.bf16.gmra.mrb[0].mxu0 %v334
      %v461 = vpop.f32.mrb[0].mxu0
      %v462 = vadd.f32 %v210, %v461
      %v463 = vpop.f32.mrb[0].mxu0
      %v464 = vpop.f32.mrb[0].mxu0
      %v465 = vadd.f32 %v210, %v464
      %v466 = vpop.f32.mrb[0].mxu0
      %467 = vmatprep.mubr.bf16.mxu0 0
      %468 = vmatmul.mubr.bf16.gmra.mrb[0].mxu0 %v337
      %v469 = vpop.f32.mrb[0].mxu0
      %v470 = vadd.f32 %v210, %v469
      %v471 = vpop.f32.mrb[0].mxu0
      %v472 = vpop.f32.mrb[0].mxu0
      %v473 = vpop.f32.mrb[0].mxu0
      %474 = vdwg.mxu0
      %v475 = vmax.f32 %v374, 0.0
      %v476 = vmax.f32 %v377, 0.0
      %v477 = vmax.f32 %v382, 0.0
      %v478 = vmax.f32 %v385, 0.0
      %v479 = vmax.f32 %v390, 0.0
      %v480 = vmax.f32 %v393, 0.0
      %v481 = vmax.f32 %v398, 0.0
      %v482 = vmax.f32 %v401, 0.0
      %v483 = vmax.f32 %v406, 0.0
      %v484 = vmax.f32 %v409, 0.0
      %v485 = vmax.f32 %v414, 0.0
      %v486 = vmax.f32 %v417, 0.0
      %v487 = vmax.f32 %v422, 0.0
      %v488 = vmax.f32 %v425, 0.0
      %v489 = vmax.f32 %v430, 0.0
      %v490 = vmax.f32 %v433, 0.0
      %v491 = vmax.f32 %v438, 0.0
      %v492 = vmax.f32 %v441, 0.0
      %v493 = vmax.f32 %v446, 0.0
      %v494 = vmax.f32 %v449, 0.0
      %v495 = vmax.f32 %v454, 0.0
      %v496 = vmax.f32 %v457, 0.0
      %v497 = vmax.f32 %v462, 0.0
      %v498 = vmax.f32 %v465, 0.0
      %v499 = vmax.f32 %v470, 0.0
      %500 = vst [vmem:[#allocation2] sm:$0xff] %v475
      %501 = vst [vmem:[#allocation2 + $0x8] sm:$0xff] %v476
      %502 = vst [vmem:[#allocation2 + $0x10] sm:$0xff] %v477
      %503 = vst [vmem:[#allocation2 + $0x18] sm:$0xff] %v478
      %504 = vst [vmem:[#allocation2 + $0x20] sm:$0xff] %v479
      %505 = vst [vmem:[#allocation2 + $0x28] sm:$0xff] %v480
      %506 = vst [vmem:[#allocation2 + $0x30] sm:$0xff] %v481
      %507 = vst [vmem:[#allocation2 + $0x38] sm:$0xff] %v482
      %508 = vst [vmem:[#allocation2 + $0x40] sm:$0xff] %v483
      %509 = vst [vmem:[#allocation2 + $0x48] sm:$0xff] %v484
      %510 = vst [vmem:[#allocation2 + $0x50] sm:$0xff] %v485
      %511 = vst [vmem:[#allocation2 + $0x58] sm:$0xff] %v486
      %512 = vst [vmem:[#allocation2 + $0x60] sm:$0xff] %v487
      %513 = vst [vmem:[#allocation2 + $0x68] sm:$0xff] %v488
      %514 = vst [vmem:[#allocation2 + $0x70] sm:$0xff] %v489
      %515 = vst [vmem:[#allocation2 + $0x78] sm:$0xff] %v490
      %516 = vst [vmem:[#allocation2 + $0x80] sm:$0xff] %v491
      %517 = vst [vmem:[#allocation2 + $0x88] sm:$0xff] %v492
      %518 = vst [vmem:[#allocation2 + $0x90] sm:$0xff] %v493
      %519 = vst [vmem:[#allocation2 + $0x98] sm:$0xff] %v494
      %520 = vst [vmem:[#allocation2 + $0xa0] sm:$0xff] %v495
      %521 = vst [vmem:[#allocation2 + $0xa8] sm:$0xff] %v496
      %522 = vst [vmem:[#allocation2 + $0xb0] sm:$0xff] %v497
      %523 = vst [vmem:[#allocation2 + $0xb8] sm:$0xff] %v498
      %524 = vst [vmem:[#allocation2 + $0xc0] sm:$0xf] %v499
      %v525 = vld [vmem:[#allocation2] sm:$0xff]
      %v526 = vld [vmem:[#allocation2 + $0x8] sm:$0x3f]
      %v527 = vld [vmem:[#allocation2 + $0xe] sm:$0xff]
      %v528 = vld [vmem:[#allocation2 + $0x16] sm:$0x3f]
      %v529 = vmax.f32 %v525, %v527
      %v530 = vmax.f32 %v526, %v528
      %vm533 = vcmask 1046528
      %v534 = vrot.slane %v529, 1
      %v535 = vrot.slane %v530, 1
      %v536 = vsel %vm533, %v534, %v535
      %v539 = vmax.f32 %v529, %v536
      %v540 = vmax.f32 %v530, %v535
      %v541 = vpack.c.bf16 %v540, %v539
      %v543 = vunpack.c.l.b16 %v541
      %v544 = vunpack.c.h.b16 %v541
      %v545 = vpack.c.b16 %v543, %v543
      %v546 = vpack.c.b16 %v544, %v544
      %549 = vst [vmem:[%s170] sm:$0xf] %v545
      %vm550 = vcmask 1042432
      %vm551 = vsmask.f32 2304
      %vm552 = vmand %vm550, %vm551
      %v553 = vld [vmem:[%s170 + $0x4] sm:$0x7]
      %v554 = vsel %vm552, %v546, %v553
      %555 = vst [vmem:[%s170 + $0x4] sm:$0x7] %v554
      %v556 = vld [vmem:[#allocation2 + $0xe] sm:$0xff]
      %v557 = vld [vmem:[#allocation2 + $0x16] sm:$0x3f]
      %v558 = vld [vmem:[#allocation2 + $0x1c] sm:$0xff]
      %v559 = vld [vmem:[#allocation2 + $0x24] sm:$0x3f]
      %v560 = vmax.f32 %v556, %v558
      %v561 = vmax.f32 %v557, %v559
      %v564 = vrot.slane %v560, 1
      %v565 = vrot.slane %v561, 1
      %v566 = vsel %vm533, %v564, %v565
      %v569 = vmax.f32 %v560, %v566
      %v570 = vmax.f32 %v561, %v565
      %v571 = vpack.c.bf16 %v570, %v569
      %v573 = vunpack.c.l.b16 %v571
      %v574 = vunpack.c.h.b16 %v571
      %v575 = vpack.c.b16 %v573, %v573
      %v576 = vpack.c.b16 %v574, %v574
      %s579 = scalar_lea.vmem %s170, 8
      %580 = vst [vmem:[%s579] sm:$0xf] %v575
      %v581 = vld [vmem:[%s579 + $0x4] sm:$0x7]
      %v582 = vsel %vm552, %v576, %v581
      %583 = vst [vmem:[%s579 + $0x4] sm:$0x7] %v582
      %v584 = vld [vmem:[#allocation2 + $0x1c] sm:$0xff]
      %v585 = vld [vmem:[#allocation2 + $0x24] sm:$0x3f]
      %v586 = vld [vmem:[#allocation2 + $0x2a] sm:$0xff]
      %v587 = vld [vmem:[#allocation2 + $0x32] sm:$0x3f]
      %v588 = vmax.f32 %v584, %v586
      %v589 = vmax.f32 %v585, %v587
      %v592 = vrot.slane %v588, 1
      %v593 = vrot.slane %v589, 1
      %v594 = vsel %vm533, %v592, %v593
      %v597 = vmax.f32 %v588, %v594
      %v598 = vmax.f32 %v589, %v593
      %v599 = vpack.c.bf16 %v598, %v597
      %v601 = vunpack.c.l.b16 %v599
      %v602 = vunpack.c.h.b16 %v599
      %v603 = vpack.c.b16 %v601, %v601
      %v604 = vpack.c.b16 %v602, %v602
      %s607 = scalar_lea.vmem %s170, 16
      %608 = vst [vmem:[%s607] sm:$0xf] %v603
      %v609 = vld [vmem:[%s607 + $0x4] sm:$0x7]
      %v610 = vsel %vm552, %v604, %v609
      %611 = vst [vmem:[%s607 + $0x4] sm:$0x7] %v610
      %v612 = vld [vmem:[#allocation2 + $0x2a] sm:$0xff]
      %v613 = vld [vmem:[#allocation2 + $0x32] sm:$0x3f]
      %v614 = vld [vmem:[#allocation2 + $0x38] sm:$0xff]
      %v615 = vld [vmem:[#allocation2 + $0x40] sm:$0x3f]
      %v616 = vmax.f32 %v612, %v614
      %v617 = vmax.f32 %v613, %v615
      %v620 = vrot.slane %v616, 1
      %v621 = vrot.slane %v617, 1
      %v622 = vsel %vm533, %v620, %v621
      %v625 = vmax.f32 %v616, %v622
      %v626 = vmax.f32 %v617, %v621
      %v627 = vpack.c.bf16 %v626, %v625
      %v629 = vunpack.c.l.b16 %v627
      %v630 = vunpack.c.h.b16 %v627
      %v631 = vpack.c.b16 %v629, %v629
      %v632 = vpack.c.b16 %v630, %v630
      %s635 = scalar_lea.vmem %s170, 24
      %636 = vst [vmem:[%s635] sm:$0xf] %v631
      %v637 = vld [vmem:[%s635 + $0x4] sm:$0x7]
      %v638 = vsel %vm552, %v632, %v637
      %639 = vst [vmem:[%s635 + $0x4] sm:$0x7] %v638
      %v640 = vld [vmem:[#allocation2 + $0x38] sm:$0xff]
      %v641 = vld [vmem:[#allocation2 + $0x40] sm:$0x3f]
      %v642 = vld [vmem:[#allocation2 + $0x46] sm:$0xff]
      %v643 = vld [vmem:[#allocation2 + $0x4e] sm:$0x3f]
      %v644 = vmax.f32 %v640, %v642
      %v645 = vmax.f32 %v641, %v643
      %v648 = vrot.slane %v644, 1
      %v649 = vrot.slane %v645, 1
      %v650 = vsel %vm533, %v648, %v649
      %v653 = vmax.f32 %v644, %v650
      %v654 = vmax.f32 %v645, %v649
      %v655 = vpack.c.bf16 %v654, %v653
      %v657 = vunpack.c.l.b16 %v655
      %v658 = vunpack.c.h.b16 %v655
      %v659 = vpack.c.b16 %v657, %v657
      %v660 = vpack.c.b16 %v658, %v658
      %s663 = scalar_lea.vmem %s170, 32
      %664 = vst [vmem:[%s663] sm:$0xf] %v659
      %v665 = vld [vmem:[%s663 + $0x4] sm:$0x7]
      %v666 = vsel %vm552, %v660, %v665
      %667 = vst [vmem:[%s663 + $0x4] sm:$0x7] %v666
      %v668 = vld [vmem:[#allocation2 + $0x46] sm:$0xff]
      %v669 = vld [vmem:[#allocation2 + $0x4e] sm:$0x3f]
      %v670 = vld [vmem:[#allocation2 + $0x54] sm:$0xff]
      %v671 = vld [vmem:[#allocation2 + $0x5c] sm:$0x3f]
      %v672 = vmax.f32 %v668, %v670
      %v673 = vmax.f32 %v669, %v671
      %v676 = vrot.slane %v672, 1
      %v677 = vrot.slane %v673, 1
      %v678 = vsel %vm533, %v676, %v677
      %v681 = vmax.f32 %v672, %v678
      %v682 = vmax.f32 %v673, %v677
      %v683 = vpack.c.bf16 %v682, %v681
      %v685 = vunpack.c.l.b16 %v683
      %v686 = vunpack.c.h.b16 %v683
      %v687 = vpack.c.b16 %v685, %v685
      %v688 = vpack.c.b16 %v686, %v686
      %s691 = scalar_lea.vmem %s170, 40
      %692 = vst [vmem:[%s691] sm:$0xf] %v687
      %v693 = vld [vmem:[%s691 + $0x4] sm:$0x7]
      %v694 = vsel %vm552, %v688, %v693
      %695 = vst [vmem:[%s691 + $0x4] sm:$0x7] %v694
      %v696 = vld [vmem:[#allocation2 + $0x54] sm:$0xff]
      %v697 = vld [vmem:[#allocation2 + $0x5c] sm:$0x3f]
      %v698 = vld [vmem:[#allocation2 + $0x62] sm:$0xff]
      %v699 = vld [vmem:[#allocation2 + $0x6a] sm:$0x3f]
      %v700 = vmax.f32 %v696, %v698
      %v701 = vmax.f32 %v697, %v699
      %v704 = vrot.slane %v700, 1
      %v705 = vrot.slane %v701, 1
      %v706 = vsel %vm533, %v704, %v705
      %v709 = vmax.f32 %v700, %v706
      %v710 = vmax.f32 %v701, %v705
      %v711 = vpack.c.bf16 %v710, %v709
      %v713 = vunpack.c.l.b16 %v711
      %v714 = vunpack.c.h.b16 %v711
      %v715 = vpack.c.b16 %v713, %v713
      %v716 = vpack.c.b16 %v714, %v714
      %s719 = scalar_lea.vmem %s170, 48
      %720 = vst [vmem:[%s719] sm:$0xf] %v715
      %v721 = vld [vmem:[%s719 + $0x4] sm:$0x7]
      %v722 = vsel %vm552, %v716, %v721
      %723 = vst [vmem:[%s719 + $0x4] sm:$0x7] %v722
      %v724 = vld [vmem:[#allocation2 + $0x62] sm:$0xff]
      %v725 = vld [vmem:[#allocation2 + $0x6a] sm:$0x3f]
      %v726 = vld [vmem:[#allocation2 + $0x70] sm:$0xff]
      %v727 = vld [vmem:[#allocation2 + $0x78] sm:$0x3f]
      %v728 = vmax.f32 %v724, %v726
      %v729 = vmax.f32 %v725, %v727
      %v732 = vrot.slane %v728, 1
      %v733 = vrot.slane %v729, 1
      %v734 = vsel %vm533, %v732, %v733
      %v737 = vmax.f32 %v728, %v734
      %v738 = vmax.f32 %v729, %v733
      %v739 = vpack.c.bf16 %v738, %v737
      %v741 = vunpack.c.l.b16 %v739
      %v742 = vunpack.c.h.b16 %v739
      %v743 = vpack.c.b16 %v741, %v741
      %v744 = vpack.c.b16 %v742, %v742
      %s747 = scalar_lea.vmem %s170, 56
      %748 = vst [vmem:[%s747] sm:$0xf] %v743
      %v749 = vld [vmem:[%s747 + $0x4] sm:$0x7]
      %v750 = vsel %vm552, %v744, %v749
      %751 = vst [vmem:[%s747 + $0x4] sm:$0x7] %v750
      %v752 = vld [vmem:[#allocation2 + $0x70] sm:$0xff]
      %v753 = vld [vmem:[#allocation2 + $0x78] sm:$0x3f]
      %v754 = vld [vmem:[#allocation2 + $0x7e] sm:$0xff]
      %v755 = vld [vmem:[#allocation2 + $0x86] sm:$0x3f]
      %v756 = vmax.f32 %v752, %v754
      %v757 = vmax.f32 %v753, %v755
      %v760 = vrot.slane %v756, 1
      %v761 = vrot.slane %v757, 1
      %v762 = vsel %vm533, %v760, %v761
      %v765 = vmax.f32 %v756, %v762
      %v766 = vmax.f32 %v757, %v761
      %v767 = vpack.c.bf16 %v766, %v765
      %v769 = vunpack.c.l.b16 %v767
      %v770 = vunpack.c.h.b16 %v767
      %v771 = vpack.c.b16 %v769, %v769
      %v772 = vpack.c.b16 %v770, %v770
      %s775 = scalar_lea.vmem %s170, 64
      %776 = vst [vmem:[%s775] sm:$0xf] %v771
      %v777 = vld [vmem:[%s775 + $0x4] sm:$0x7]
      %v778 = vsel %vm552, %v772, %v777
      %779 = vst [vmem:[%s775 + $0x4] sm:$0x7] %v778
      %v780 = vld [vmem:[#allocation2 + $0x7e] sm:$0xff]
      %v781 = vld [vmem:[#allocation2 + $0x86] sm:$0x3f]
      %v782 = vld [vmem:[#allocation2 + $0x8c] sm:$0xff]
      %v783 = vld [vmem:[#allocation2 + $0x94] sm:$0x3f]
      %v784 = vmax.f32 %v780, %v782
      %v785 = vmax.f32 %v781, %v783
      %v788 = vrot.slane %v784, 1
      %v789 = vrot.slane %v785, 1
      %v790 = vsel %vm533, %v788, %v789
      %v793 = vmax.f32 %v784, %v790
      %v794 = vmax.f32 %v785, %v789
      %v795 = vpack.c.bf16 %v794, %v793
      %v797 = vunpack.c.l.b16 %v795
      %v798 = vunpack.c.h.b16 %v795
      %v799 = vpack.c.b16 %v797, %v797
      %v800 = vpack.c.b16 %v798, %v798
      %s803 = scalar_lea.vmem %s170, 72
      %804 = vst [vmem:[%s803] sm:$0xf] %v799
      %v805 = vld [vmem:[%s803 + $0x4] sm:$0x7]
      %v806 = vsel %vm552, %v800, %v805
      %807 = vst [vmem:[%s803 + $0x4] sm:$0x7] %v806
      %v808 = vld [vmem:[#allocation2 + $0x8c] sm:$0xff]
      %v809 = vld [vmem:[#allocation2 + $0x94] sm:$0x3f]
      %v810 = vld [vmem:[#allocation2 + $0x9a] sm:$0xff]
      %v811 = vld [vmem:[#allocation2 + $0xa2] sm:$0x3f]
      %v812 = vmax.f32 %v808, %v810
      %v813 = vmax.f32 %v809, %v811
      %v816 = vrot.slane %v812, 1
      %v817 = vrot.slane %v813, 1
      %v818 = vsel %vm533, %v816, %v817
      %v821 = vmax.f32 %v812, %v818
      %v822 = vmax.f32 %v813, %v817
      %v823 = vpack.c.bf16 %v822, %v821
      %v825 = vunpack.c.l.b16 %v823
      %v826 = vunpack.c.h.b16 %v823
      %v827 = vpack.c.b16 %v825, %v825
      %v828 = vpack.c.b16 %v826, %v826
      %s831 = scalar_lea.vmem %s170, 80
      %832 = vst [vmem:[%s831] sm:$0xf] %v827
      %v833 = vld [vmem:[%s831 + $0x4] sm:$0x7]
      %v834 = vsel %vm552, %v828, %v833
      %835 = vst [vmem:[%s831 + $0x4] sm:$0x7] %v834
      %v836 = vld [vmem:[#allocation2 + $0x9a] sm:$0xff]
      %v837 = vld [vmem:[#allocation2 + $0xa2] sm:$0x3f]
      %v838 = vld [vmem:[#allocation2 + $0xa8] sm:$0xff]
      %v839 = vld [vmem:[#allocation2 + $0xb0] sm:$0x3f]
      %v840 = vmax.f32 %v836, %v838
      %v841 = vmax.f32 %v837, %v839
      %v844 = vrot.slane %v840, 1
      %v845 = vrot.slane %v841, 1
      %v846 = vsel %vm533, %v844, %v845
      %v849 = vmax.f32 %v840, %v846
      %v850 = vmax.f32 %v841, %v845
      %v851 = vpack.c.bf16 %v850, %v849
      %v853 = vunpack.c.l.b16 %v851
      %v854 = vunpack.c.h.b16 %v851
      %v855 = vpack.c.b16 %v853, %v853
      %v856 = vpack.c.b16 %v854, %v854
      %s859 = scalar_lea.vmem %s170, 88
      %860 = vst [vmem:[%s859] sm:$0xf] %v855
      %v861 = vld [vmem:[%s859 + $0x4] sm:$0x7]
      %v862 = vsel %vm552, %v856, %v861
      %863 = vst [vmem:[%s859 + $0x4] sm:$0x7] %v862
      %v864 = vld [vmem:[#allocation2 + $0xa8] sm:$0xff]
      %v865 = vld [vmem:[#allocation2 + $0xb0] sm:$0x3f]
      %v866 = vld [vmem:[#allocation2 + $0xb6] sm:$0xff]
      %v867 = vld [vmem:[#allocation2 + $0xbe] sm:$0x3f]
      %v868 = vmax.f32 %v864, %v866
      %v869 = vmax.f32 %v865, %v867
      %v872 = vrot.slane %v868, 1
      %v873 = vrot.slane %v869, 1
      %v874 = vsel %vm533, %v872, %v873
      %v877 = vmax.f32 %v868, %v874
      %v878 = vmax.f32 %v869, %v873
      %v879 = vpack.c.bf16 %v878, %v877
      %v881 = vunpack.c.l.b16 %v879
      %v882 = vunpack.c.h.b16 %v879
      %v883 = vpack.c.b16 %v881, %v881
      %v884 = vpack.c.b16 %v882, %v882
      %s887 = scalar_lea.vmem %s170, 96
      %888 = vst [vmem:[%s887] sm:$0xf] %v883
      %v889 = vld [vmem:[%s887 + $0x4] sm:$0x7]
      %v890 = vsel %vm552, %v884, %v889
      %891 = vst [vmem:[%s887 + $0x4] sm:$0x7] %v890
      %p892 = scmp.lt.s32.totalorder %s14, 1
      %s893 = scalar_select %p892, %s14, 1
      %s894 = smul.addr %s893, 26
      %s895 = smul.addr %s894, 4
      %s896 = scalar_lea.vmem %s3, %s895
      // Predicated region
      $region33: #{cnn_mnist_forward.2} parent=31 // pred_check
        %p897 = pneg %p100
      $region34: #{cnn_mnist_forward.2} parent=31 // pred_check_branch
        %899 = sbr.rel (%p897) target = $region36
      $region35: #{cnn_mnist_forward.2} parent=31 // pred_region
        _
      $region36: #{cnn_mnist_forward.2} parent=31 // pred_fallthru
        _
    $region32: #{cnn_mnist_forward.2} parent=5 // pred_fallthru
      _
    %p900 = scmp.le.s32.totalorder 2, %s9
    // Predicated region
    $region37: #{cnn_mnist_forward.2} parent=5 // pred_check
      %p901 = pneg %p900
    $region38: #{cnn_mnist_forward.2} parent=5 // pred_check_branch
      %903 = sbr.rel (%p901) target = $region40
    $region39: #{cnn_mnist_forward.2} parent=5 // pred_region
      %s904 = ssub.s32 %s9, 2
      // Predicated region
      $region41: #{cnn_mnist_forward.2} parent=39 // pred_check
        %p905 = pneg %p106
      $region42: #{cnn_mnist_forward.2} parent=39 // pred_check_branch
        %907 = sbr.rel (%p905) target = $region44
      $region43: #{cnn_mnist_forward.2} parent=39 // pred_region
        %p908 = scmp.lt.s32.totalorder %s15, 1
        %s909 = scalar_select %p908, %s15, 1
        %s910 = smul.addr %s909, 26
        %s911 = smul.addr %s910, 4
        %s912 = scalar_lea.vmem %s3, %s911
      $region44: #{cnn_mnist_forward.2} parent=39 // pred_fallthru
        _
    $region40: #{cnn_mnist_forward.2} parent=5 // pred_fallthru
      _
  $region6: #{cnn_mnist_forward.2} parent=0 // loop_footer
    %s13 = sadd.s32 1, %s9
  $region7: #{cnn_mnist_forward.2} parent=0 // loop_footer_branch
    %8 = sbr.rel target = $region3
  $region8: #{cnn_mnist_forward.2} parent=0 // loop_exit
    _

// kernel: cnn_mnist_forward.3
$region0: #{cnn_mnist_forward.3}
  #allocation0 [shape = 'u32[]', space=smem, size = 0x4, offset = 0x4, fixed_abs, tag = 'smem constant byte address 0x4 - core index']
  #allocation1 [shape = 'u32[144,128]{1,0:T(1,128)}', space=vmem, size = 0x12000, scoped, tag = 'internal scratch']
  %s0 = inlined_call_operand.vmem [shape: bf16[2,25,2048], index: 0, kind: input, shape index: {}]
  %s1 = inlined_call_operand.vmem [shape: bf16[2048,32], index: 1, kind: input, shape index: {}]
  %s2 = inlined_call_operand.vmem [shape: f32[1,32], index: 2, kind: input, shape index: {}]
  %s3 = inlined_call_operand.vmem [shape: bf16[16,32,32], index: 3, kind: input, shape index: {}]
  %s4 = inlined_call_operand.vmem [shape: f32[1,32], index: 4, kind: input, shape index: {}]
  %s5 = inlined_call_operand.vmem [shape: bf16[32,10], index: 5, kind: input, shape index: {}]
  %s6 = inlined_call_operand.vmem [shape: f32[1,10], index: 6, kind: input, shape index: {}]
  %s7 = inlined_call_operand.hbm [shape: f32[2,1,10], index: 7, kind: output, shape index: {}]
  %s8 = sld [smem:[#allocation0]]
  $region61: #{cnn_mnist_forward.3} parent=0
    _
  %s10 = ssub.s32 1, %s8
  %s11 = scalar_select 0, %s10, %s8
  $region1: #{cnn_mnist_forward.3} parent=0
    #allocation2 [shape = 'u8[1024]{0}', space=vmem, size = 0x400, scoped, tag = 'output window, operand 0']
    #allocation3 [shape = 's32[2]{0}', space=sflag, size = 0x8, scoped, tag = 'scoped memory for cnn_mnist_forward.3']
    %12 = vsyncpa [#allocation3], 0
    %s13 = scalar_lea.sflag [#allocation3], 1
    %14 = vsyncpa %s13, 0
    loop: start=0, step=1, limit=4
    $region2: #{cnn_mnist_forward.3} parent=1 // loop_pre_header
      _
    $region3: #{cnn_mnist_forward.3} parent=1 // loop_header
      %s16 = sphi 0, %s20
      %p17 = scmp.ge.s32.totalorder %s16, 4
      %s26 = sphi 0, %s28
      %s29 = sphi 0, %s26
      %s30 = sphi 0, %s29
      %s46 = sphi 0, %s30
      %s50 = sphi 0, %s50
      %s52 = sphi 0, %s50
      %s53 = sphi 0, %s52
      %s67 = sphi 0, %s53
      %s71 = sphi 0, %s71
      %s73 = sphi 0, %s71
      %s74 = sphi 0, %s73
      %s88 = sphi 0, %s74
      %s92 = sphi 0, %s92
      %s94 = sphi 0, %s92
      %s95 = sphi 0, %s94
      %s109 = sphi 0, %s95
      %s113 = sphi 0, %s113
      %s115 = sphi 0, %s113
      %s116 = sphi 0, %s115
      %s130 = sphi 0, %s116
      %s134 = sphi 0, %s134
      %s136 = sphi 0, %s134
      %s137 = sphi 0, %s136
      %s151 = sphi 0, %s137
      %s155 = sphi 0, %s155
      %s157 = sphi 0, %s155
      %s158 = sphi 0, %s157
      %s172 = sphi 0, %s158
      %s178 = sphi 0, %s180
      %s181 = sphi 0, %s178
      %s182 = sphi 0, %s181
      %s198 = sphi 0, %s182
    $region4: #{cnn_mnist_forward.3} parent=1 // loop_header_branch
      %19 = sbr.rel (%p17) target = $region8
    $region5: #{cnn_mnist_forward.3} parent=1 // loop_body
      %s21 = ssub.s32 %s16, 1
      %s22 = ssub.s32 %s16, 2
      %s23 = sadd.s32 %s16, 1
      %s24 = ssub.s32 %s16, %s23
      %p25 = scmp.eq.s32.totalorder %s24, 0
      %s27 = sadd.s32 %s26, 1
      %s28 = scalar_select %p25, %s26, %s27
      %p31 = pneg %p25
      %p32 = scmp.eq.s32.totalorder %s16, 1
      %p33 = por %p31, %p32
      %p34 = scmp.ne.s32.totalorder %s26, %s29
      %p35 = scmp.eq.s32.totalorder %s16, 0
      %p36 = por %p34, %p35
      %p37 = scmp.ne.s32.totalorder %s26, %s29
      %p38 = scmp.eq.s32.totalorder %s21, 1
      %p39 = por %p37, %p38
      %p40 = scmp.ne.s32.totalorder %s29, %s30
      %p41 = scmp.eq.s32.totalorder %s21, 0
      %p42 = por %p40, %p41
      %p43 = scmp.ne.s32.totalorder %s29, %s30
      %p44 = scmp.eq.s32.totalorder %s22, 1
      %p45 = por %p43, %p44
      %p47 = scmp.ne.s32.totalorder %s30, %s46
      %p48 = scmp.eq.s32.totalorder %s22, 0
      %p49 = por %p47, %p48
      %s51 = sadd.s32 %s50, 1
      %p54 = scmp.eq.s32.totalorder %s16, 1
      %p55 = scmp.ne.s32.totalorder %s50, %s52
      %p56 = scmp.eq.s32.totalorder %s16, 0
      %p57 = por %p55, %p56
      %p58 = scmp.ne.s32.totalorder %s50, %s52
      %p59 = scmp.eq.s32.totalorder %s21, 1
      %p60 = por %p58, %p59
      %p61 = scmp.ne.s32.totalorder %s52, %s53
      %p62 = scmp.eq.s32.totalorder %s21, 0
      %p63 = por %p61, %p62
      %p64 = scmp.ne.s32.totalorder %s52, %s53
      %p65 = scmp.eq.s32.totalorder %s22, 1
      %p66 = por %p64, %p65
      %p68 = scmp.ne.s32.totalorder %s53, %s67
      %p69 = scmp.eq.s32.totalorder %s22, 0
      %p70 = por %p68, %p69
      %s72 = sadd.s32 %s71, 1
      %p75 = scmp.eq.s32.totalorder %s16, 1
      %p76 = scmp.ne.s32.totalorder %s71, %s73
      %p77 = scmp.eq.s32.totalorder %s16, 0
      %p78 = por %p76, %p77
      %p79 = scmp.ne.s32.totalorder %s71, %s73
      %p80 = scmp.eq.s32.totalorder %s21, 1
      %p81 = por %p79, %p80
      %p82 = scmp.ne.s32.totalorder %s73, %s74
      %p83 = scmp.eq.s32.totalorder %s21, 0
      %p84 = por %p82, %p83
      %p85 = scmp.ne.s32.totalorder %s73, %s74
      %p86 = scmp.eq.s32.totalorder %s22, 1
      %p87 = por %p85, %p86
      %p89 = scmp.ne.s32.totalorder %s74, %s88
      %p90 = scmp.eq.s32.totalorder %s22, 0
      %p91 = por %p89, %p90
      %s93 = sadd.s32 %s92, 1
      %p96 = scmp.eq.s32.totalorder %s16, 1
      %p97 = scmp.ne.s32.totalorder %s92, %s94
      %p98 = scmp.eq.s32.totalorder %s16, 0
      %p99 = por %p97, %p98
      %p100 = scmp.ne.s32.totalorder %s92, %s94
      %p101 = scmp.eq.s32.totalorder %s21, 1
      %p102 = por %p100, %p101
      %p103 = scmp.ne.s32.totalorder %s94, %s95
      %p104 = scmp.eq.s32.totalorder %s21, 0
      %p105 = por %p103, %p104
      %p106 = scmp.ne.s32.totalorder %s94, %s95
      %p107 = scmp.eq.s32.totalorder %s22, 1
      %p108 = por %p106, %p107
      %p110 = scmp.ne.s32.totalorder %s95, %s109
      %p111 = scmp.eq.s32.totalorder %s22, 0
      %p112 = por %p110, %p111
      %s114 = sadd.s32 %s113, 1
      %p117 = scmp.eq.s32.totalorder %s16, 1
      %p118 = scmp.ne.s32.totalorder %s113, %s115
      %p119 = scmp.eq.s32.totalorder %s16, 0
      %p120 = por %p118, %p119
      %p121 = scmp.ne.s32.totalorder %s113, %s115
      %p122 = scmp.eq.s32.totalorder %s21, 1
      %p123 = por %p121, %p122
      %p124 = scmp.ne.s32.totalorder %s115, %s116
      %p125 = scmp.eq.s32.totalorder %s21, 0
      %p126 = por %p124, %p125
      %p127 = scmp.ne.s32.totalorder %s115, %s116
      %p128 = scmp.eq.s32.totalorder %s22, 1
      %p129 = por %p127, %p128
      %p131 = scmp.ne.s32.totalorder %s116, %s130
      %p132 = scmp.eq.s32.totalorder %s22, 0
      %p133 = por %p131, %p132
      %s135 = sadd.s32 %s134, 1
      %p138 = scmp.eq.s32.totalorder %s16, 1
      %p139 = scmp.ne.s32.totalorder %s134, %s136
      %p140 = scmp.eq.s32.totalorder %s16, 0
      %p141 = por %p139, %p140
      %p142 = scmp.ne.s32.totalorder %s134, %s136
      %p143 = scmp.eq.s32.totalorder %s21, 1
      %p144 = por %p142, %p143
      %p145 = scmp.ne.s32.totalorder %s136, %s137
      %p146 = scmp.eq.s32.totalorder %s21, 0
      %p147 = por %p145, %p146
      %p148 = scmp.ne.s32.totalorder %s136, %s137
      %p149 = scmp.eq.s32.totalorder %s22, 1
      %p150 = por %p148, %p149
      %p152 = scmp.ne.s32.totalorder %s137, %s151
      %p153 = scmp.eq.s32.totalorder %s22, 0
      %p154 = por %p152, %p153
      %s156 = sadd.s32 %s155, 1
      %p159 = scmp.eq.s32.totalorder %s16, 1
      %p160 = scmp.ne.s32.totalorder %s155, %s157
      %p161 = scmp.eq.s32.totalorder %s16, 0
      %p162 = por %p160, %p161
      %p163 = scmp.ne.s32.totalorder %s155, %s157
      %p164 = scmp.eq.s32.totalorder %s21, 1
      %p165 = por %p163, %p164
      %p166 = scmp.ne.s32.totalorder %s157, %s158
      %p167 = scmp.eq.s32.totalorder %s21, 0
      %p168 = por %p166, %p167
      %p169 = scmp.ne.s32.totalorder %s157, %s158
      %p170 = scmp.eq.s32.totalorder %s22, 1
      %p171 = por %p169, %p170
      %p173 = scmp.ne.s32.totalorder %s158, %s172
      %p174 = scmp.eq.s32.totalorder %s22, 0
      %p175 = por %p173, %p174
      %s176 = ssub.s32 %s16, %s23
      %p177 = scmp.eq.s32.totalorder %s176, 0
      %s179 = sadd.s32 %s178, 1
      %s180 = scalar_select %p177, %s178, %s179
      %p183 = pneg %p177
      %p184 = scmp.eq.s32.totalorder %s16, 1
      %p185 = por %p183, %p184
      %p186 = scmp.ne.s32.totalorder %s178, %s181
      %p187 = scmp.eq.s32.totalorder %s16, 0
      %p188 = por %p186, %p187
      %p189 = scmp.ne.s32.totalorder %s178, %s181
      %p190 = scmp.eq.s32.totalorder %s21, 1
      %p191 = por %p189, %p190
      %p192 = scmp.ne.s32.totalorder %s181, %s182
      %p193 = scmp.eq.s32.totalorder %s21, 0
      %p194 = por %p192, %p193
      %p195 = scmp.ne.s32.totalorder %s181, %s182
      %p196 = scmp.eq.s32.totalorder %s22, 1
      %p197 = por %p195, %p196
      %p199 = scmp.ne.s32.totalorder %s182, %s198
      %p200 = scmp.eq.s32.totalorder %s22, 0
      %p201 = por %p199, %p200
      %p202 = scmp.le.s32.totalorder 1, %s16
      %p203 = scmp.lt.s32.totalorder %s16, 3
      %p204 = pnand %p202, %p203
      %p205 = pneg %p204
      // Predicated region
      $region9: #{cnn_mnist_forward.3} parent=5 // pred_check
        _
      $region10: #{cnn_mnist_forward.3} parent=5 // pred_check_branch
        %207 = sbr.rel (%p204) target = $region12
      $region11: #{cnn_mnist_forward.3} parent=5 // pred_region
        %s208 = ssub.s32 %s16, 1
        // Predicated region
        $region13: #{cnn_mnist_forward.3} parent=11 // pred_check
          %p209 = pneg %p63
        $region14: #{cnn_mnist_forward.3} parent=11 // pred_check_branch
          %211 = sbr.rel (%p209) target = $region16
        $region15: #{cnn_mnist_forward.3} parent=11 // pred_region
          _
        $region16: #{cnn_mnist_forward.3} parent=11 // pred_fallthru
          _
        // Predicated region
        $region17: #{cnn_mnist_forward.3} parent=11 // pred_check
          %p212 = pneg %p84
        $region18: #{cnn_mnist_forward.3} parent=11 // pred_check_branch
          %214 = sbr.rel (%p212) target = $region20
        $region19: #{cnn_mnist_forward.3} parent=11 // pred_region
          _
        $region20: #{cnn_mnist_forward.3} parent=11 // pred_fallthru
          _
        // Predicated region
        $region21: #{cnn_mnist_forward.3} parent=11 // pred_check
          %p215 = pneg %p105
        $region22: #{cnn_mnist_forward.3} parent=11 // pred_check_branch
          %217 = sbr.rel (%p215) target = $region24
        $region23: #{cnn_mnist_forward.3} parent=11 // pred_region
          _
        $region24: #{cnn_mnist_forward.3} parent=11 // pred_fallthru
          _
        // Predicated region
        $region25: #{cnn_mnist_forward.3} parent=11 // pred_check
          %p218 = pneg %p126
        $region26: #{cnn_mnist_forward.3} parent=11 // pred_check_branch
          %220 = sbr.rel (%p218) target = $region28
        $region27: #{cnn_mnist_forward.3} parent=11 // pred_region
          _
        $region28: #{cnn_mnist_forward.3} parent=11 // pred_fallthru
          _
        // Predicated region
        $region29: #{cnn_mnist_forward.3} parent=11 // pred_check
          %p221 = pneg %p147
        $region30: #{cnn_mnist_forward.3} parent=11 // pred_check_branch
          %223 = sbr.rel (%p221) target = $region32
        $region31: #{cnn_mnist_forward.3} parent=11 // pred_region
          _
        $region32: #{cnn_mnist_forward.3} parent=11 // pred_fallthru
          _
        // Predicated region
        $region33: #{cnn_mnist_forward.3} parent=11 // pred_check
          %p224 = pneg %p168
        $region34: #{cnn_mnist_forward.3} parent=11 // pred_check_branch
          %226 = sbr.rel (%p224) target = $region36
        $region35: #{cnn_mnist_forward.3} parent=11 // pred_region
          _
        $region36: #{cnn_mnist_forward.3} parent=11 // pred_fallthru
          _
      $region12: #{cnn_mnist_forward.3} parent=5 // pred_fallthru
        _
      %p227 = scmp.lt.s32.totalorder %s16, 2
      // Predicated region
      $region37: #{cnn_mnist_forward.3} parent=5 // pred_check
        %p228 = pneg %p227
      $region38: #{cnn_mnist_forward.3} parent=5 // pred_check_branch
        %230 = sbr.rel (%p228) target = $region40
      $region39: #{cnn_mnist_forward.3} parent=5 // pred_region
        // Predicated region
        $region41: #{cnn_mnist_forward.3} parent=39 // pred_check
          %p231 = pneg %p36
        $region42: #{cnn_mnist_forward.3} parent=39 // pred_check_branch
          %233 = sbr.rel (%p231) target = $region44
        $region43: #{cnn_mnist_forward.3} parent=39 // pred_region
          %p234 = scmp.lt.s32.totalorder %s16, 1
          %s235 = scalar_select %p234, %s16, 1
          %s236 = smul.addr %s235, 64
          %s237 = smul.addr %s236, 4
          %s238 = scalar_lea.vmem %s0, %s237
        $region44: #{cnn_mnist_forward.3} parent=39 // pred_fallthru
          _
      $region40: #{cnn_mnist_forward.3} parent=5 // pred_fallthru
        _
      %p239 = scmp.le.s32.totalorder 1, %s16
      %p240 = scmp.lt.s32.totalorder %s16, 3
      %p241 = pnand %p239, %p240
      %p242 = pneg %p241
      // Predicated region
      $region45: #{cnn_mnist_forward.3} parent=5 // pred_check
        _
      $region46: #{cnn_mnist_forward.3} parent=5 // pred_check_branch
        %244 = sbr.rel (%p241) target = $region48
      $region47: #{cnn_mnist_forward.3} parent=5 // pred_region
        %s245 = ssub.s32 %s16, 1
        %p246 = scmp.lt.s32.totalorder %s21, 1
        %s247 = scalar_select %p246, %s21, 1
        %s248 = smul.addr %s247, 64
        %s249 = smul.addr %s248, 4
        %s250 = scalar_lea.vmem %s0, %s249
        %p251 = pneg %p42
        %p252 = pneg %p39
        %p253 = pneg %p63
        %p254 = pneg %p60
        %p255 = pneg %p84
        %p256 = pneg %p81
        %p257 = pneg %p105
        %p258 = pneg %p102
        %p259 = pneg %p126
        %p260 = pneg %p123
        %p261 = pneg %p147
        %p262 = pneg %p144
        %p263 = pneg %p168
        %p264 = pneg %p165
        %p265 = pneg %p194
        %p266 = pneg %p191
        %s267 = sand.u32 %s181, 1
        %s268 = scalar_lea.sflag [#allocation3], %s267
        %s269 = sand.u32 %s181, 1
        %s270 = scalar_lea.vmem [#allocation2], %s269
        %p271 = scmp.lt.s32.totalorder %s21, 1
        %s272 = scalar_select %p271, %s21, 1
        %s273 = smul.addr %s272, 64
        %s274 = smul.addr %s273, 4
        %s275 = scalar_lea.vmem %s0, %s274
        %v277 = vld [vmem:[%s275] sm:$0xff]
        %v278 = vld [vmem:[%s275 + $0x8] sm:$0xff]
        %v279 = vld [vmem:[%s275 + $0x10] sm:$0xff]
        %v280 = vld [vmem:[%s275 + $0x18] sm:$0xff]
        %v281 = vld [vmem:[%s275 + $0x20] sm:$0xff]
        %v282 = vld [vmem:[%s275 + $0x28] sm:$0xff]
        %v283 = vld [vmem:[%s275 + $0x30] sm:$0xff]
        %v284 = vld [vmem:[%s275 + $0x38] sm:$0xff]
        %v285 = vld [vmem:[%s275 + $0x40] sm:$0xff]
        %v286 = vld [vmem:[%s275 + $0x48] sm:$0xff]
        %v287 = vld [vmem:[%s275 + $0x50] sm:$0xff]
        %v288 = vld [vmem:[%s275 + $0x58] sm:$0xff]
        %v289 = vld [vmem:[%s275 + $0x60] sm:$0xff]
        %v290 = vld [vmem:[%s275 + $0x68] sm:$0xff]
        %v291 = vld [vmem:[%s275 + $0x70] sm:$0xff]
        %v292 = vld [vmem:[%s275 + $0x78] sm:$0xff]
        %v293 = vld [vmem:[%s275 + $0x80] sm:$0xff]
        %v294 = vld [vmem:[%s275 + $0x88] sm:$0xff]
        %v295 = vld [vmem:[%s275 + $0x90] sm:$0xff]
        %v296 = vld [vmem:[%s275 + $0x98] sm:$0xff]
        %v297 = vld [vmem:[%s275 + $0xa0] sm:$0xff]
        %v298 = vld [vmem:[%s275 + $0xa8] sm:$0xff]
        %v299 = vld [vmem:[%s275 + $0xb0] sm:$0xff]
        %v300 = vld [vmem:[%s275 + $0xb8] sm:$0xff]
        %v301 = vld [vmem:[%s275 + $0xc0] sm:$0x11]
        %v302 = vld [vmem:[%s275 + $0xc8] sm:$0x11]
        %v303 = vld [vmem:[%s275 + $0xd0] sm:$0x11]
        %v304 = vld [vmem:[%s275 + $0xd8] sm:$0x11]
        %v305 = vld [vmem:[%s275 + $0xe0] sm:$0x11]
        %v306 = vld [vmem:[%s275 + $0xe8] sm:$0x11]
        %v307 = vld [vmem:[%s275 + $0xf0] sm:$0x11]
        %v308 = vld [vmem:[%s275 + $0xf8] sm:$0x11]
        %v309 = vld [vmem:[%s1] sm:$0xf]
        %v310 = vld [vmem:[%s1 + $0x4] sm:$0xf]
        %v311 = vld [vmem:[%s1 + $0x8] sm:$0xf]
        %v312 = vld [vmem:[%s1 + $0xc] sm:$0xf]
        %v313 = vld [vmem:[%s1 + $0x10] sm:$0xf]
        %v314 = vld [vmem:[%s1 + $0x14] sm:$0xf]
        %v315 = vld [vmem:[%s1 + $0x18] sm:$0xf]
        %v316 = vld [vmem:[%s1 + $0x1c] sm:$0xf]
        %v317 = vld [vmem:[%s1 + $0x20] sm:$0xf]
        %v318 = vld [vmem:[%s1 + $0x24] sm:$0xf]
        %v319 = vld [vmem:[%s1 + $0x28] sm:$0xf]
        %v320 = vld [vmem:[%s1 + $0x2c] sm:$0xf]
        %v321 = vld [vmem:[%s1 + $0x30] sm:$0xf]
        %v322 = vld [vmem:[%s1 + $0x34] sm:$0xf]
        %v323 = vld [vmem:[%s1 + $0x38] sm:$0xf]
        %v324 = vld [vmem:[%s1 + $0x3c] sm:$0xf]
        %v325 = vld [vmem:[%s1 + $0x40] sm:$0xf]
        %v326 = vld [vmem:[%s1 + $0x44] sm:$0xf]
        %v327 = vld [vmem:[%s1 + $0x48] sm:$0xf]
        %v328 = vld [vmem:[%s1 + $0x4c] sm:$0xf]
        %v329 = vld [vmem:[%s1 + $0x50] sm:$0xf]
        %v330 = vld [vmem:[%s1 + $0x54] sm:$0xf]
        %v331 = vld [vmem:[%s1 + $0x58] sm:$0xf]
        %v332 = vld [vmem:[%s1 + $0x5c] sm:$0xf]
        %v333 = vld [vmem:[%s1 + $0x60] sm:$0xf]
        %v334 = vld [vmem:[%s1 + $0x64] sm:$0xf]
        %v335 = vld [vmem:[%s1 + $0x68] sm:$0xf]
        %v336 = vld [vmem:[%s1 + $0x6c] sm:$0xf]
        %v337 = vld [vmem:[%s1 + $0x70] sm:$0xf]
        %v338 = vld [vmem:[%s1 + $0x74] sm:$0xf]
        %v339 = vld [vmem:[%s1 + $0x78] sm:$0xf]
        %v340 = vld [vmem:[%s1 + $0x7c] sm:$0xf]
        %v341 = vld [vmem:[%s1 + $0x80] sm:$0xf]
        %v342 = vld [vmem:[%s1 + $0x84] sm:$0xf]
        %v343 = vld [vmem:[%s1 + $0x88] sm:$0xf]
        %v344 = vld [vmem:[%s1 + $0x8c] sm:$0xf]
        %v345 = vld [vmem:[%s1 + $0x90] sm:$0xf]
        %v346 = vld [vmem:[%s1 + $0x94] sm:$0xf]
        %v347 = vld [vmem:[%s1 + $0x98] sm:$0xf]
        %v348 = vld [vmem:[%s1 + $0x9c] sm:$0xf]
        %v349 = vld [vmem:[%s1 + $0xa0] sm:$0xf]
        %v350 = vld [vmem:[%s1 + $0xa4] sm:$0xf]
        %v351 = vld [vmem:[%s1 + $0xa8] sm:$0xf]
        %v352 = vld [vmem:[%s1 + $0xac] sm:$0xf]
        %v353 = vld [vmem:[%s1 + $0xb0] sm:$0xf]
        %v354 = vld [vmem:[%s1 + $0xb4] sm:$0xf]
        %v355 = vld [vmem:[%s1 + $0xb8] sm:$0xf]
        %v356 = vld [vmem:[%s1 + $0xbc] sm:$0xf]
        %v357 = vld [vmem:[%s1 + $0xc0] sm:$0xf]
        %v358 = vld [vmem:[%s1 + $0xc4] sm:$0xf]
        %v359 = vld [vmem:[%s1 + $0xc8] sm:$0xf]
        %v360 = vld [vmem:[%s1 + $0xcc] sm:$0xf]
        %v361 = vld [vmem:[%s1 + $0xd0] sm:$0xf]
        %v362 = vld [vmem:[%s1 + $0xd4] sm:$0xf]
        %v363 = vld [vmem:[%s1 + $0xd8] sm:$0xf]
        %v364 = vld [vmem:[%s1 + $0xdc] sm:$0xf]
        %v365 = vld [vmem:[%s1 + $0xe0] sm:$0xf]
        %v366 = vld [vmem:[%s1 + $0xe4] sm:$0xf]
        %v367 = vld [vmem:[%s1 + $0xe8] sm:$0xf]
        %v368 = vld [vmem:[%s1 + $0xec] sm:$0xf]
        %v369 = vld [vmem:[%s1 + $0xf0] sm:$0xf]
        %v370 = vld [vmem:[%s1 + $0xf4] sm:$0xf]
        %v371 = vld [vmem:[%s1 + $0xf8] sm:$0xf]
        %v372 = vld [vmem:[%s1 + $0xfc] sm:$0xf]
        %v373 = vld [vmem:[%s1 + $0x100] sm:$0xf]
        %v374 = vld [vmem:[%s1 + $0x104] sm:$0xf]
        %v375 = vld [vmem:[%s1 + $0x108] sm:$0xf]
        %v376 = vld [vmem:[%s1 + $0x10c] sm:$0xf]
        %v377 = vld [vmem:[%s1 + $0x110] sm:$0xf]
        %v378 = vld [vmem:[%s1 + $0x114] sm:$0xf]
        %v379 = vld [vmem:[%s1 + $0x118] sm:$0xf]
        %v380 = vld [vmem:[%s1 + $0x11c] sm:$0xf]
        %v381 = vld [vmem:[%s1 + $0x120] sm:$0xf]
        %v382 = vld [vmem:[%s1 + $0x124] sm:$0xf]
        %v383 = vld [vmem:[%s1 + $0x128] sm:$0xf]
        %v384 = vld [vmem:[%s1 + $0x12c] sm:$0xf]
        %v385 = vld [vmem:[%s1 + $0x130] sm:$0xf]
        %v386 = vld [vmem:[%s1 + $0x134] sm:$0xf]
        %v387 = vld [vmem:[%s1 + $0x138] sm:$0xf]
        %v388 = vld [vmem:[%s1 + $0x13c] sm:$0xf]
        %v389 = vld [vmem:[%s1 + $0x140] sm:$0xf]
        %v390 = vld [vmem:[%s1 + $0x144] sm:$0xf]
        %v391 = vld [vmem:[%s1 + $0x148] sm:$0xf]
        %v392 = vld [vmem:[%s1 + $0x14c] sm:$0xf]
        %v393 = vld [vmem:[%s1 + $0x150] sm:$0xf]
        %v394 = vld [vmem:[%s1 + $0x154] sm:$0xf]
        %v395 = vld [vmem:[%s1 + $0x158] sm:$0xf]
        %v396 = vld [vmem:[%s1 + $0x15c] sm:$0xf]
        %v397 = vld [vmem:[%s1 + $0x160] sm:$0xf]
        %v398 = vld [vmem:[%s1 + $0x164] sm:$0xf]
        %v399 = vld [vmem:[%s1 + $0x168] sm:$0xf]
        %v400 = vld [vmem:[%s1 + $0x16c] sm:$0xf]
        %v401 = vld [vmem:[%s1 + $0x170] sm:$0xf]
        %v402 = vld [vmem:[%s1 + $0x174] sm:$0xf]
        %v403 = vld [vmem:[%s1 + $0x178] sm:$0xf]
        %v404 = vld [vmem:[%s1 + $0x17c] sm:$0xf]
        %v405 = vld [vmem:[%s1 + $0x180] sm:$0xf]
        %v406 = vld [vmem:[%s1 + $0x184] sm:$0xf]
        %v407 = vld [vmem:[%s1 + $0x188] sm:$0xf]
        %v408 = vld [vmem:[%s1 + $0x18c] sm:$0xf]
        %v409 = vld [vmem:[%s1 + $0x190] sm:$0xf]
        %v410 = vld [vmem:[%s1 + $0x194] sm:$0xf]
        %v411 = vld [vmem:[%s1 + $0x198] sm:$0xf]
        %v412 = vld [vmem:[%s1 + $0x19c] sm:$0xf]
        %v413 = vld [vmem:[%s1 + $0x1a0] sm:$0xf]
        %v414 = vld [vmem:[%s1 + $0x1a4] sm:$0xf]
        %v415 = vld [vmem:[%s1 + $0x1a8] sm:$0xf]
        %v416 = vld [vmem:[%s1 + $0x1ac] sm:$0xf]
        %v417 = vld [vmem:[%s1 + $0x1b0] sm:$0xf]
        %v418 = vld [vmem:[%s1 + $0x1b4] sm:$0xf]
        %v419 = vld [vmem:[%s1 + $0x1b8] sm:$0xf]
        %v420 = vld [vmem:[%s1 + $0x1bc] sm:$0xf]
        %v421 = vld [vmem:[%s1 + $0x1c0] sm:$0xf]
        %v422 = vld [vmem:[%s1 + $0x1c4] sm:$0xf]
        %v423 = vld [vmem:[%s1 + $0x1c8] sm:$0xf]
        %v424 = vld [vmem:[%s1 + $0x1cc] sm:$0xf]
        %v425 = vld [vmem:[%s1 + $0x1d0] sm:$0xf]
        %v426 = vld [vmem:[%s1 + $0x1d4] sm:$0xf]
        %v427 = vld [vmem:[%s1 + $0x1d8] sm:$0xf]
        %v428 = vld [vmem:[%s1 + $0x1dc] sm:$0xf]
        %v429 = vld [vmem:[%s1 + $0x1e0] sm:$0xf]
        %v430 = vld [vmem:[%s1 + $0x1e4] sm:$0xf]
        %v431 = vld [vmem:[%s1 + $0x1e8] sm:$0xf]
        %v432 = vld [vmem:[%s1 + $0x1ec] sm:$0xf]
        %v433 = vld [vmem:[%s1 + $0x1f0] sm:$0xf]
        %v434 = vld [vmem:[%s1 + $0x1f4] sm:$0xf]
        %v435 = vld [vmem:[%s1 + $0x1f8] sm:$0xf]
        %v436 = vld [vmem:[%s1 + $0x1fc] sm:$0xf]
        %v437 = vld [vmem:[%s1 + $0x200] sm:$0xf]
        %v438 = vld [vmem:[%s1 + $0x204] sm:$0xf]
        %v439 = vld [vmem:[%s1 + $0x208] sm:$0xf]
        %v440 = vld [vmem:[%s1 + $0x20c] sm:$0xf]
        %v441 = vld [vmem:[%s1 + $0x210] sm:$0xf]
        %v442 = vld [vmem:[%s1 + $0x214] sm:$0xf]
        %v443 = vld [vmem:[%s1 + $0x218] sm:$0xf]
        %v444 = vld [vmem:[%s1 + $0x21c] sm:$0xf]
        %v445 = vld [vmem:[%s1 + $0x220] sm:$0xf]
        %v446 = vld [vmem:[%s1 + $0x224] sm:$0xf]
        %v447 = vld [vmem:[%s1 + $0x228] sm:$0xf]
        %v448 = vld [vmem:[%s1 + $0x22c] sm:$0xf]
        %v449 = vld [vmem:[%s1 + $0x230] sm:$0xf]
        %v450 = vld [vmem:[%s1 + $0x234] sm:$0xf]
        %v451 = vld [vmem:[%s1 + $0x238] sm:$0xf]
        %v452 = vld [vmem:[%s1 + $0x23c] sm:$0xf]
        %v453 = vld [vmem:[%s1 + $0x240] sm:$0xf]
        %v454 = vld [vmem:[%s1 + $0x244] sm:$0xf]
        %v455 = vld [vmem:[%s1 + $0x248] sm:$0xf]
        %v456 = vld [vmem:[%s1 + $0x24c] sm:$0xf]
        %v457 = vld [vmem:[%s1 + $0x250] sm:$0xf]
        %v458 = vld [vmem:[%s1 + $0x254] sm:$0xf]
        %v459 = vld [vmem:[%s1 + $0x258] sm:$0xf]
        %v460 = vld [vmem:[%s1 + $0x25c] sm:$0xf]
        %v461 = vld [vmem:[%s1 + $0x260] sm:$0xf]
        %v462 = vld [vmem:[%s1 + $0x264] sm:$0xf]
        %v463 = vld [vmem:[%s1 + $0x268] sm:$0xf]
        %v464 = vld [vmem:[%s1 + $0x26c] sm:$0xf]
        %v465 = vld [vmem:[%s1 + $0x270] sm:$0xf]
        %v466 = vld [vmem:[%s1 + $0x274] sm:$0xf]
        %v467 = vld [vmem:[%s1 + $0x278] sm:$0xf]
        %v468 = vld [vmem:[%s1 + $0x27c] sm:$0xf]
        %v469 = vld [vmem:[%s1 + $0x280] sm:$0xf]
        %v470 = vld [vmem:[%s1 + $0x284] sm:$0xf]
        %v471 = vld [vmem:[%s1 + $0x288] sm:$0xf]
        %v472 = vld [vmem:[%s1 + $0x28c] sm:$0xf]
        %v473 = vld [vmem:[%s1 + $0x290] sm:$0xf]
        %v474 = vld [vmem:[%s1 + $0x294] sm:$0xf]
        %v475 = vld [vmem:[%s1 + $0x298] sm:$0xf]
        %v476 = vld [vmem:[%s1 + $0x29c] sm:$0xf]
        %v477 = vld [vmem:[%s1 + $0x2a0] sm:$0xf]
        %v478 = vld [vmem:[%s1 + $0x2a4] sm:$0xf]
        %v479 = vld [vmem:[%s1 + $0x2a8] sm:$0xf]
        %v480 = vld [vmem:[%s1 + $0x2ac] sm:$0xf]
        %v481 = vld [vmem:[%s1 + $0x2b0] sm:$0xf]
        %v482 = vld [vmem:[%s1 + $0x2b4] sm:$0xf]
        %v483 = vld [vmem:[%s1 + $0x2b8] sm:$0xf]
        %v484 = vld [vmem:[%s1 + $0x2bc] sm:$0xf]
        %v485 = vld [vmem:[%s1 + $0x2c0] sm:$0xf]
        %v486 = vld [vmem:[%s1 + $0x2c4] sm:$0xf]
        %v487 = vld [vmem:[%s1 + $0x2c8] sm:$0xf]
        %v488 = vld [vmem:[%s1 + $0x2cc] sm:$0xf]
        %v489 = vld [vmem:[%s1 + $0x2d0] sm:$0xf]
        %v490 = vld [vmem:[%s1 + $0x2d4] sm:$0xf]
        %v491 = vld [vmem:[%s1 + $0x2d8] sm:$0xf]
        %v492 = vld [vmem:[%s1 + $0x2dc] sm:$0xf]
        %v493 = vld [vmem:[%s1 + $0x2e0] sm:$0xf]
        %v494 = vld [vmem:[%s1 + $0x2e4] sm:$0xf]
        %v495 = vld [vmem:[%s1 + $0x2e8] sm:$0xf]
        %v496 = vld [vmem:[%s1 + $0x2ec] sm:$0xf]
        %v497 = vld [vmem:[%s1 + $0x2f0] sm:$0xf]
        %v498 = vld [vmem:[%s1 + $0x2f4] sm:$0xf]
        %v499 = vld [vmem:[%s1 + $0x2f8] sm:$0xf]
        %v500 = vld [vmem:[%s1 + $0x2fc] sm:$0xf]
        %v501 = vld [vmem:[%s1 + $0x300] sm:$0xf]
        %v502 = vld [vmem:[%s1 + $0x304] sm:$0xf]
        %v503 = vld [vmem:[%s1 + $0x308] sm:$0xf]
        %v504 = vld [vmem:[%s1 + $0x30c] sm:$0xf]
        %v505 = vld [vmem:[%s1 + $0x310] sm:$0xf]
        %v506 = vld [vmem:[%s1 + $0x314] sm:$0xf]
        %v507 = vld [vmem:[%s1 + $0x318] sm:$0xf]
        %v508 = vld [vmem:[%s1 + $0x31c] sm:$0xf]
        %v509 = vld [vmem:[%s1 + $0x320] sm:$0xf]
        %v510 = vld [vmem:[%s1 + $0x324] sm:$0xf]
        %v511 = vld [vmem:[%s1 + $0x328] sm:$0xf]
        %v512 = vld [vmem:[%s1 + $0x32c] sm:$0xf]
        %v513 = vld [vmem:[%s1 + $0x330] sm:$0xf]
        %v514 = vld [vmem:[%s1 + $0x334] sm:$0xf]
        %v515 = vld [vmem:[%s1 + $0x338] sm:$0xf]
        %v516 = vld [vmem:[%s1 + $0x33c] sm:$0xf]
        %v517 = vld [vmem:[%s1 + $0x340] sm:$0xf]
        %v518 = vld [vmem:[%s1 + $0x344] sm:$0xf]
        %v519 = vld [vmem:[%s1 + $0x348] sm:$0xf]
        %v520 = vld [vmem:[%s1 + $0x34c] sm:$0xf]
        %v521 = vld [vmem:[%s1 + $0x350] sm:$0xf]
        %v522 = vld [vmem:[%s1 + $0x354] sm:$0xf]
        %v523 = vld [vmem:[%s1 + $0x358] sm:$0xf]
        %v524 = vld [vmem:[%s1 + $0x35c] sm:$0xf]
        %v525 = vld [vmem:[%s1 + $0x360] sm:$0xf]
        %v526 = vld [vmem:[%s1 + $0x364] sm:$0xf]
        %v527 = vld [vmem:[%s1 + $0x368] sm:$0xf]
        %v528 = vld [vmem:[%s1 + $0x36c] sm:$0xf]
        %v529 = vld [vmem:[%s1 + $0x370] sm:$0xf]
        %v530 = vld [vmem:[%s1 + $0x374] sm:$0xf]
        %v531 = vld [vmem:[%s1 + $0x378] sm:$0xf]
        %v532 = vld [vmem:[%s1 + $0x37c] sm:$0xf]
        %v533 = vld [vmem:[%s1 + $0x380] sm:$0xf]
        %v534 = vld [vmem:[%s1 + $0x384] sm:$0xf]
        %v535 = vld [vmem:[%s1 + $0x388] sm:$0xf]
        %v536 = vld [vmem:[%s1 + $0x38c] sm:$0xf]
        %v537 = vld [vmem:[%s1 + $0x390] sm:$0xf]
        %v538 = vld [vmem:[%s1 + $0x394] sm:$0xf]
        %v539 = vld [vmem:[%s1 + $0x398] sm:$0xf]
        %v540 = vld [vmem:[%s1 + $0x39c] sm:$0xf]
        %v541 = vld [vmem:[%s1 + $0x3a0] sm:$0xf]
        %v542 = vld [vmem:[%s1 + $0x3a4] sm:$0xf]
        %v543 = vld [vmem:[%s1 + $0x3a8] sm:$0xf]
        %v544 = vld [vmem:[%s1 + $0x3ac] sm:$0xf]
        %v545 = vld [vmem:[%s1 + $0x3b0] sm:$0xf]
        %v546 = vld [vmem:[%s1 + $0x3b4] sm:$0xf]
        %v547 = vld [vmem:[%s1 + $0x3b8] sm:$0xf]
        %v548 = vld [vmem:[%s1 + $0x3bc] sm:$0xf]
        %v549 = vld [vmem:[%s1 + $0x3c0] sm:$0xf]
        %v550 = vld [vmem:[%s1 + $0x3c4] sm:$0xf]
        %v551 = vld [vmem:[%s1 + $0x3c8] sm:$0xf]
        %v552 = vld [vmem:[%s1 + $0x3cc] sm:$0xf]
        %v553 = vld [vmem:[%s1 + $0x3d0] sm:$0xf]
        %v554 = vld [vmem:[%s1 + $0x3d4] sm:$0xf]
        %v555 = vld [vmem:[%s1 + $0x3d8] sm:$0xf]
        %v556 = vld [vmem:[%s1 + $0x3dc] sm:$0xf]
        %v557 = vld [vmem:[%s1 + $0x3e0] sm:$0xf]
        %v558 = vld [vmem:[%s1 + $0x3e4] sm:$0xf]
        %v559 = vld [vmem:[%s1 + $0x3e8] sm:$0xf]
        %v560 = vld [vmem:[%s1 + $0x3ec] sm:$0xf]
        %v561 = vld [vmem:[%s1 + $0x3f0] sm:$0xf]
        %v562 = vld [vmem:[%s1 + $0x3f4] sm:$0xf]
        %v563 = vld [vmem:[%s1 + $0x3f8] sm:$0xf]
        %v564 = vld [vmem:[%s1 + $0x3fc] sm:$0xf]
        %v565 = vld [vmem:[%s2] sm:$0x1]
        %v567 = vlaneseq
        %v568 = vshrl.u32 %v567, 7
        %v569 = vsub.s32 0, %v568
        %v570 = vrot.slane %v565, %v569
        %v604 = vunpack.c.l.b16 %v277
        %v605 = vunpack.c.h.b16 %v277
        %v606 = vunpack.c.l.b16 %v278
        %v607 = vunpack.c.h.b16 %v278
        %v608 = vunpack.c.l.b16 %v279
        %v609 = vunpack.c.h.b16 %v279
        %v610 = vunpack.c.l.b16 %v280
        %v611 = vunpack.c.h.b16 %v280
        %v612 = vunpack.c.l.b16 %v281
        %v613 = vunpack.c.h.b16 %v281
        %v614 = vunpack.c.l.b16 %v282
        %v615 = vunpack.c.h.b16 %v282
        %v616 = vunpack.c.l.b16 %v283
        %v617 = vunpack.c.h.b16 %v283
        %v618 = vunpack.c.l.b16 %v284
        %v619 = vunpack.c.h.b16 %v284
        %v620 = vunpack.c.l.b16 %v285
        %v621 = vunpack.c.h.b16 %v285
        %v622 = vunpack.c.l.b16 %v286
        %v623 = vunpack.c.h.b16 %v286
        %v624 = vunpack.c.l.b16 %v287
        %v625 = vunpack.c.h.b16 %v287
        %v626 = vunpack.c.l.b16 %v288
        %v627 = vunpack.c.h.b16 %v288
        %v628 = vunpack.c.l.b16 %v289
        %v629 = vunpack.c.h.b16 %v289
        %v630 = vunpack.c.l.b16 %v290
        %v631 = vunpack.c.h.b16 %v290
        %v632 = vunpack.c.l.b16 %v291
        %v633 = vunpack.c.h.b16 %v291
        %v634 = vunpack.c.l.b16 %v292
        %v635 = vunpack.c.h.b16 %v292
        %v636 = vunpack.c.l.b16 %v293
        %v637 = vunpack.c.h.b16 %v293
        %v638 = vunpack.c.l.b16 %v294
        %v639 = vunpack.c.h.b16 %v294
        %v640 = vunpack.c.l.b16 %v295
        %v641 = vunpack.c.h.b16 %v295
        %v642 = vunpack.c.l.b16 %v296
        %v643 = vunpack.c.h.b16 %v296
        %v644 = vunpack.c.l.b16 %v297
        %v645 = vunpack.c.h.b16 %v297
        %v646 = vunpack.c.l.b16 %v298
        %v647 = vunpack.c.h.b16 %v298
        %v648 = vunpack.c.l.b16 %v299
        %v649 = vunpack.c.h.b16 %v299
        %v650 = vunpack.c.l.b16 %v300
        %v651 = vunpack.c.h.b16 %v300
        %v652 = vunpack.c.l.b16 %v301
        %v653 = vunpack.c.h.b16 %v301
        %v654 = vunpack.c.l.b16 %v302
        %v655 = vunpack.c.h.b16 %v302
        %v656 = vunpack.c.l.b16 %v303
        %v657 = vunpack.c.h.b16 %v303
        %v658 = vunpack.c.l.b16 %v304
        %v659 = vunpack.c.h.b16 %v304
        %v660 = vunpack.c.l.b16 %v305
        %v661 = vunpack.c.h.b16 %v305
        %v662 = vunpack.c.l.b16 %v306
        %v663 = vunpack.c.h.b16 %v306
        %v664 = vunpack.c.l.b16 %v307
        %v665 = vunpack.c.h.b16 %v307
        %v666 = vunpack.c.l.b16 %v308
        %v667 = vunpack.c.h.b16 %v308
        %v668 = vpack.c.b16 %v620, %v604
        %v669 = vpack.c.b16 %v621, %v605
        %v670 = vpack.c.b16 %v622, %v606
        %v671 = vpack.c.b16 %v623, %v607
        %v672 = vpack.c.b16 %v624, %v608
        %v673 = vpack.c.b16 %v625, %v609
        %v674 = vpack.c.b16 %v626, %v610
        %v675 = vpack.c.b16 %v627, %v611
        %v676 = vpack.c.b16 %v628, %v612
        %v677 = vpack.c.b16 %v629, %v613
        %v678 = vpack.c.b16 %v630, %v614
        %v679 = vpack.c.b16 %v631, %v615
        %v680 = vpack.c.b16 %v632, %v616
        %v681 = vpack.c.b16 %v633, %v617
        %v682 = vpack.c.b16 %v634, %v618
        %v683 = vpack.c.b16 %v635, %v619
        %v684 = vpack.c.b16 %v652, %v636
        %v685 = vpack.c.b16 %v653, %v637
        %v686 = vpack.c.b16 %v654, %v638
        %v687 = vpack.c.b16 %v655, %v639
        %v688 = vpack.c.b16 %v656, %v640
        %v689 = vpack.c.b16 %v657, %v641
        %v690 = vpack.c.b16 %v658, %v642
        %v691 = vpack.c.b16 %v659, %v643
        %v692 = vpack.c.b16 %v660, %v644
        %v693 = vpack.c.b16 %v661, %v645
        %v694 = vpack.c.b16 %v662, %v646
        %v695 = vpack.c.b16 %v663, %v647
        %v696 = vpack.c.b16 %v664, %v648
        %v697 = vpack.c.b16 %v665, %v649
        %v698 = vpack.c.b16 %v666, %v650
        %v699 = vpack.c.b16 %v667, %v651
        %v988 = vunpack.c.l.b16 %v309
        %v989 = vunpack.c.l.b16 %v310
        %v990 = vunpack.c.l.b16 %v311
        %v991 = vunpack.c.l.b16 %v312
        %v992 = vunpack.c.l.b16 %v313
        %v993 = vunpack.c.l.b16 %v314
        %v994 = vunpack.c.l.b16 %v315
        %v995 = vunpack.c.l.b16 %v316
        %v996 = vunpack.c.l.b16 %v317
        %v997 = vunpack.c.l.b16 %v318
        %v998 = vunpack.c.l.b16 %v319
        %v999 = vunpack.c.l.b16 %v320
        %v1000 = vunpack.c.l.b16 %v321
        %v1001 = vunpack.c.l.b16 %v322
        %v1002 = vunpack.c.l.b16 %v323
        %v1003 = vunpack.c.l.b16 %v324
        %v1004 = vunpack.c.l.b16 %v325
        %v1005 = vunpack.c.l.b16 %v326
        %v1006 = vunpack.c.l.b16 %v327
        %v1007 = vunpack.c.l.b16 %v328
        %v1008 = vunpack.c.l.b16 %v329
        %v1009 = vunpack.c.l.b16 %v330
        %v1010 = vunpack.c.l.b16 %v331
        %v1011 = vunpack.c.l.b16 %v332
        %v1012 = vunpack.c.l.b16 %v333
        %v1013 = vunpack.c.l.b16 %v334
        %v1014 = vunpack.c.l.b16 %v335
        %v1015 = vunpack.c.l.b16 %v336
        %v1016 = vunpack.c.l.b16 %v337
        %v1017 = vunpack.c.l.b16 %v338
        %v1018 = vunpack.c.l.b16 %v339
        %v1019 = vunpack.c.l.b16 %v340
        %v1020 = vunpack.c.l.b16 %v341
        %v1021 = vunpack.c.l.b16 %v342
        %v1022 = vunpack.c.l.b16 %v343
        %v1023 = vunpack.c.l.b16 %v344
        %v1024 = vunpack.c.l.b16 %v345
        %v1025 = vunpack.c.l.b16 %v346
        %v1026 = vunpack.c.l.b16 %v347
        %v1027 = vunpack.c.l.b16 %v348
        %v1028 = vunpack.c.l.b16 %v349
        %v1029 = vunpack.c.l.b16 %v350
        %v1030 = vunpack.c.l.b16 %v351
        %v1031 = vunpack.c.l.b16 %v352
        %v1032 = vunpack.c.l.b16 %v353
        %v1033 = vunpack.c.l.b16 %v354
        %v1034 = vunpack.c.l.b16 %v355
        %v1035 = vunpack.c.l.b16 %v356
        %v1036 = vunpack.c.l.b16 %v357
        %v1037 = vunpack.c.l.b16 %v358
        %v1038 = vunpack.c.l.b16 %v359
        %v1039 = vunpack.c.l.b16 %v360
        %v1040 = vunpack.c.l.b16 %v361
        %v1041 = vunpack.c.l.b16 %v362
        %v1042 = vunpack.c.l.b16 %v363
        %v1043 = vunpack.c.l.b16 %v364
        %v1044 = vunpack.c.l.b16 %v365
        %v1045 = vunpack.c.l.b16 %v366
        %v1046 = vunpack.c.l.b16 %v367
        %v1047 = vunpack.c.l.b16 %v368
        %v1048 = vunpack.c.l.b16 %v369
        %v1049 = vunpack.c.l.b16 %v370
        %v1050 = vunpack.c.l.b16 %v371
        %v1051 = vunpack.c.l.b16 %v372
        %v1052 = vunpack.c.l.b16 %v373
        %v1053 = vunpack.c.l.b16 %v374
        %v1054 = vunpack.c.l.b16 %v375
        %v1055 = vunpack.c.l.b16 %v376
        %v1056 = vunpack.c.l.b16 %v377
        %v1057 = vunpack.c.l.b16 %v378
        %v1058 = vunpack.c.l.b16 %v379
        %v1059 = vunpack.c.l.b16 %v380
        %v1060 = vunpack.c.l.b16 %v381
        %v1061 = vunpack.c.l.b16 %v382
        %v1062 = vunpack.c.l.b16 %v383
        %v1063 = vunpack.c.l.b16 %v384
        %v1064 = vunpack.c.l.b16 %v385
        %v1065 = vunpack.c.l.b16 %v386
        %v1066 = vunpack.c.l.b16 %v387
        %v1067 = vunpack.c.l.b16 %v388
        %v1068 = vunpack.c.l.b16 %v389
        %v1069 = vunpack.c.l.b16 %v390
        %v1070 = vunpack.c.l.b16 %v391
        %v1071 = vunpack.c.l.b16 %v392
        %v1072 = vunpack.c.l.b16 %v393
        %v1073 = vunpack.c.l.b16 %v394
        %v1074 = vunpack.c.l.b16 %v395
        %v1075 = vunpack.c.l.b16 %v396
        %v1076 = vunpack.c.l.b16 %v397
        %v1077 = vunpack.c.l.b16 %v398
        %v1078 = vunpack.c.l.b16 %v399
        %v1079 = vunpack.c.l.b16 %v400
        %v1080 = vunpack.c.l.b16 %v401
        %v1081 = vunpack.c.l.b16 %v402
        %v1082 = vunpack.c.l.b16 %v403
        %v1083 = vunpack.c.l.b16 %v404
        %v1084 = vunpack.c.l.b16 %v405
        %v1085 = vunpack.c.l.b16 %v406
        %v1086 = vunpack.c.l.b16 %v407
        %v1087 = vunpack.c.l.b16 %v408
        %v1088 = vunpack.c.l.b16 %v409
        %v1089 = vunpack.c.l.b16 %v410
        %v1090 = vunpack.c.l.b16 %v411
        %v1091 = vunpack.c.l.b16 %v412
        %v1092 = vunpack.c.l.b16 %v413
        %v1093 = vunpack.c.l.b16 %v414
        %v1094 = vunpack.c.l.b16 %v415
        %v1095 = vunpack.c.l.b16 %v416
        %v1096 = vunpack.c.l.b16 %v417
        %v1097 = vunpack.c.l.b16 %v418
        %v1098 = vunpack.c.l.b16 %v419
        %v1099 = vunpack.c.l.b16 %v420
        %v1100 = vunpack.c.l.b16 %v421
        %v1101 = vunpack.c.l.b16 %v422
        %v1102 = vunpack.c.l.b16 %v423
        %v1103 = vunpack.c.l.b16 %v424
        %v1104 = vunpack.c.l.b16 %v425
        %v1105 = vunpack.c.l.b16 %v426
        %v1106 = vunpack.c.l.b16 %v427
        %v1107 = vunpack.c.l.b16 %v428
        %v1108 = vunpack.c.l.b16 %v429
        %v1109 = vunpack.c.l.b16 %v430
        %v1110 = vunpack.c.l.b16 %v431
        %v1111 = vunpack.c.l.b16 %v432
        %v1112 = vunpack.c.l.b16 %v433
        %v1113 = vunpack.c.l.b16 %v434
        %v1114 = vunpack.c.l.b16 %v435
        %v1115 = vunpack.c.l.b16 %v436
        %v1116 = vunpack.c.l.b16 %v437
        %v1117 = vunpack.c.l.b16 %v438
        %v1118 = vunpack.c.l.b16 %v439
        %v1119 = vunpack.c.l.b16 %v440
        %v1120 = vunpack.c.l.b16 %v441
        %v1121 = vunpack.c.l.b16 %v442
        %v1122 = vunpack.c.l.b16 %v443
        %v1123 = vunpack.c.l.b16 %v444
        %v1124 = vunpack.c.l.b16 %v445
        %v1125 = vunpack.c.l.b16 %v446
        %v1126 = vunpack.c.l.b16 %v447
        %v1127 = vunpack.c.l.b16 %v448
        %v1128 = vunpack.c.l.b16 %v449
        %v1129 = vunpack.c.l.b16 %v450
        %v1130 = vunpack.c.l.b16 %v451
        %v1131 = vunpack.c.l.b16 %v452
        %v1132 = vunpack.c.l.b16 %v453
        %v1133 = vunpack.c.l.b16 %v454
        %v1134 = vunpack.c.l.b16 %v455
        %v1135 = vunpack.c.l.b16 %v456
        %v1136 = vunpack.c.l.b16 %v457
        %v1137 = vunpack.c.l.b16 %v458
        %v1138 = vunpack.c.l.b16 %v459
        %v1139 = vunpack.c.l.b16 %v460
        %v1140 = vunpack.c.l.b16 %v461
        %v1141 = vunpack.c.l.b16 %v462
        %v1142 = vunpack.c.l.b16 %v463
        %v1143 = vunpack.c.l.b16 %v464
        %v1144 = vunpack.c.l.b16 %v465
        %v1145 = vunpack.c.l.b16 %v466
        %v1146 = vunpack.c.l.b16 %v467
        %v1147 = vunpack.c.l.b16 %v468
        %v1148 = vunpack.c.l.b16 %v469
        %v1149 = vunpack.c.l.b16 %v470
        %v1150 = vunpack.c.l.b16 %v471
        %v1151 = vunpack.c.l.b16 %v472
        %v1152 = vunpack.c.l.b16 %v473
        %v1153 = vunpack.c.l.b16 %v474
        %v1154 = vunpack.c.l.b16 %v475
        %v1155 = vunpack.c.l.b16 %v476
        %v1156 = vunpack.c.l.b16 %v477
        %v1157 = vunpack.c.l.b16 %v478
        %v1158 = vunpack.c.l.b16 %v479
        %v1159 = vunpack.c.l.b16 %v480
        %v1160 = vunpack.c.l.b16 %v481
        %v1161 = vunpack.c.l.b16 %v482
        %v1162 = vunpack.c.l.b16 %v483
        %v1163 = vunpack.c.l.b16 %v484
        %v1164 = vunpack.c.l.b16 %v485
        %v1165 = vunpack.c.l.b16 %v486
        %v1166 = vunpack.c.l.b16 %v487
        %v1167 = vunpack.c.l.b16 %v488
        %v1168 = vunpack.c.l.b16 %v489
        %v1169 = vunpack.c.l.b16 %v490
        %v1170 = vunpack.c.l.b16 %v491
        %v1171 = vunpack.c.l.b16 %v492
        %v1172 = vunpack.c.l.b16 %v493
        %v1173 = vunpack.c.l.b16 %v494
        %v1174 = vunpack.c.l.b16 %v495
        %v1175 = vunpack.c.l.b16 %v496
        %v1176 = vunpack.c.l.b16 %v497
        %v1177 = vunpack.c.l.b16 %v498
        %v1178 = vunpack.c.l.b16 %v499
        %v1179 = vunpack.c.l.b16 %v500
        %v1180 = vunpack.c.l.b16 %v501
        %v1181 = vunpack.c.l.b16 %v502
        %v1182 = vunpack.c.l.b16 %v503
        %v1183 = vunpack.c.l.b16 %v504
        %v1184 = vunpack.c.l.b16 %v505
        %v1185 = vunpack.c.l.b16 %v506
        %v1186 = vunpack.c.l.b16 %v507
        %v1187 = vunpack.c.l.b16 %v508
        %v1188 = vunpack.c.l.b16 %v509
        %v1189 = vunpack.c.l.b16 %v510
        %v1190 = vunpack.c.l.b16 %v511
        %v1191 = vunpack.c.l.b16 %v512
        %v1192 = vunpack.c.l.b16 %v513
        %v1193 = vunpack.c.l.b16 %v514
        %v1194 = vunpack.c.l.b16 %v515
        %v1195 = vunpack.c.l.b16 %v516
        %v1196 = vunpack.c.l.b16 %v517
        %v1197 = vunpack.c.l.b16 %v518
        %v1198 = vunpack.c.l.b16 %v519
        %v1199 = vunpack.c.l.b16 %v520
        %v1200 = vunpack.c.l.b16 %v521
        %v1201 = vunpack.c.l.b16 %v522
        %v1202 = vunpack.c.l.b16 %v523
        %v1203 = vunpack.c.l.b16 %v524
        %v1204 = vunpack.c.l.b16 %v525
        %v1205 = vunpack.c.l.b16 %v526
        %v1206 = vunpack.c.l.b16 %v527
        %v1207 = vunpack.c.l.b16 %v528
        %v1208 = vunpack.c.l.b16 %v529
        %v1209 = vunpack.c.l.b16 %v530
        %v1210 = vunpack.c.l.b16 %v531
        %v1211 = vunpack.c.l.b16 %v532
        %v1212 = vunpack.c.l.b16 %v533
        %v1213 = vunpack.c.l.b16 %v534
        %v1214 = vunpack.c.l.b16 %v535
        %v1215 = vunpack.c.l.b16 %v536
        %v1216 = vunpack.c.l.b16 %v537
        %v1217 = vunpack.c.l.b16 %v538
        %v1218 = vunpack.c.l.b16 %v539
        %v1219 = vunpack.c.l.b16 %v540
        %v1220 = vunpack.c.l.b16 %v541
        %v1221 = vunpack.c.l.b16 %v542
        %v1222 = vunpack.c.l.b16 %v543
        %v1223 = vunpack.c.l.b16 %v544
        %v1224 = vunpack.c.l.b16 %v545
        %v1225 = vunpack.c.l.b16 %v546
        %v1226 = vunpack.c.l.b16 %v547
        %v1227 = vunpack.c.l.b16 %v548
        %v1228 = vunpack.c.l.b16 %v549
        %v1229 = vunpack.c.l.b16 %v550
        %v1230 = vunpack.c.l.b16 %v551
        %v1231 = vunpack.c.l.b16 %v552
        %v1232 = vunpack.c.l.b16 %v553
        %v1233 = vunpack.c.l.b16 %v554
        %v1234 = vunpack.c.l.b16 %v555
        %v1235 = vunpack.c.l.b16 %v556
        %v1236 = vunpack.c.l.b16 %v557
        %v1237 = vunpack.c.l.b16 %v558
        %v1238 = vunpack.c.l.b16 %v559
        %v1239 = vunpack.c.l.b16 %v560
        %v1240 = vunpack.c.l.b16 %v561
        %v1241 = vunpack.c.l.b16 %v562
        %v1242 = vunpack.c.l.b16 %v563
        %v1243 = vunpack.c.l.b16 %v564
        %v1244 = vpack.c.b16 %v989, %v988
        %v1245 = vpack.c.b16 %v991, %v990
        %v1246 = vpack.c.b16 %v993, %v992
        %v1247 = vpack.c.b16 %v995, %v994
        %v1248 = vpack.c.b16 %v997, %v996
        %v1249 = vpack.c.b16 %v999, %v998
        %v1250 = vpack.c.b16 %v1001, %v1000
        %v1251 = vpack.c.b16 %v1003, %v1002
        %v1252 = vpack.c.b16 %v1005, %v1004
        %v1253 = vpack.c.b16 %v1007, %v1006
        %v1254 = vpack.c.b16 %v1009, %v1008
        %v1255 = vpack.c.b16 %v1011, %v1010
        %v1256 = vpack.c.b16 %v1013, %v1012
        %v1257 = vpack.c.b16 %v1015, %v1014
        %v1258 = vpack.c.b16 %v1017, %v1016
        %v1259 = vpack.c.b16 %v1019, %v1018
        %v1260 = vpack.c.b16 %v1021, %v1020
        %v1261 = vpack.c.b16 %v1023, %v1022
        %v1262 = vpack.c.b16 %v1025, %v1024
        %v1263 = vpack.c.b16 %v1027, %v1026
        %v1264 = vpack.c.b16 %v1029, %v1028
        %v1265 = vpack.c.b16 %v1031, %v1030
        %v1266 = vpack.c.b16 %v1033, %v1032
        %v1267 = vpack.c.b16 %v1035, %v1034
        %v1268 = vpack.c.b16 %v1037, %v1036
        %v1269 = vpack.c.b16 %v1039, %v1038
        %v1270 = vpack.c.b16 %v1041, %v1040
        %v1271 = vpack.c.b16 %v1043, %v1042
        %v1272 = vpack.c.b16 %v1045, %v1044
        %v1273 = vpack.c.b16 %v1047, %v1046
        %v1274 = vpack.c.b16 %v1049, %v1048
        %v1275 = vpack.c.b16 %v1051, %v1050
        %v1276 = vpack.c.b16 %v1053, %v1052
        %v1277 = vpack.c.b16 %v1055, %v1054
        %v1278 = vpack.c.b16 %v1057, %v1056
        %v1279 = vpack.c.b16 %v1059, %v1058
        %v1280 = vpack.c.b16 %v1061, %v1060
        %v1281 = vpack.c.b16 %v1063, %v1062
        %v1282 = vpack.c.b16 %v1065, %v1064
        %v1283 = vpack.c.b16 %v1067, %v1066
        %v1284 = vpack.c.b16 %v1069, %v1068
        %v1285 = vpack.c.b16 %v1071, %v1070
        %v1286 = vpack.c.b16 %v1073, %v1072
        %v1287 = vpack.c.b16 %v1075, %v1074
        %v1288 = vpack.c.b16 %v1077, %v1076
        %v1289 = vpack.c.b16 %v1079, %v1078
        %v1290 = vpack.c.b16 %v1081, %v1080
        %v1291 = vpack.c.b16 %v1083, %v1082
        %v1292 = vpack.c.b16 %v1085, %v1084
        %v1293 = vpack.c.b16 %v1087, %v1086
        %v1294 = vpack.c.b16 %v1089, %v1088
        %v1295 = vpack.c.b16 %v1091, %v1090
        %v1296 = vpack.c.b16 %v1093, %v1092
        %v1297 = vpack.c.b16 %v1095, %v1094
        %v1298 = vpack.c.b16 %v1097, %v1096
        %v1299 = vpack.c.b16 %v1099, %v1098
        %v1300 = vpack.c.b16 %v1101, %v1100
        %v1301 = vpack.c.b16 %v1103, %v1102
        %v1302 = vpack.c.b16 %v1105, %v1104
        %v1303 = vpack.c.b16 %v1107, %v1106
        %v1304 = vpack.c.b16 %v1109, %v1108
        %v1305 = vpack.c.b16 %v1111, %v1110
        %v1306 = vpack.c.b16 %v1113, %v1112
        %v1307 = vpack.c.b16 %v1115, %v1114
        %v1308 = vpack.c.b16 %v1117, %v1116
        %v1309 = vpack.c.b16 %v1119, %v1118
        %v1310 = vpack.c.b16 %v1121, %v1120
        %v1311 = vpack.c.b16 %v1123, %v1122
        %v1312 = vpack.c.b16 %v1125, %v1124
        %v1313 = vpack.c.b16 %v1127, %v1126
        %v1314 = vpack.c.b16 %v1129, %v1128
        %v1315 = vpack.c.b16 %v1131, %v1130
        %v1316 = vpack.c.b16 %v1133, %v1132
        %v1317 = vpack.c.b16 %v1135, %v1134
        %v1318 = vpack.c.b16 %v1137, %v1136
        %v1319 = vpack.c.b16 %v1139, %v1138
        %v1320 = vpack.c.b16 %v1141, %v1140
        %v1321 = vpack.c.b16 %v1143, %v1142
        %v1322 = vpack.c.b16 %v1145, %v1144
        %v1323 = vpack.c.b16 %v1147, %v1146
        %v1324 = vpack.c.b16 %v1149, %v1148
        %v1325 = vpack.c.b16 %v1151, %v1150
        %v1326 = vpack.c.b16 %v1153, %v1152
        %v1327 = vpack.c.b16 %v1155, %v1154
        %v1328 = vpack.c.b16 %v1157, %v1156
        %v1329 = vpack.c.b16 %v1159, %v1158
        %v1330 = vpack.c.b16 %v1161, %v1160
        %v1331 = vpack.c.b16 %v1163, %v1162
        %v1332 = vpack.c.b16 %v1165, %v1164
        %v1333 = vpack.c.b16 %v1167, %v1166
        %v1334 = vpack.c.b16 %v1169, %v1168
        %v1335 = vpack.c.b16 %v1171, %v1170
        %v1336 = vpack.c.b16 %v1173, %v1172
        %v1337 = vpack.c.b16 %v1175, %v1174
        %v1338 = vpack.c.b16 %v1177, %v1176
        %v1339 = vpack.c.b16 %v1179, %v1178
        %v1340 = vpack.c.b16 %v1181, %v1180
        %v1341 = vpack.c.b16 %v1183, %v1182
        %v1342 = vpack.c.b16 %v1185, %v1184
        %v1343 = vpack.c.b16 %v1187, %v1186
        %v1344 = vpack.c.b16 %v1189, %v1188
        %v1345 = vpack.c.b16 %v1191, %v1190
        %v1346 = vpack.c.b16 %v1193, %v1192
        %v1347 = vpack.c.b16 %v1195, %v1194
        %v1348 = vpack.c.b16 %v1197, %v1196
        %v1349 = vpack.c.b16 %v1199, %v1198
        %v1350 = vpack.c.b16 %v1201, %v1200
        %v1351 = vpack.c.b16 %v1203, %v1202
        %v1352 = vpack.c.b16 %v1205, %v1204
        %v1353 = vpack.c.b16 %v1207, %v1206
        %v1354 = vpack.c.b16 %v1209, %v1208
        %v1355 = vpack.c.b16 %v1211, %v1210
        %v1356 = vpack.c.b16 %v1213, %v1212
        %v1357 = vpack.c.b16 %v1215, %v1214
        %v1358 = vpack.c.b16 %v1217, %v1216
        %v1359 = vpack.c.b16 %v1219, %v1218
        %v1360 = vpack.c.b16 %v1221, %v1220
        %v1361 = vpack.c.b16 %v1223, %v1222
        %v1362 = vpack.c.b16 %v1225, %v1224
        %v1363 = vpack.c.b16 %v1227, %v1226
        %v1364 = vpack.c.b16 %v1229, %v1228
        %v1365 = vpack.c.b16 %v1231, %v1230
        %v1366 = vpack.c.b16 %v1233, %v1232
        %v1367 = vpack.c.b16 %v1235, %v1234
        %v1368 = vpack.c.b16 %v1237, %v1236
        %v1369 = vpack.c.b16 %v1239, %v1238
        %v1370 = vpack.c.b16 %v1241, %v1240
        %v1371 = vpack.c.b16 %v1243, %v1242
        %1500 = vmatprep.subr.bf16.mxu0 0
        %1501 = vmatpush1.bf16.msra.mxu0 %v1244
        %1502 = vmatprep.subr.bf16.mxu0 0
        %1503 = vmatpush1.bf16.msra.mxu0 %v1245
        %1504 = vmatprep.subr.bf16.mxu0 0
        %1505 = vmatpush1.bf16.msra.mxu0 %v1246
        %1506 = vmatprep.subr.bf16.mxu0 0
        %1507 = vmatpush1.bf16.msra.mxu0 %v1247
        %1508 = vmatprep.subr.bf16.mxu0 0
        %1509 = vmatpush1.bf16.msra.mxu0 %v1248
        %1510 = vmatprep.subr.bf16.mxu0 0
        %1511 = vmatpush1.bf16.msra.mxu0 %v1249
        %1512 = vmatprep.subr.bf16.mxu0 0
        %1513 = vmatpush1.bf16.msra.mxu0 %v1250
        %1514 = vmatprep.subr.bf16.mxu0 0
        %1515 = vmatpush1.bf16.msra.mxu0 %v1251
        %1516 = vmatprep.subr.bf16.mxu0 0
        %1517 = vmatpush1.bf16.msra.mxu0 %v1252
        %1518 = vmatprep.subr.bf16.mxu0 0
        %1519 = vmatpush1.bf16.msra.mxu0 %v1253
        %1520 = vmatprep.subr.bf16.mxu0 0
        %1521 = vmatpush1.bf16.msra.mxu0 %v1254
        %1522 = vmatprep.subr.bf16.mxu0 0
        %1523 = vmatpush1.bf16.msra.mxu0 %v1255
        %1524 = vmatprep.subr.bf16.mxu0 0
        %1525 = vmatpush1.bf16.msra.mxu0 %v1256
        %1526 = vmatprep.subr.bf16.mxu0 0
        %1527 = vmatpush1.bf16.msra.mxu0 %v1257
        %1528 = vmatprep.subr.bf16.mxu0 0
        %1529 = vmatpush1.bf16.msra.mxu0 %v1258
        %1530 = vmatprep.subr.bf16.mxu0 0
        %1531 = vmatpush1.bf16.msra.mxu0 %v1259
        %1532 = vmatprep.mubr.bf16.mxu0 %v669
        %1533 = vmatmul.mubr.bf16.gmra.mrb[0].mxu0 %v668
        %v1534 = vpop.f32.mrb[0].mxu0
        %v1535 = vadd.f32 %v570, %v1534
        %v1536 = vpop.f32.mrb[0].mxu0
        %v1537 = vpop.f32.mrb[0].mxu0
        %v1538 = vadd.f32 %v570, %v1537
        %v1539 = vpop.f32.mrb[0].mxu0
        %1540 = vmatprep.mubr.bf16.mxu0 %v685
        %1541 = vmatmul.mubr.bf16.gmra.mrb[0].mxu0 %v684
        %v1542 = vpop.f32.mrb[0].mxu0
        %v1543 = vadd.f32 %v570, %v1542
        %v1544 = vpop.f32.mrb[0].mxu0
        %v1545 = vpop.f32.mrb[0].mxu0
        %v1546 = vadd.f32 %v570, %v1545
        %v1547 = vpop.f32.mrb[0].mxu0
        %1548 = vdwg.mxu0
        %1549 = vmatprep.subr.bf16.mxu0 0
        %1550 = vmatpush1.bf16.msra.mxu0 %v1260
        %1551 = vmatprep.subr.bf16.mxu0 0
        %1552 = vmatpush1.bf16.msra.mxu0 %v1261
        %1553 = vmatprep.subr.bf16.mxu0 0
        %1554 = vmatpush1.bf16.msra.mxu0 %v1262
        %1555 = vmatprep.subr.bf16.mxu0 0
        %1556 = vmatpush1.bf16.msra.mxu0 %v1263
        %1557 = vmatprep.subr.bf16.mxu0 0
        %1558 = vmatpush1.bf16.msra.mxu0 %v1264
        %1559 = vmatprep.subr.bf16.mxu0 0
        %1560 = vmatpush1.bf16.msra.mxu0 %v1265
        %1561 = vmatprep.subr.bf16.mxu0 0
        %1562 = vmatpush1.bf16.msra.mxu0 %v1266
        %1563 = vmatprep.subr.bf16.mxu0 0
        %1564 = vmatpush1.bf16.msra.mxu0 %v1267
        %1565 = vmatprep.subr.bf16.mxu0 0
        %1566 = vmatpush1.bf16.msra.mxu0 %v1268
        %1567 = vmatprep.subr.bf16.mxu0 0
        %1568 = vmatpush1.bf16.msra.mxu0 %v1269
        %1569 = vmatprep.subr.bf16.mxu0 0
        %1570 = vmatpush1.bf16.msra.mxu0 %v1270
        %1571 = vmatprep.subr.bf16.mxu0 0
        %1572 = vmatpush1.bf16.msra.mxu0 %v1271
        %1573 = vmatprep.subr.bf16.mxu0 0
        %1574 = vmatpush1.bf16.msra.mxu0 %v1272
        %1575 = vmatprep.subr.bf16.mxu0 0
        %1576 = vmatpush1.bf16.msra.mxu0 %v1273
        %1577 = vmatprep.subr.bf16.mxu0 0
        %1578 = vmatpush1.bf16.msra.mxu0 %v1274
        %1579 = vmatprep.subr.bf16.mxu0 0
        %1580 = vmatpush1.bf16.msra.mxu0 %v1275
        %1581 = vmatprep.mubr.bf16.mxu0 %v671
        %1582 = vmatmul.mubr.bf16.gmra.mrb[0].mxu0 %v670
        %v1583 = vpop.f32.mrb[0].mxu0
        %v1584 = vadd.f32 %v1535, %v1583
        %v1585 = vpop.f32.mrb[0].mxu0
        %v1586 = vpop.f32.mrb[0].mxu0
        %v1587 = vadd.f32 %v1538, %v1586
        %v1588 = vpop.f32.mrb[0].mxu0
        %1589 = vmatprep.mubr.bf16.mxu0 %v687
        %1590 = vmatmul.mubr.bf16.gmra.mrb[0].mxu0 %v686
        %v1591 = vpop.f32.mrb[0].mxu0
        %v1592 = vadd.f32 %v1543, %v1591
        %v1593 = vpop.f32.mrb[0].mxu0
        %v1594 = vpop.f32.mrb[0].mxu0
        %v1595 = vadd.f32 %v1546, %v1594
        %v1596 = vpop.f32.mrb[0].mxu0
        %1597 = vdwg.mxu0
        %1598 = vmatprep.subr.bf16.mxu0 0
        %1599 = vmatpush1.bf16.msra.mxu0 %v1276
        %1600 = vmatprep.subr.bf16.mxu0 0
        %1601 = vmatpush1.bf16.msra.mxu0 %v1277
        %1602 = vmatprep.subr.bf16.mxu0 0
        %1603 = vmatpush1.bf16.msra.mxu0 %v1278
        %1604 = vmatprep.subr.bf16.mxu0 0
        %1605 = vmatpush1.bf16.msra.mxu0 %v1279
        %1606 = vmatprep.subr.bf16.mxu0 0
        %1607 = vmatpush1.bf16.msra.mxu0 %v1280
        %1608 = vmatprep.subr.bf16.mxu0 0
        %1609 = vmatpush1.bf16.msra.mxu0 %v1281
        %1610 = vmatprep.subr.bf16.mxu0 0
        %1611 = vmatpush1.bf16.msra.mxu0 %v1282
        %1612 = vmatprep.subr.bf16.mxu0 0
        %1613 = vmatpush1.bf16.msra.mxu0 %v1283
        %1614 = vmatprep.subr.bf16.mxu0 0
        %1615 = vmatpush1.bf16.msra.mxu0 %v1284
        %1616 = vmatprep.subr.bf16.mxu0 0
        %1617 = vmatpush1.bf16.msra.mxu0 %v1285
        %1618 = vmatprep.subr.bf16.mxu0 0
        %1619 = vmatpush1.bf16.msra.mxu0 %v1286
        %1620 = vmatprep.subr.bf16.mxu0 0
        %1621 = vmatpush1.bf16.msra.mxu0 %v1287
        %1622 = vmatprep.subr.bf16.mxu0 0
        %1623 = vmatpush1.bf16.msra.mxu0 %v1288
        %1624 = vmatprep.subr.bf16.mxu0 0
        %1625 = vmatpush1.bf16.msra.mxu0 %v1289
        %1626 = vmatprep.subr.bf16.mxu0 0
        %1627 = vmatpush1.bf16.msra.mxu0 %v1290
        %1628 = vmatprep.subr.bf16.mxu0 0
        %1629 = vmatpush1.bf16.msra.mxu0 %v1291
        %1630 = vmatprep.mubr.bf16.mxu0 %v673
        %1631 = vmatmul.mubr.bf16.gmra.mrb[0].mxu0 %v672
        %v1632 = vpop.f32.mrb[0].mxu0
        %v1633 = vadd.f32 %v1584, %v1632
        %v1634 = vpop.f32.mrb[0].mxu0
        %v1635 = vpop.f32.mrb[0].mxu0
        %v1636 = vadd.f32 %v1587, %v1635
        %v1637 = vpop.f32.mrb[0].mxu0
        %1638 = vmatprep.mubr.bf16.mxu0 %v689
        %1639 = vmatmul.mubr.bf16.gmra.mrb[0].mxu0 %v688
        %v1640 = vpop.f32.mrb[0].mxu0
        %v1641 = vadd.f32 %v1592, %v1640
        %v1642 = vpop.f32.mrb[0].mxu0
        %v1643 = vpop.f32.mrb[0].mxu0
        %v1644 = vadd.f32 %v1595, %v1643
        %v1645 = vpop.f32.mrb[0].mxu0
        %1646 = vdwg.mxu0
        %1647 = vmatprep.subr.bf16.mxu0 0
        %1648 = vmatpush1.bf16.msra.mxu0 %v1292
        %1649 = vmatprep.subr.bf16.mxu0 0
        %1650 = vmatpush1.bf16.msra.mxu0 %v1293
        %1651 = vmatprep.subr.bf16.mxu0 0
        %1652 = vmatpush1.bf16.msra.mxu0 %v1294
        %1653 = vmatprep.subr.bf16.mxu0 0
        %1654 = vmatpush1.bf16.msra.mxu0 %v1295
        %1655 = vmatprep.subr.bf16.mxu0 0
        %1656 = vmatpush1.bf16.msra.mxu0 %v1296
        %1657 = vmatprep.subr.bf16.mxu0 0
        %1658 = vmatpush1.bf16.msra.mxu0 %v1297
        %1659 = vmatprep.subr.bf16.mxu0 0
        %1660 = vmatpush1.bf16.msra.mxu0 %v1298
        %1661 = vmatprep.subr.bf16.mxu0 0
        %1662 = vmatpush1.bf16.msra.mxu0 %v1299
        %1663 = vmatprep.subr.bf16.mxu0 0
        %1664 = vmatpush1.bf16.msra.mxu0 %v1300
        %1665 = vmatprep.subr.bf16.mxu0 0
        %1666 = vmatpush1.bf16.msra.mxu0 %v1301
        %1667 = vmatprep.subr.bf16.mxu0 0
        %1668 = vmatpush1.bf16.msra.mxu0 %v1302
        %1669 = vmatprep.subr.bf16.mxu0 0
        %1670 = vmatpush1.bf16.msra.mxu0 %v1303
        %1671 = vmatprep.subr.bf16.mxu0 0
        %1672 = vmatpush1.bf16.msra.mxu0 %v1304
        %1673 = vmatprep.subr.bf16.mxu0 0
        %1674 = vmatpush1.bf16.msra.mxu0 %v1305
        %1675 = vmatprep.subr.bf16.mxu0 0
        %1676 = vmatpush1.bf16.msra.mxu0 %v1306
        %1677 = vmatprep.subr.bf16.mxu0 0
        %1678 = vmatpush1.bf16.msra.mxu0 %v1307
        %1679 = vmatprep.mubr.bf16.mxu0 %v675
        %1680 = vmatmul.mubr.bf16.gmra.mrb[0].mxu0 %v674
        %v1681 = vpop.f32.mrb[0].mxu0
        %v1682 = vadd.f32 %v1633, %v1681
        %v1683 = vpop.f32.mrb[0].mxu0
        %v1684 = vpop.f32.mrb[0].mxu0
        %v1685 = vadd.f32 %v1636, %v1684
        %v1686 = vpop.f32.mrb[0].mxu0
        %1687 = vmatprep.mubr.bf16.mxu0 %v691
        %1688 = vmatmul.mubr.bf16.gmra.mrb[0].mxu0 %v690
        %v1689 = vpop.f32.mrb[0].mxu0
        %v1690 = vadd.f32 %v1641, %v1689
        %v1691 = vpop.f32.mrb[0].mxu0
        %v1692 = vpop.f32.mrb[0].mxu0
        %v1693 = vadd.f32 %v1644, %v1692
        %v1694 = vpop.f32.mrb[0].mxu0
        %1695 = vdwg.mxu0
        %1696 = vmatprep.subr.bf16.mxu0 0
        %1697 = vmatpush1.bf16.msra.mxu0 %v1308
        %1698 = vmatprep.subr.bf16.mxu0 0
        %1699 = vmatpush1.bf16.msra.mxu0 %v1309
        %1700 = vmatprep.subr.bf16.mxu0 0
        %1701 = vmatpush1.bf16.msra.mxu0 %v1310
        %1702 = vmatprep.subr.bf16.mxu0 0
        %1703 = vmatpush1.bf16.msra.mxu0 %v1311
        %1704 = vmatprep.subr.bf16.mxu0 0
        %1705 = vmatpush1.bf16.msra.mxu0 %v1312
        %1706 = vmatprep.subr.bf16.mxu0 0
        %1707 = vmatpush1.bf16.msra.mxu0 %v1313
        %1708 = vmatprep.subr.bf16.mxu0 0
        %1709 = vmatpush1.bf16.msra.mxu0 %v1314
        %1710 = vmatprep.subr.bf16.mxu0 0
        %1711 = vmatpush1.bf16.msra.mxu0 %v1315
        %1712 = vmatprep.subr.bf16.mxu0 0
        %1713 = vmatpush1.bf16.msra.mxu0 %v1316
        %1714 = vmatprep.subr.bf16.mxu0 0
        %1715 = vmatpush1.bf16.msra.mxu0 %v1317
        %1716 = vmatprep.subr.bf16.mxu0 0
        %1717 = vmatpush1.bf16.msra.mxu0 %v1318
        %1718 = vmatprep.subr.bf16.mxu0 0
        %1719 = vmatpush1.bf16.msra.mxu0 %v1319
        %1720 = vmatprep.subr.bf16.mxu0 0
        %1721 = vmatpush1.bf16.msra.mxu0 %v1320
        %1722 = vmatprep.subr.bf16.mxu0 0
        %1723 = vmatpush1.bf16.msra.mxu0 %v1321
        %1724 = vmatprep.subr.bf16.mxu0 0
        %1725 = vmatpush1.bf16.msra.mxu0 %v1322
        %1726 = vmatprep.subr.bf16.mxu0 0
        %1727 = vmatpush1.bf16.msra.mxu0 %v1323
        %1728 = vmatprep.mubr.bf16.mxu0 %v677
        %1729 = vmatmul.mubr.bf16.gmra.mrb[0].mxu0 %v676
        %v1730 = vpop.f32.mrb[0].mxu0
        %v1731 = vadd.f32 %v1682, %v1730
        %v1732 = vpop.f32.mrb[0].mxu0
        %v1733 = vpop.f32.mrb[0].mxu0
        %v1734 = vadd.f32 %v1685, %v1733
        %v1735 = vpop.f32.mrb[0].mxu0
        %1736 = vmatprep.mubr.bf16.mxu0 %v693
        %1737 = vmatmul.mubr.bf16.gmra.mrb[0].mxu0 %v692
        %v1738 = vpop.f32.mrb[0].mxu0
        %v1739 = vadd.f32 %v1690, %v1738
        %v1740 = vpop.f32.mrb[0].mxu0
        %v1741 = vpop.f32.mrb[0].mxu0
        %v1742 = vadd.f32 %v1693, %v1741
        %v1743 = vpop.f32.mrb[0].mxu0
        %1744 = vdwg.mxu0
        %1745 = vmatprep.subr.bf16.mxu0 0
        %1746 = vmatpush1.bf16.msra.mxu0 %v1324
        %1747 = vmatprep.subr.bf16.mxu0 0
        %1748 = vmatpush1.bf16.msra.mxu0 %v1325
        %1749 = vmatprep.subr.bf16.mxu0 0
        %1750 = vmatpush1.bf16.msra.mxu0 %v1326
        %1751 = vmatprep.subr.bf16.mxu0 0
        %1752 = vmatpush1.bf16.msra.mxu0 %v1327
        %1753 = vmatprep.subr.bf16.mxu0 0
        %1754 = vmatpush1.bf16.msra.mxu0 %v1328
        %1755 = vmatprep.subr.bf16.mxu0 0
        %1756 = vmatpush1.bf16.msra.mxu0 %v1329
        %1757 = vmatprep.subr.bf16.mxu0 0
        %1758 = vmatpush1.bf16.msra.mxu0 %v1330
        %1759 = vmatprep.subr.bf16.mxu0 0
        %1760 = vmatpush1.bf16.msra.mxu0 %v1331
        %1761 = vmatprep.subr.bf16.mxu0 0
        %1762 = vmatpush1.bf16.msra.mxu0 %v1332
        %1763 = vmatprep.subr.bf16.mxu0 0
        %1764 = vmatpush1.bf16.msra.mxu0 %v1333
        %1765 = vmatprep.subr.bf16.mxu0 0
        %1766 = vmatpush1.bf16.msra.mxu0 %v1334
        %1767 = vmatprep.subr.bf16.mxu0 0
        %1768 = vmatpush1.bf16.msra.mxu0 %v1335
        %1769 = vmatprep.subr.bf16.mxu0 0
        %1770 = vmatpush1.bf16.msra.mxu0 %v1336
        %1771 = vmatprep.subr.bf16.mxu0 0
        %1772 = vmatpush1.bf16.msra.mxu0 %v1337
        %1773 = vmatprep.subr.bf16.mxu0 0
        %1774 = vmatpush1.bf16.msra.mxu0 %v1338
        %1775 = vmatprep.subr.bf16.mxu0 0
        %1776 = vmatpush1.bf16.msra.mxu0 %v1339
        %1777 = vmatprep.mubr.bf16.mxu0 %v679
        %1778 = vmatmul.mubr.bf16.gmra.mrb[0].mxu0 %v678
        %v1779 = vpop.f32.mrb[0].mxu0
        %v1780 = vadd.f32 %v1731, %v1779
        %v1781 = vpop.f32.mrb[0].mxu0
        %v1782 = vpop.f32.mrb[0].mxu0
        %v1783 = vadd.f32 %v1734, %v1782
        %v1784 = vpop.f32.mrb[0].mxu0
        %1785 = vmatprep.mubr.bf16.mxu0 %v695
        %1786 = vmatmul.mubr.bf16.gmra.mrb[0].mxu0 %v694
        %v1787 = vpop.f32.mrb[0].mxu0
        %v1788 = vadd.f32 %v1739, %v1787
        %v1789 = vpop.f32.mrb[0].mxu0
        %v1790 = vpop.f32.mrb[0].mxu0
        %v1791 = vadd.f32 %v1742, %v1790
        %v1792 = vpop.f32.mrb[0].mxu0
        %1793 = vdwg.mxu0
        %1794 = vmatprep.subr.bf16.mxu0 0
        %1795 = vmatpush1.bf16.msra.mxu0 %v1340
        %1796 = vmatprep.subr.bf16.mxu0 0
        %1797 = vmatpush1.bf16.msra.mxu0 %v1341
        %1798 = vmatprep.subr.bf16.mxu0 0
        %1799 = vmatpush1.bf16.msra.mxu0 %v1342
        %1800 = vmatprep.subr.bf16.mxu0 0
        %1801 = vmatpush1.bf16.msra.mxu0 %v1343
        %1802 = vmatprep.subr.bf16.mxu0 0
        %1803 = vmatpush1.bf16.msra.mxu0 %v1344
        %1804 = vmatprep.subr.bf16.mxu0 0
        %1805 = vmatpush1.bf16.msra.mxu0 %v1345
        %1806 = vmatprep.subr.bf16.mxu0 0
        %1807 = vmatpush1.bf16.msra.mxu0 %v1346
        %1808 = vmatprep.subr.bf16.mxu0 0
        %1809 = vmatpush1.bf16.msra.mxu0 %v1347
        %1810 = vmatprep.subr.bf16.mxu0 0
        %1811 = vmatpush1.bf16.msra.mxu0 %v1348
        %1812 = vmatprep.subr.bf16.mxu0 0
        %1813 = vmatpush1.bf16.msra.mxu0 %v1349
        %1814 = vmatprep.subr.bf16.mxu0 0
        %1815 = vmatpush1.bf16.msra.mxu0 %v1350
        %1816 = vmatprep.subr.bf16.mxu0 0
        %1817 = vmatpush1.bf16.msra.mxu0 %v1351
        %1818 = vmatprep.subr.bf16.mxu0 0
        %1819 = vmatpush1.bf16.msra.mxu0 %v1352
        %1820 = vmatprep.subr.bf16.mxu0 0
        %1821 = vmatpush1.bf16.msra.mxu0 %v1353
        %1822 = vmatprep.subr.bf16.mxu0 0
        %1823 = vmatpush1.bf16.msra.mxu0 %v1354
        %1824 = vmatprep.subr.bf16.mxu0 0
        %1825 = vmatpush1.bf16.msra.mxu0 %v1355
        %1826 = vmatprep.mubr.bf16.mxu0 %v681
        %1827 = vmatmul.mubr.bf16.gmra.mrb[0].mxu0 %v680
        %v1828 = vpop.f32.mrb[0].mxu0
        %v1829 = vadd.f32 %v1780, %v1828
        %v1830 = vpop.f32.mrb[0].mxu0
        %v1831 = vpop.f32.mrb[0].mxu0
        %v1832 = vadd.f32 %v1783, %v1831
        %v1833 = vpop.f32.mrb[0].mxu0
        %1834 = vmatprep.mubr.bf16.mxu0 %v697
        %1835 = vmatmul.mubr.bf16.gmra.mrb[0].mxu0 %v696
        %v1836 = vpop.f32.mrb[0].mxu0
        %v1837 = vadd.f32 %v1788, %v1836
        %v1838 = vpop.f32.mrb[0].mxu0
        %v1839 = vpop.f32.mrb[0].mxu0
        %v1840 = vadd.f32 %v1791, %v1839
        %v1841 = vpop.f32.mrb[0].mxu0
        %1842 = vdwg.mxu0
        %1843 = vmatprep.subr.bf16.mxu0 0
        %1844 = vmatpush1.bf16.msra.mxu0 %v1356
        %1845 = vmatprep.subr.bf16.mxu0 0
        %1846 = vmatpush1.bf16.msra.mxu0 %v1357
        %1847 = vmatprep.subr.bf16.mxu0 0
        %1848 = vmatpush1.bf16.msra.mxu0 %v1358
        %1849 = vmatprep.subr.bf16.mxu0 0
        %1850 = vmatpush1.bf16.msra.mxu0 %v1359
        %1851 = vmatprep.subr.bf16.mxu0 0
        %1852 = vmatpush1.bf16.msra.mxu0 %v1360
        %1853 = vmatprep.subr.bf16.mxu0 0
        %1854 = vmatpush1.bf16.msra.mxu0 %v1361
        %1855 = vmatprep.subr.bf16.mxu0 0
        %1856 = vmatpush1.bf16.msra.mxu0 %v1362
        %1857 = vmatprep.subr.bf16.mxu0 0
        %1858 = vmatpush1.bf16.msra.mxu0 %v1363
        %1859 = vmatprep.subr.bf16.mxu0 0
        %1860 = vmatpush1.bf16.msra.mxu0 %v1364
        %1861 = vmatprep.subr.bf16.mxu0 0
        %1862 = vmatpush1.bf16.msra.mxu0 %v1365
        %1863 = vmatprep.subr.bf16.mxu0 0
        %1864 = vmatpush1.bf16.msra.mxu0 %v1366
        %1865 = vmatprep.subr.bf16.mxu0 0
        %1866 = vmatpush1.bf16.msra.mxu0 %v1367
        %1867 = vmatprep.subr.bf16.mxu0 0
        %1868 = vmatpush1.bf16.msra.mxu0 %v1368
        %1869 = vmatprep.subr.bf16.mxu0 0
        %1870 = vmatpush1.bf16.msra.mxu0 %v1369
        %1871 = vmatprep.subr.bf16.mxu0 0
        %1872 = vmatpush1.bf16.msra.mxu0 %v1370
        %1873 = vmatprep.subr.bf16.mxu0 0
        %1874 = vmatpush1.bf16.msra.mxu0 %v1371
        %1875 = vmatprep.mubr.bf16.mxu0 %v683
        %1876 = vmatmul.mubr.bf16.gmra.mrb[0].mxu0 %v682
        %v1877 = vpop.f32.mrb[0].mxu0
        %v1878 = vadd.f32 %v1829, %v1877
        %v1879 = vpop.f32.mrb[0].mxu0
        %v1880 = vpop.f32.mrb[0].mxu0
        %v1881 = vadd.f32 %v1832, %v1880
        %v1882 = vpop.f32.mrb[0].mxu0
        %1883 = vmatprep.mubr.bf16.mxu0 %v699
        %1884 = vmatmul.mubr.bf16.gmra.mrb[0].mxu0 %v698
        %v1885 = vpop.f32.mrb[0].mxu0
        %v1886 = vadd.f32 %v1837, %v1885
        %v1887 = vpop.f32.mrb[0].mxu0
        %v1888 = vpop.f32.mrb[0].mxu0
        %v1889 = vadd.f32 %v1840, %v1888
        %v1890 = vpop.f32.mrb[0].mxu0
        %1891 = vdwg.mxu0
        %v1892 = vmax.f32 %v1878, 0.0
        %v1893 = vmax.f32 %v1881, 0.0
        %v1894 = vmax.f32 %v1886, 0.0
        %v1895 = vmax.f32 %v1889, 0.0
        %v1896 = vld [vmem:[%s4] sm:$0x1]
        %vm1899 = vcmask 1042432
        %v1900 = vrot.slane %v1892, 5
        %v1901 = vrot.slane %v1893, 5
        %v1902 = vsel %vm1899, %v1900, %v1901
        %v1904 = vmax.f32 %v1892, %v1902
        %v1906 = vrot.slane %v1904, 1
        %v1908 = vmax.f32 %v1904, %v1906
        %v1909 = vpack.c.bf16 %v1908, %v1908
        %v1910 = vld [vmem:[%s3] sm:$0xf]
        %v1911 = vld [vmem:[%s3 + $0x4] sm:$0xf]
        %v1912 = vld [vmem:[%s3 + $0x8] sm:$0xf]
        %v1913 = vld [vmem:[%s3 + $0xc] sm:$0xf]
        %v1918 = vunpack.c.l.b16 %v1910
        %v1919 = vunpack.c.l.b16 %v1911
        %v1920 = vunpack.c.l.b16 %v1912
        %v1921 = vunpack.c.l.b16 %v1913
        %v1922 = vpack.c.b16 %v1919, %v1918
        %v1923 = vpack.c.b16 %v1921, %v1920
        %vm1926 = vcmask 261120
        %v1928 = vsel %vm1926, %v1909, 0
        %1930 = vmatprep.subr.bf16.mxu0 0
        %1931 = vmatpush1.bf16.msra.mxu0 %v1922
        %1932 = vmatprep.subr.bf16.mxu0 0
        %1933 = vmatpush1.bf16.msra.mxu0 %v1923
        %1934 = vmatprep.subr.bf16.mxu0 0
        %1935 = vmatpush1.bf16.msra.mxu0 0
        %1936 = vmatprep.subr.bf16.mxu0 0
        %1937 = vmatpush1.bf16.msra.mxu0 0
        %1938 = vmatprep.subr.bf16.mxu0 0
        %1939 = vmatpush1.bf16.msra.mxu0 0
        %1940 = vmatprep.subr.bf16.mxu0 0
        %1941 = vmatpush1.bf16.msra.mxu0 0
        %1942 = vmatprep.subr.bf16.mxu0 0
        %1943 = vmatpush1.bf16.msra.mxu0 0
        %1944 = vmatprep.subr.bf16.mxu0 0
        %1945 = vmatpush1.bf16.msra.mxu0 0
        %1946 = vmatprep.subr.bf16.mxu0 0
        %1947 = vmatpush1.bf16.msra.mxu0 0
        %1948 = vmatprep.subr.bf16.mxu0 0
        %1949 = vmatpush1.bf16.msra.mxu0 0
        %1950 = vmatprep.subr.bf16.mxu0 0
        %1951 = vmatpush1.bf16.msra.mxu0 0
        %1952 = vmatprep.subr.bf16.mxu0 0
        %1953 = vmatpush1.bf16.msra.mxu0 0
        %1954 = vmatprep.subr.bf16.mxu0 0
        %1955 = vmatpush1.bf16.msra.mxu0 0
        %1956 = vmatprep.subr.bf16.mxu0 0
        %1957 = vmatpush1.bf16.msra.mxu0 0
        %1958 = vmatprep.subr.bf16.mxu0 0
        %1959 = vmatpush1.bf16.msra.mxu0 0
        %1960 = vmatprep.subr.bf16.mxu0 0
        %1961 = vmatpush1.bf16.msra.mxu0 0
        %1962 = vmatprep.mubr.bf16.mxu0 0
        %1963 = vmatmul.mubr.bf16.gmra.mrb[0].mxu0 %v1928
        %v1964 = vpop.f32.mrb[0].mxu0
        %v1965 = vadd.f32 0.0, %v1964
        %v1966 = vpop.f32.mrb[0].mxu0
        %v1967 = vpop.f32.mrb[0].mxu0
        %v1968 = vpop.f32.mrb[0].mxu0
        %1969 = vdwg.mxu0
        %v1970 = vadd.f32 %v1896, %v1965
        %s1971 = scalar_lea.vmem %s3, 16
        %v1972 = vld [vmem:[%s1971] sm:$0xf]
        %v1973 = vld [vmem:[%s1971 + $0x4] sm:$0xf]
        %v1974 = vld [vmem:[%s1971 + $0x8] sm:$0xf]
        %v1975 = vld [vmem:[%s1971 + $0xc] sm:$0xf]
        %v1976 = vshrl.u32 %v1909, 16
        %v1982 = vunpack.c.l.b16 %v1972
        %v1983 = vunpack.c.l.b16 %v1973
        %v1984 = vunpack.c.l.b16 %v1974
        %v1985 = vunpack.c.l.b16 %v1975
        %v1986 = vpack.c.b16 %v1983, %v1982
        %v1987 = vpack.c.b16 %v1985, %v1984
        %v1991 = vsel %vm1926, %v1976, 0
        %1993 = vmatprep.subr.bf16.mxu0 0
        %1994 = vmatpush1.bf16.msra.mxu0 %v1986
        %1995 = vmatprep.subr.bf16.mxu0 0
        %1996 = vmatpush1.bf16.msra.mxu0 %v1987
        %1997 = vmatprep.subr.bf16.mxu0 0
        %1998 = vmatpush1.bf16.msra.mxu0 0
        %1999 = vmatprep.subr.bf16.mxu0 0
        %2000 = vmatpush1.bf16.msra.mxu0 0
        %2001 = vmatprep.subr.bf16.mxu0 0
        %2002 = vmatpush1.bf16.msra.mxu0 0
        %2003 = vmatprep.subr.bf16.mxu0 0
        %2004 = vmatpush1.bf16.msra.mxu0 0
        %2005 = vmatprep.subr.bf16.mxu0 0
        %2006 = vmatpush1.bf16.msra.mxu0 0
        %2007 = vmatprep.subr.bf16.mxu0 0
        %2008 = vmatpush1.bf16.msra.mxu0 0
        %2009 = vmatprep.subr.bf16.mxu0 0
        %2010 = vmatpush1.bf16.msra.mxu0 0
        %2011 = vmatprep.subr.bf16.mxu0 0
        %2012 = vmatpush1.bf16.msra.mxu0 0
        %2013 = vmatprep.subr.bf16.mxu0 0
        %2014 = vmatpush1.bf16.msra.mxu0 0
        %2015 = vmatprep.subr.bf16.mxu0 0
        %2016 = vmatpush1.bf16.msra.mxu0 0
        %2017 = vmatprep.subr.bf16.mxu0 0
        %2018 = vmatpush1.bf16.msra.mxu0 0
        %2019 = vmatprep.subr.bf16.mxu0 0
        %2020 = vmatpush1.bf16.msra.mxu0 0
        %2021 = vmatprep.subr.bf16.mxu0 0
        %2022 = vmatpush1.bf16.msra.mxu0 0
        %2023 = vmatprep.subr.bf16.mxu0 0
        %2024 = vmatpush1.bf16.msra.mxu0 0
        %2025 = vmatprep.mubr.bf16.mxu0 0
        %2026 = vmatmul.mubr.bf16.gmra.mrb[0].mxu0 %v1991
        %v2027 = vpop.f32.mrb[0].mxu0
        %v2028 = vadd.f32 0.0, %v2027
        %v2029 = vpop.f32.mrb[0].mxu0
        %v2030 = vpop.f32.mrb[0].mxu0
        %v2031 = vpop.f32.mrb[0].mxu0
        %2032 = vdwg.mxu0
        %v2033 = vadd.f32 %v1970, %v2028
        %s2034 = scalar_lea.vmem %s3, 32
        %v2035 = vld [vmem:[%s2034] sm:$0xf]
        %v2036 = vld [vmem:[%s2034 + $0x4] sm:$0xf]
        %v2037 = vld [vmem:[%s2034 + $0x8] sm:$0xf]
        %v2038 = vld [vmem:[%s2034 + $0xc] sm:$0xf]
        %v2040 = vrot.slane %v1909, 1
        %v2045 = vunpack.c.l.b16 %v2035
        %v2046 = vunpack.c.l.b16 %v2036
        %v2047 = vunpack.c.l.b16 %v2037
        %v2048 = vunpack.c.l.b16 %v2038
        %v2049 = vpack.c.b16 %v2046, %v2045
        %v2050 = vpack.c.b16 %v2048, %v2047
        %v2054 = vsel %vm1926, %v2040, 0
        %2056 = vmatprep.subr.bf16.mxu0 0
        %2057 = vmatpush1.bf16.msra.mxu0 %v2049
        %2058 = vmatprep.subr.bf16.mxu0 0
        %2059 = vmatpush1.bf16.msra.mxu0 %v2050
        %2060 = vmatprep.subr.bf16.mxu0 0
        %2061 = vmatpush1.bf16.msra.mxu0 0
        %2062 = vmatprep.subr.bf16.mxu0 0
        %2063 = vmatpush1.bf16.msra.mxu0 0
        %2064 = vmatprep.subr.bf16.mxu0 0
        %2065 = vmatpush1.bf16.msra.mxu0 0
        %2066 = vmatprep.subr.bf16.mxu0 0
        %2067 = vmatpush1.bf16.msra.mxu0 0
        %2068 = vmatprep.subr.bf16.mxu0 0
        %2069 = vmatpush1.bf16.msra.mxu0 0
        %2070 = vmatprep.subr.bf16.mxu0 0
        %2071 = vmatpush1.bf16.msra.mxu0 0
        %2072 = vmatprep.subr.bf16.mxu0 0
        %2073 = vmatpush1.bf16.msra.mxu0 0
        %2074 = vmatprep.subr.bf16.mxu0 0
        %2075 = vmatpush1.bf16.msra.mxu0 0
        %2076 = vmatprep.subr.bf16.mxu0 0
        %2077 = vmatpush1.bf16.msra.mxu0 0
        %2078 = vmatprep.subr.bf16.mxu0 0
        %2079 = vmatpush1.bf16.msra.mxu0 0
        %2080 = vmatprep.subr.bf16.mxu0 0
        %2081 = vmatpush1.bf16.msra.mxu0 0
        %2082 = vmatprep.subr.bf16.mxu0 0
        %2083 = vmatpush1.bf16.msra.mxu0 0
        %2084 = vmatprep.subr.bf16.mxu0 0
        %2085 = vmatpush1.bf16.msra.mxu0 0
        %2086 = vmatprep.subr.bf16.mxu0 0
        %2087 = vmatpush1.bf16.msra.mxu0 0
        %2088 = vmatprep.mubr.bf16.mxu0 0
        %2089 = vmatmul.mubr.bf16.gmra.mrb[0].mxu0 %v2054
        %v2090 = vpop.f32.mrb[0].mxu0
        %v2091 = vadd.f32 0.0, %v2090
        %v2092 = vpop.f32.mrb[0].mxu0
        %v2093 = vpop.f32.mrb[0].mxu0
        %v2094 = vpop.f32.mrb[0].mxu0
        %2095 = vdwg.mxu0
        %v2096 = vadd.f32 %v2033, %v2091
        %s2097 = scalar_lea.vmem %s3, 48
        %v2098 = vld [vmem:[%s2097] sm:$0xf]
        %v2099 = vld [vmem:[%s2097 + $0x4] sm:$0xf]
        %v2100 = vld [vmem:[%s2097 + $0x8] sm:$0xf]
        %v2101 = vld [vmem:[%s2097 + $0xc] sm:$0xf]
        %v2102 = vrot.slane %v1976, 1
        %v2107 = vunpack.c.l.b16 %v2098
        %v2108 = vunpack.c.l.b16 %v2099
        %v2109 = vunpack.c.l.b16 %v2100
        %v2110 = vunpack.c.l.b16 %v2101
        %v2111 = vpack.c.b16 %v2108, %v2107
        %v2112 = vpack.c.b16 %v2110, %v2109
        %v2116 = vsel %vm1926, %v2102, 0
        %2118 = vmatprep.subr.bf16.mxu0 0
        %2119 = vmatpush1.bf16.msra.mxu0 %v2111
        %2120 = vmatprep.subr.bf16.mxu0 0
        %2121 = vmatpush1.bf16.msra.mxu0 %v2112
        %2122 = vmatprep.subr.bf16.mxu0 0
        %2123 = vmatpush1.bf16.msra.mxu0 0
        %2124 = vmatprep.subr.bf16.mxu0 0
        %2125 = vmatpush1.bf16.msra.mxu0 0
        %2126 = vmatprep.subr.bf16.mxu0 0
        %2127 = vmatpush1.bf16.msra.mxu0 0
        %2128 = vmatprep.subr.bf16.mxu0 0
        %2129 = vmatpush1.bf16.msra.mxu0 0
        %2130 = vmatprep.subr.bf16.mxu0 0
        %2131 = vmatpush1.bf16.msra.mxu0 0
        %2132 = vmatprep.subr.bf16.mxu0 0
        %2133 = vmatpush1.bf16.msra.mxu0 0
        %2134 = vmatprep.subr.bf16.mxu0 0
        %2135 = vmatpush1.bf16.msra.mxu0 0
        %2136 = vmatprep.subr.bf16.mxu0 0
        %2137 = vmatpush1.bf16.msra.mxu0 0
        %2138 = vmatprep.subr.bf16.mxu0 0
        %2139 = vmatpush1.bf16.msra.mxu0 0
        %2140 = vmatprep.subr.bf16.mxu0 0
        %2141 = vmatpush1.bf16.msra.mxu0 0
        %2142 = vmatprep.subr.bf16.mxu0 0
        %2143 = vmatpush1.bf16.msra.mxu0 0
        %2144 = vmatprep.subr.bf16.mxu0 0
        %2145 = vmatpush1.bf16.msra.mxu0 0
        %2146 = vmatprep.subr.bf16.mxu0 0
        %2147 = vmatpush1.bf16.msra.mxu0 0
        %2148 = vmatprep.subr.bf16.mxu0 0
        %2149 = vmatpush1.bf16.msra.mxu0 0
        %2150 = vmatprep.mubr.bf16.mxu0 0
        %2151 = vmatmul.mubr.bf16.gmra.mrb[0].mxu0 %v2116
        %v2152 = vpop.f32.mrb[0].mxu0
        %v2153 = vadd.f32 0.0, %v2152
        %v2154 = vpop.f32.mrb[0].mxu0
        %v2155 = vpop.f32.mrb[0].mxu0
        %v2156 = vpop.f32.mrb[0].mxu0
        %2157 = vdwg.mxu0
        %v2158 = vadd.f32 %v2096, %v2153
        %v2160 = vmax.f32 %v1892, %v1901
        %v2161 = vmax.f32 %v1893, %v1901
        %vm2164 = vcmask 1046528
        %v2165 = vrot.slane %v2160, 1
        %v2166 = vrot.slane %v2161, 1
        %v2167 = vsel %vm2164, %v2165, %v2166
        %v2170 = vmax.f32 %v2160, %v2167
        %v2171 = vmax.f32 %v2161, %v2166
        %v2172 = vpack.c.bf16 %v2171, %v2170
        %s2173 = scalar_lea.vmem %s3, 64
        %v2174 = vld [vmem:[%s2173] sm:$0xf]
        %v2175 = vld [vmem:[%s2173 + $0x4] sm:$0xf]
        %v2176 = vld [vmem:[%s2173 + $0x8] sm:$0xf]
        %v2177 = vld [vmem:[%s2173 + $0xc] sm:$0xf]
        %v2179 = vshrl.u32 %v2172, 16
        %v2181 = vrot.slane %v2179, 2
        %v2186 = vunpack.c.l.b16 %v2174
        %v2187 = vunpack.c.l.b16 %v2175
        %v2188 = vunpack.c.l.b16 %v2176
        %v2189 = vunpack.c.l.b16 %v2177
        %v2190 = vpack.c.b16 %v2187, %v2186
        %v2191 = vpack.c.b16 %v2189, %v2188
        %v2195 = vsel %vm1926, %v2181, 0
        %2197 = vmatprep.subr.bf16.mxu0 0
        %2198 = vmatpush1.bf16.msra.mxu0 %v2190
        %2199 = vmatprep.subr.bf16.mxu0 0
        %2200 = vmatpush1.bf16.msra.mxu0 %v2191
        %2201 = vmatprep.subr.bf16.mxu0 0
        %2202 = vmatpush1.bf16.msra.mxu0 0
        %2203 = vmatprep.subr.bf16.mxu0 0
        %2204 = vmatpush1.bf16.msra.mxu0 0
        %2205 = vmatprep.subr.bf16.mxu0 0
        %2206 = vmatpush1.bf16.msra.mxu0 0
        %2207 = vmatprep.subr.bf16.mxu0 0
        %2208 = vmatpush1.bf16.msra.mxu0 0
        %2209 = vmatprep.subr.bf16.mxu0 0
        %2210 = vmatpush1.bf16.msra.mxu0 0
        %2211 = vmatprep.subr.bf16.mxu0 0
        %2212 = vmatpush1.bf16.msra.mxu0 0
        %2213 = vmatprep.subr.bf16.mxu0 0
        %2214 = vmatpush1.bf16.msra.mxu0 0
        %2215 = vmatprep.subr.bf16.mxu0 0
        %2216 = vmatpush1.bf16.msra.mxu0 0
        %2217 = vmatprep.subr.bf16.mxu0 0
        %2218 = vmatpush1.bf16.msra.mxu0 0
        %2219 = vmatprep.subr.bf16.mxu0 0
        %2220 = vmatpush1.bf16.msra.mxu0 0
        %2221 = vmatprep.subr.bf16.mxu0 0
        %2222 = vmatpush1.bf16.msra.mxu0 0
        %2223 = vmatprep.subr.bf16.mxu0 0
        %2224 = vmatpush1.bf16.msra.mxu0 0
        %2225 = vmatprep.subr.bf16.mxu0 0
        %2226 = vmatpush1.bf16.msra.mxu0 0
        %2227 = vmatprep.subr.bf16.mxu0 0
        %2228 = vmatpush1.bf16.msra.mxu0 0
        %2229 = vmatprep.mubr.bf16.mxu0 0
        %2230 = vmatmul.mubr.bf16.gmra.mrb[0].mxu0 %v2195
        %v2231 = vpop.f32.mrb[0].mxu0
        %v2232 = vadd.f32 0.0, %v2231
        %v2233 = vpop.f32.mrb[0].mxu0
        %v2234 = vpop.f32.mrb[0].mxu0
        %v2235 = vpop.f32.mrb[0].mxu0
        %2236 = vdwg.mxu0
        %v2237 = vadd.f32 %v2158, %v2232
        %s2238 = scalar_lea.vmem %s3, 80
        %v2239 = vld [vmem:[%s2238] sm:$0xf]
        %v2240 = vld [vmem:[%s2238 + $0x4] sm:$0xf]
        %v2241 = vld [vmem:[%s2238 + $0x8] sm:$0xf]
        %v2242 = vld [vmem:[%s2238 + $0xc] sm:$0xf]
        %v2244 = vrot.slane %v2172, 3
        %v2249 = vunpack.c.l.b16 %v2239
        %v2250 = vunpack.c.l.b16 %v2240
        %v2251 = vunpack.c.l.b16 %v2241
        %v2252 = vunpack.c.l.b16 %v2242
        %v2253 = vpack.c.b16 %v2250, %v2249
        %v2254 = vpack.c.b16 %v2252, %v2251
        %v2258 = vsel %vm1926, %v2244, 0
        %2260 = vmatprep.subr.bf16.mxu0 0
        %2261 = vmatpush1.bf16.msra.mxu0 %v2253
        %2262 = vmatprep.subr.bf16.mxu0 0
        %2263 = vmatpush1.bf16.msra.mxu0 %v2254
        %2264 = vmatprep.subr.bf16.mxu0 0
        %2265 = vmatpush1.bf16.msra.mxu0 0
        %2266 = vmatprep.subr.bf16.mxu0 0
        %2267 = vmatpush1.bf16.msra.mxu0 0
        %2268 = vmatprep.subr.bf16.mxu0 0
        %2269 = vmatpush1.bf16.msra.mxu0 0
        %2270 = vmatprep.subr.bf16.mxu0 0
        %2271 = vmatpush1.bf16.msra.mxu0 0
        %2272 = vmatprep.subr.bf16.mxu0 0
        %2273 = vmatpush1.bf16.msra.mxu0 0
        %2274 = vmatprep.subr.bf16.mxu0 0
        %2275 = vmatpush1.bf16.msra.mxu0 0
        %2276 = vmatprep.subr.bf16.mxu0 0
        %2277 = vmatpush1.bf16.msra.mxu0 0
        %2278 = vmatprep.subr.bf16.mxu0 0
        %2279 = vmatpush1.bf16.msra.mxu0 0
        %2280 = vmatprep.subr.bf16.mxu0 0
        %2281 = vmatpush1.bf16.msra.mxu0 0
        %2282 = vmatprep.subr.bf16.mxu0 0
        %2283 = vmatpush1.bf16.msra.mxu0 0
        %2284 = vmatprep.subr.bf16.mxu0 0
        %2285 = vmatpush1.bf16.msra.mxu0 0
        %2286 = vmatprep.subr.bf16.mxu0 0
        %2287 = vmatpush1.bf16.msra.mxu0 0
        %2288 = vmatprep.subr.bf16.mxu0 0
        %2289 = vmatpush1.bf16.msra.mxu0 0
        %2290 = vmatprep.subr.bf16.mxu0 0
        %2291 = vmatpush1.bf16.msra.mxu0 0
        %2292 = vmatprep.mubr.bf16.mxu0 0
        %2293 = vmatmul.mubr.bf16.gmra.mrb[0].mxu0 %v2258
        %v2294 = vpop.f32.mrb[0].mxu0
        %v2295 = vadd.f32 0.0, %v2294
        %v2296 = vpop.f32.mrb[0].mxu0
        %v2297 = vpop.f32.mrb[0].mxu0
        %v2298 = vpop.f32.mrb[0].mxu0
        %2299 = vdwg.mxu0
        %v2300 = vadd.f32 %v2237, %v2295
        %s2301 = scalar_lea.vmem %s3, 96
        %v2302 = vld [vmem:[%s2301] sm:$0xf]
        %v2303 = vld [vmem:[%s2301 + $0x4] sm:$0xf]
        %v2304 = vld [vmem:[%s2301 + $0x8] sm:$0xf]
        %v2305 = vld [vmem:[%s2301 + $0xc] sm:$0xf]
        %v2306 = vrot.slane %v2179, 3
        %v2311 = vunpack.c.l.b16 %v2302
        %v2312 = vunpack.c.l.b16 %v2303
        %v2313 = vunpack.c.l.b16 %v2304
        %v2314 = vunpack.c.l.b16 %v2305
        %v2315 = vpack.c.b16 %v2312, %v2311
        %v2316 = vpack.c.b16 %v2314, %v2313
        %v2320 = vsel %vm1926, %v2306, 0
        %2322 = vmatprep.subr.bf16.mxu0 0
        %2323 = vmatpush1.bf16.msra.mxu0 %v2315
        %2324 = vmatprep.subr.bf16.mxu0 0
        %2325 = vmatpush1.bf16.msra.mxu0 %v2316
        %2326 = vmatprep.subr.bf16.mxu0 0
        %2327 = vmatpush1.bf16.msra.mxu0 0
        %2328 = vmatprep.subr.bf16.mxu0 0
        %2329 = vmatpush1.bf16.msra.mxu0 0
        %2330 = vmatprep.subr.bf16.mxu0 0
        %2331 = vmatpush1.bf16.msra.mxu0 0
        %2332 = vmatprep.subr.bf16.mxu0 0
        %2333 = vmatpush1.bf16.msra.mxu0 0
        %2334 = vmatprep.subr.bf16.mxu0 0
        %2335 = vmatpush1.bf16.msra.mxu0 0
        %2336 = vmatprep.subr.bf16.mxu0 0
        %2337 = vmatpush1.bf16.msra.mxu0 0
        %2338 = vmatprep.subr.bf16.mxu0 0
        %2339 = vmatpush1.bf16.msra.mxu0 0
        %2340 = vmatprep.subr.bf16.mxu0 0
        %2341 = vmatpush1.bf16.msra.mxu0 0
        %2342 = vmatprep.subr.bf16.mxu0 0
        %2343 = vmatpush1.bf16.msra.mxu0 0
        %2344 = vmatprep.subr.bf16.mxu0 0
        %2345 = vmatpush1.bf16.msra.mxu0 0
        %2346 = vmatprep.subr.bf16.mxu0 0
        %2347 = vmatpush1.bf16.msra.mxu0 0
        %2348 = vmatprep.subr.bf16.mxu0 0
        %2349 = vmatpush1.bf16.msra.mxu0 0
        %2350 = vmatprep.subr.bf16.mxu0 0
        %2351 = vmatpush1.bf16.msra.mxu0 0
        %2352 = vmatprep.subr.bf16.mxu0 0
        %2353 = vmatpush1.bf16.msra.mxu0 0
        %2354 = vmatprep.mubr.bf16.mxu0 0
        %2355 = vmatmul.mubr.bf16.gmra.mrb[0].mxu0 %v2320
        %v2356 = vpop.f32.mrb[0].mxu0
        %v2357 = vadd.f32 0.0, %v2356
        %v2358 = vpop.f32.mrb[0].mxu0
        %v2359 = vpop.f32.mrb[0].mxu0
        %v2360 = vpop.f32.mrb[0].mxu0
        %2361 = vdwg.mxu0
        %v2362 = vadd.f32 %v2300, %v2357
        %s2363 = scalar_lea.vmem %s3, 112
        %v2364 = vld [vmem:[%s2363] sm:$0xf]
        %v2365 = vld [vmem:[%s2363 + $0x4] sm:$0xf]
        %v2366 = vld [vmem:[%s2363 + $0x8] sm:$0xf]
        %v2367 = vld [vmem:[%s2363 + $0xc] sm:$0xf]
        %v2368 = vrot.slane %v2172, 4
        %v2373 = vunpack.c.l.b16 %v2364
        %v2374 = vunpack.c.l.b16 %v2365
        %v2375 = vunpack.c.l.b16 %v2366
        %v2376 = vunpack.c.l.b16 %v2367
        %v2377 = vpack.c.b16 %v2374, %v2373
        %v2378 = vpack.c.b16 %v2376, %v2375
        %v2382 = vsel %vm1926, %v2368, 0
        %2384 = vmatprep.subr.bf16.mxu0 0
        %2385 = vmatpush1.bf16.msra.mxu0 %v2377
        %2386 = vmatprep.subr.bf16.mxu0 0
        %2387 = vmatpush1.bf16.msra.mxu0 %v2378
        %2388 = vmatprep.subr.bf16.mxu0 0
        %2389 = vmatpush1.bf16.msra.mxu0 0
        %2390 = vmatprep.subr.bf16.mxu0 0
        %2391 = vmatpush1.bf16.msra.mxu0 0
        %2392 = vmatprep.subr.bf16.mxu0 0
        %2393 = vmatpush1.bf16.msra.mxu0 0
        %2394 = vmatprep.subr.bf16.mxu0 0
        %2395 = vmatpush1.bf16.msra.mxu0 0
        %2396 = vmatprep.subr.bf16.mxu0 0
        %2397 = vmatpush1.bf16.msra.mxu0 0
        %2398 = vmatprep.subr.bf16.mxu0 0
        %2399 = vmatpush1.bf16.msra.mxu0 0
        %2400 = vmatprep.subr.bf16.mxu0 0
        %2401 = vmatpush1.bf16.msra.mxu0 0
        %2402 = vmatprep.subr.bf16.mxu0 0
        %2403 = vmatpush1.bf16.msra.mxu0 0
        %2404 = vmatprep.subr.bf16.mxu0 0
        %2405 = vmatpush1.bf16.msra.mxu0 0
        %2406 = vmatprep.subr.bf16.mxu0 0
        %2407 = vmatpush1.bf16.msra.mxu0 0
        %2408 = vmatprep.subr.bf16.mxu0 0
        %2409 = vmatpush1.bf16.msra.mxu0 0
        %2410 = vmatprep.subr.bf16.mxu0 0
        %2411 = vmatpush1.bf16.msra.mxu0 0
        %2412 = vmatprep.subr.bf16.mxu0 0
        %2413 = vmatpush1.bf16.msra.mxu0 0
        %2414 = vmatprep.subr.bf16.mxu0 0
        %2415 = vmatpush1.bf16.msra.mxu0 0
        %2416 = vmatprep.mubr.bf16.mxu0 0
        %2417 = vmatmul.mubr.bf16.gmra.mrb[0].mxu0 %v2382
        %v2418 = vpop.f32.mrb[0].mxu0
        %v2419 = vadd.f32 0.0, %v2418
        %v2420 = vpop.f32.mrb[0].mxu0
        %v2421 = vpop.f32.mrb[0].mxu0
        %v2422 = vpop.f32.mrb[0].mxu0
        %2423 = vdwg.mxu0
        %v2424 = vadd.f32 %v2362, %v2419
        %v2426 = vrot.slane %v1894, 5
        %v2427 = vsel %vm1899, %v1901, %v2426
        %v2429 = vmax.f32 %v1893, %v2427
        %v2431 = vrot.slane %v2429, 1
        %v2433 = vmax.f32 %v2429, %v2431
        %v2434 = vpack.c.bf16 %v2433, %v2433
        %s2435 = scalar_lea.vmem %s3, 128
        %v2436 = vld [vmem:[%s2435] sm:$0xf]
        %v2437 = vld [vmem:[%s2435 + $0x4] sm:$0xf]
        %v2438 = vld [vmem:[%s2435 + $0x8] sm:$0xf]
        %v2439 = vld [vmem:[%s2435 + $0xc] sm:$0xf]
        %v2441 = vrot.slane %v2434, 1
        %v2446 = vunpack.c.l.b16 %v2436
        %v2447 = vunpack.c.l.b16 %v2437
        %v2448 = vunpack.c.l.b16 %v2438
        %v2449 = vunpack.c.l.b16 %v2439
        %v2450 = vpack.c.b16 %v2447, %v2446
        %v2451 = vpack.c.b16 %v2449, %v2448
        %v2455 = vsel %vm1926, %v2441, 0
        %2457 = vmatprep.subr.bf16.mxu0 0
        %2458 = vmatpush1.bf16.msra.mxu0 %v2450
        %2459 = vmatprep.subr.bf16.mxu0 0
        %2460 = vmatpush1.bf16.msra.mxu0 %v2451
        %2461 = vmatprep.subr.bf16.mxu0 0
        %2462 = vmatpush1.bf16.msra.mxu0 0
        %2463 = vmatprep.subr.bf16.mxu0 0
        %2464 = vmatpush1.bf16.msra.mxu0 0
        %2465 = vmatprep.subr.bf16.mxu0 0
        %2466 = vmatpush1.bf16.msra.mxu0 0
        %2467 = vmatprep.subr.bf16.mxu0 0
        %2468 = vmatpush1.bf16.msra.mxu0 0
        %2469 = vmatprep.subr.bf16.mxu0 0
        %2470 = vmatpush1.bf16.msra.mxu0 0
        %2471 = vmatprep.subr.bf16.mxu0 0
        %2472 = vmatpush1.bf16.msra.mxu0 0
        %2473 = vmatprep.subr.bf16.mxu0 0
        %2474 = vmatpush1.bf16.msra.mxu0 0
        %2475 = vmatprep.subr.bf16.mxu0 0
        %2476 = vmatpush1.bf16.msra.mxu0 0
        %2477 = vmatprep.subr.bf16.mxu0 0
        %2478 = vmatpush1.bf16.msra.mxu0 0
        %2479 = vmatprep.subr.bf16.mxu0 0
        %2480 = vmatpush1.bf16.msra.mxu0 0
        %2481 = vmatprep.subr.bf16.mxu0 0
        %2482 = vmatpush1.bf16.msra.mxu0 0
        %2483 = vmatprep.subr.bf16.mxu0 0
        %2484 = vmatpush1.bf16.msra.mxu0 0
        %2485 = vmatprep.subr.bf16.mxu0 0
        %2486 = vmatpush1.bf16.msra.mxu0 0
        %2487 = vmatprep.subr.bf16.mxu0 0
        %2488 = vmatpush1.bf16.msra.mxu0 0
        %2489 = vmatprep.mubr.bf16.mxu0 0
        %2490 = vmatmul.mubr.bf16.gmra.mrb[0].mxu0 %v2455
        %v2491 = vpop.f32.mrb[0].mxu0
        %v2492 = vadd.f32 0.0, %v2491
        %v2493 = vpop.f32.mrb[0].mxu0
        %v2494 = vpop.f32.mrb[0].mxu0
        %v2495 = vpop.f32.mrb[0].mxu0
        %2496 = vdwg.mxu0
        %v2497 = vadd.f32 %v2424, %v2492
        %s2498 = scalar_lea.vmem %s3, 144
        %v2499 = vld [vmem:[%s2498] sm:$0xf]
        %v2500 = vld [vmem:[%s2498 + $0x4] sm:$0xf]
        %v2501 = vld [vmem:[%s2498 + $0x8] sm:$0xf]
        %v2502 = vld [vmem:[%s2498 + $0xc] sm:$0xf]
        %v2504 = vshrl.u32 %v2434, 16
        %v2506 = vrot.slane %v2504, 1
        %v2511 = vunpack.c.l.b16 %v2499
        %v2512 = vunpack.c.l.b16 %v2500
        %v2513 = vunpack.c.l.b16 %v2501
        %v2514 = vunpack.c.l.b16 %v2502
        %v2515 = vpack.c.b16 %v2512, %v2511
        %v2516 = vpack.c.b16 %v2514, %v2513
        %v2520 = vsel %vm1926, %v2506, 0
        %2522 = vmatprep.subr.bf16.mxu0 0
        %2523 = vmatpush1.bf16.msra.mxu0 %v2515
        %2524 = vmatprep.subr.bf16.mxu0 0
        %2525 = vmatpush1.bf16.msra.mxu0 %v2516
        %2526 = vmatprep.subr.bf16.mxu0 0
        %2527 = vmatpush1.bf16.msra.mxu0 0
        %2528 = vmatprep.subr.bf16.mxu0 0
        %2529 = vmatpush1.bf16.msra.mxu0 0
        %2530 = vmatprep.subr.bf16.mxu0 0
        %2531 = vmatpush1.bf16.msra.mxu0 0
        %2532 = vmatprep.subr.bf16.mxu0 0
        %2533 = vmatpush1.bf16.msra.mxu0 0
        %2534 = vmatprep.subr.bf16.mxu0 0
        %2535 = vmatpush1.bf16.msra.mxu0 0
        %2536 = vmatprep.subr.bf16.mxu0 0
        %2537 = vmatpush1.bf16.msra.mxu0 0
        %2538 = vmatprep.subr.bf16.mxu0 0
        %2539 = vmatpush1.bf16.msra.mxu0 0
        %2540 = vmatprep.subr.bf16.mxu0 0
        %2541 = vmatpush1.bf16.msra.mxu0 0
        %2542 = vmatprep.subr.bf16.mxu0 0
        %2543 = vmatpush1.bf16.msra.mxu0 0
        %2544 = vmatprep.subr.bf16.mxu0 0
        %2545 = vmatpush1.bf16.msra.mxu0 0
        %2546 = vmatprep.subr.bf16.mxu0 0
        %2547 = vmatpush1.bf16.msra.mxu0 0
        %2548 = vmatprep.subr.bf16.mxu0 0
        %2549 = vmatpush1.bf16.msra.mxu0 0
        %2550 = vmatprep.subr.bf16.mxu0 0
        %2551 = vmatpush1.bf16.msra.mxu0 0
        %2552 = vmatprep.subr.bf16.mxu0 0
        %2553 = vmatpush1.bf16.msra.mxu0 0
        %2554 = vmatprep.mubr.bf16.mxu0 0
        %2555 = vmatmul.mubr.bf16.gmra.mrb[0].mxu0 %v2520
        %v2556 = vpop.f32.mrb[0].mxu0
        %v2557 = vadd.f32 0.0, %v2556
        %v2558 = vpop.f32.mrb[0].mxu0
        %v2559 = vpop.f32.mrb[0].mxu0
        %v2560 = vpop.f32.mrb[0].mxu0
        %2561 = vdwg.mxu0
        %v2562 = vadd.f32 %v2497, %v2557
        %s2563 = scalar_lea.vmem %s3, 160
        %v2564 = vld [vmem:[%s2563] sm:$0xf]
        %v2565 = vld [vmem:[%s2563 + $0x4] sm:$0xf]
        %v2566 = vld [vmem:[%s2563 + $0x8] sm:$0xf]
        %v2567 = vld [vmem:[%s2563 + $0xc] sm:$0xf]
        %v2568 = vrot.slane %v2434, 2
        %v2573 = vunpack.c.l.b16 %v2564
        %v2574 = vunpack.c.l.b16 %v2565
        %v2575 = vunpack.c.l.b16 %v2566
        %v2576 = vunpack.c.l.b16 %v2567
        %v2577 = vpack.c.b16 %v2574, %v2573
        %v2578 = vpack.c.b16 %v2576, %v2575
        %v2582 = vsel %vm1926, %v2568, 0
        %2584 = vmatprep.subr.bf16.mxu0 0
        %2585 = vmatpush1.bf16.msra.mxu0 %v2577
        %2586 = vmatprep.subr.bf16.mxu0 0
        %2587 = vmatpush1.bf16.msra.mxu0 %v2578
        %2588 = vmatprep.subr.bf16.mxu0 0
        %2589 = vmatpush1.bf16.msra.mxu0 0
        %2590 = vmatprep.subr.bf16.mxu0 0
        %2591 = vmatpush1.bf16.msra.mxu0 0
        %2592 = vmatprep.subr.bf16.mxu0 0
        %2593 = vmatpush1.bf16.msra.mxu0 0
        %2594 = vmatprep.subr.bf16.mxu0 0
        %2595 = vmatpush1.bf16.msra.mxu0 0
        %2596 = vmatprep.subr.bf16.mxu0 0
        %2597 = vmatpush1.bf16.msra.mxu0 0
        %2598 = vmatprep.subr.bf16.mxu0 0
        %2599 = vmatpush1.bf16.msra.mxu0 0
        %2600 = vmatprep.subr.bf16.mxu0 0
        %2601 = vmatpush1.bf16.msra.mxu0 0
        %2602 = vmatprep.subr.bf16.mxu0 0
        %2603 = vmatpush1.bf16.msra.mxu0 0
        %2604 = vmatprep.subr.bf16.mxu0 0
        %2605 = vmatpush1.bf16.msra.mxu0 0
        %2606 = vmatprep.subr.bf16.mxu0 0
        %2607 = vmatpush1.bf16.msra.mxu0 0
        %2608 = vmatprep.subr.bf16.mxu0 0
        %2609 = vmatpush1.bf16.msra.mxu0 0
        %2610 = vmatprep.subr.bf16.mxu0 0
        %2611 = vmatpush1.bf16.msra.mxu0 0
        %2612 = vmatprep.subr.bf16.mxu0 0
        %2613 = vmatpush1.bf16.msra.mxu0 0
        %2614 = vmatprep.subr.bf16.mxu0 0
        %2615 = vmatpush1.bf16.msra.mxu0 0
        %2616 = vmatprep.mubr.bf16.mxu0 0
        %2617 = vmatmul.mubr.bf16.gmra.mrb[0].mxu0 %v2582
        %v2618 = vpop.f32.mrb[0].mxu0
        %v2619 = vadd.f32 0.0, %v2618
        %v2620 = vpop.f32.mrb[0].mxu0
        %v2621 = vpop.f32.mrb[0].mxu0
        %v2622 = vpop.f32.mrb[0].mxu0
        %2623 = vdwg.mxu0
        %v2624 = vadd.f32 %v2562, %v2619
        %s2625 = scalar_lea.vmem %s3, 176
        %v2626 = vld [vmem:[%s2625] sm:$0xf]
        %v2627 = vld [vmem:[%s2625 + $0x4] sm:$0xf]
        %v2628 = vld [vmem:[%s2625 + $0x8] sm:$0xf]
        %v2629 = vld [vmem:[%s2625 + $0xc] sm:$0xf]
        %v2630 = vrot.slane %v2504, 2
        %v2635 = vunpack.c.l.b16 %v2626
        %v2636 = vunpack.c.l.b16 %v2627
        %v2637 = vunpack.c.l.b16 %v2628
        %v2638 = vunpack.c.l.b16 %v2629
        %v2639 = vpack.c.b16 %v2636, %v2635
        %v2640 = vpack.c.b16 %v2638, %v2637
        %v2644 = vsel %vm1926, %v2630, 0
        %2646 = vmatprep.subr.bf16.mxu0 0
        %2647 = vmatpush1.bf16.msra.mxu0 %v2639
        %2648 = vmatprep.subr.bf16.mxu0 0
        %2649 = vmatpush1.bf16.msra.mxu0 %v2640
        %2650 = vmatprep.subr.bf16.mxu0 0
        %2651 = vmatpush1.bf16.msra.mxu0 0
        %2652 = vmatprep.subr.bf16.mxu0 0
        %2653 = vmatpush1.bf16.msra.mxu0 0
        %2654 = vmatprep.subr.bf16.mxu0 0
        %2655 = vmatpush1.bf16.msra.mxu0 0
        %2656 = vmatprep.subr.bf16.mxu0 0
        %2657 = vmatpush1.bf16.msra.mxu0 0
        %2658 = vmatprep.subr.bf16.mxu0 0
        %2659 = vmatpush1.bf16.msra.mxu0 0
        %2660 = vmatprep.subr.bf16.mxu0 0
        %2661 = vmatpush1.bf16.msra.mxu0 0
        %2662 = vmatprep.subr.bf16.mxu0 0
        %2663 = vmatpush1.bf16.msra.mxu0 0
        %2664 = vmatprep.subr.bf16.mxu0 0
        %2665 = vmatpush1.bf16.msra.mxu0 0
        %2666 = vmatprep.subr.bf16.mxu0 0
        %2667 = vmatpush1.bf16.msra.mxu0 0
        %2668 = vmatprep.subr.bf16.mxu0 0
        %2669 = vmatpush1.bf16.msra.mxu0 0
        %2670 = vmatprep.subr.bf16.mxu0 0
        %2671 = vmatpush1.bf16.msra.mxu0 0
        %2672 = vmatprep.subr.bf16.mxu0 0
        %2673 = vmatpush1.bf16.msra.mxu0 0
        %2674 = vmatprep.subr.bf16.mxu0 0
        %2675 = vmatpush1.bf16.msra.mxu0 0
        %2676 = vmatprep.subr.bf16.mxu0 0
        %2677 = vmatpush1.bf16.msra.mxu0 0
        %2678 = vmatprep.mubr.bf16.mxu0 0
        %2679 = vmatmul.mubr.bf16.gmra.mrb[0].mxu0 %v2644
        %v2680 = vpop.f32.mrb[0].mxu0
        %v2681 = vadd.f32 0.0, %v2680
        %v2682 = vpop.f32.mrb[0].mxu0
        %v2683 = vpop.f32.mrb[0].mxu0
        %v2684 = vpop.f32.mrb[0].mxu0
        %2685 = vdwg.mxu0
        %v2686 = vadd.f32 %v2624, %v2681
        %v2688 = vrot.slane %v1895, 5
        %v2689 = vsel %vm1899, %v2426, %v2688
        %v2692 = vmax.f32 %v1893, %v2426
        %v2693 = vmax.f32 %v1894, %v2689
        %v2695 = vrot.slane %v2693, 1
        %v2697 = vmax.f32 %v2692, %v2695
        %v2698 = vmax.f32 %v2693, %v2695
        %v2699 = vpack.c.bf16 %v2698, %v2697
        %s2700 = scalar_lea.vmem %s3, 192
        %v2701 = vld [vmem:[%s2700] sm:$0xf]
        %v2702 = vld [vmem:[%s2700 + $0x4] sm:$0xf]
        %v2703 = vld [vmem:[%s2700 + $0x8] sm:$0xf]
        %v2704 = vld [vmem:[%s2700 + $0xc] sm:$0xf]
        %v2706 = vshrl.u32 %v2699, 16
        %v2708 = vrot.slane %v2706, 3
        %v2713 = vunpack.c.l.b16 %v2701
        %v2714 = vunpack.c.l.b16 %v2702
        %v2715 = vunpack.c.l.b16 %v2703
        %v2716 = vunpack.c.l.b16 %v2704
        %v2717 = vpack.c.b16 %v2714, %v2713
        %v2718 = vpack.c.b16 %v2716, %v2715
        %v2722 = vsel %vm1926, %v2708, 0
        %2724 = vmatprep.subr.bf16.mxu0 0
        %2725 = vmatpush1.bf16.msra.mxu0 %v2717
        %2726 = vmatprep.subr.bf16.mxu0 0
        %2727 = vmatpush1.bf16.msra.mxu0 %v2718
        %2728 = vmatprep.subr.bf16.mxu0 0
        %2729 = vmatpush1.bf16.msra.mxu0 0
        %2730 = vmatprep.subr.bf16.mxu0 0
        %2731 = vmatpush1.bf16.msra.mxu0 0
        %2732 = vmatprep.subr.bf16.mxu0 0
        %2733 = vmatpush1.bf16.msra.mxu0 0
        %2734 = vmatprep.subr.bf16.mxu0 0
        %2735 = vmatpush1.bf16.msra.mxu0 0
        %2736 = vmatprep.subr.bf16.mxu0 0
        %2737 = vmatpush1.bf16.msra.mxu0 0
        %2738 = vmatprep.subr.bf16.mxu0 0
        %2739 = vmatpush1.bf16.msra.mxu0 0
        %2740 = vmatprep.subr.bf16.mxu0 0
        %2741 = vmatpush1.bf16.msra.mxu0 0
        %2742 = vmatprep.subr.bf16.mxu0 0
        %2743 = vmatpush1.bf16.msra.mxu0 0
        %2744 = vmatprep.subr.bf16.mxu0 0
        %2745 = vmatpush1.bf16.msra.mxu0 0
        %2746 = vmatprep.subr.bf16.mxu0 0
        %2747 = vmatpush1.bf16.msra.mxu0 0
        %2748 = vmatprep.subr.bf16.mxu0 0
        %2749 = vmatpush1.bf16.msra.mxu0 0
        %2750 = vmatprep.subr.bf16.mxu0 0
        %2751 = vmatpush1.bf16.msra.mxu0 0
        %2752 = vmatprep.subr.bf16.mxu0 0
        %2753 = vmatpush1.bf16.msra.mxu0 0
        %2754 = vmatprep.subr.bf16.mxu0 0
        %2755 = vmatpush1.bf16.msra.mxu0 0
        %2756 = vmatprep.mubr.bf16.mxu0 0
        %2757 = vmatmul.mubr.bf16.gmra.mrb[0].mxu0 %v2722
        %v2758 = vpop.f32.mrb[0].mxu0
        %v2759 = vadd.f32 0.0, %v2758
        %v2760 = vpop.f32.mrb[0].mxu0
        %v2761 = vpop.f32.mrb[0].mxu0
        %v2762 = vpop.f32.mrb[0].mxu0
        %2763 = vdwg.mxu0
        %v2764 = vadd.f32 %v2686, %v2759
        %s2765 = scalar_lea.vmem %s3, 208
        %v2766 = vld [vmem:[%s2765] sm:$0xf]
        %v2767 = vld [vmem:[%s2765 + $0x4] sm:$0xf]
        %v2768 = vld [vmem:[%s2765 + $0x8] sm:$0xf]
        %v2769 = vld [vmem:[%s2765 + $0xc] sm:$0xf]
        %v2771 = vrot.slane %v2699, 4
        %v2776 = vunpack.c.l.b16 %v2766
        %v2777 = vunpack.c.l.b16 %v2767
        %v2778 = vunpack.c.l.b16 %v2768
        %v2779 = vunpack.c.l.b16 %v2769
        %v2780 = vpack.c.b16 %v2777, %v2776
        %v2781 = vpack.c.b16 %v2779, %v2778
        %v2785 = vsel %vm1926, %v2771, 0
        %2787 = vmatprep.subr.bf16.mxu0 0
        %2788 = vmatpush1.bf16.msra.mxu0 %v2780
        %2789 = vmatprep.subr.bf16.mxu0 0
        %2790 = vmatpush1.bf16.msra.mxu0 %v2781
        %2791 = vmatprep.subr.bf16.mxu0 0
        %2792 = vmatpush1.bf16.msra.mxu0 0
        %2793 = vmatprep.subr.bf16.mxu0 0
        %2794 = vmatpush1.bf16.msra.mxu0 0
        %2795 = vmatprep.subr.bf16.mxu0 0
        %2796 = vmatpush1.bf16.msra.mxu0 0
        %2797 = vmatprep.subr.bf16.mxu0 0
        %2798 = vmatpush1.bf16.msra.mxu0 0
        %2799 = vmatprep.subr.bf16.mxu0 0
        %2800 = vmatpush1.bf16.msra.mxu0 0
        %2801 = vmatprep.subr.bf16.mxu0 0
        %2802 = vmatpush1.bf16.msra.mxu0 0
        %2803 = vmatprep.subr.bf16.mxu0 0
        %2804 = vmatpush1.bf16.msra.mxu0 0
        %2805 = vmatprep.subr.bf16.mxu0 0
        %2806 = vmatpush1.bf16.msra.mxu0 0
        %2807 = vmatprep.subr.bf16.mxu0 0
        %2808 = vmatpush1.bf16.msra.mxu0 0
        %2809 = vmatprep.subr.bf16.mxu0 0
        %2810 = vmatpush1.bf16.msra.mxu0 0
        %2811 = vmatprep.subr.bf16.mxu0 0
        %2812 = vmatpush1.bf16.msra.mxu0 0
        %2813 = vmatprep.subr.bf16.mxu0 0
        %2814 = vmatpush1.bf16.msra.mxu0 0
        %2815 = vmatprep.subr.bf16.mxu0 0
        %2816 = vmatpush1.bf16.msra.mxu0 0
        %2817 = vmatprep.subr.bf16.mxu0 0
        %2818 = vmatpush1.bf16.msra.mxu0 0
        %2819 = vmatprep.mubr.bf16.mxu0 0
        %2820 = vmatmul.mubr.bf16.gmra.mrb[0].mxu0 %v2785
        %v2821 = vpop.f32.mrb[0].mxu0
        %v2822 = vadd.f32 0.0, %v2821
        %v2823 = vpop.f32.mrb[0].mxu0
        %v2824 = vpop.f32.mrb[0].mxu0
        %v2825 = vpop.f32.mrb[0].mxu0
        %2826 = vdwg.mxu0
        %v2827 = vadd.f32 %v2764, %v2822
        %s2828 = scalar_lea.vmem %s3, 224
        %v2829 = vld [vmem:[%s2828] sm:$0xf]
        %v2830 = vld [vmem:[%s2828 + $0x4] sm:$0xf]
        %v2831 = vld [vmem:[%s2828 + $0x8] sm:$0xf]
        %v2832 = vld [vmem:[%s2828 + $0xc] sm:$0xf]
        %v2833 = vrot.slane %v2706, 4
        %v2838 = vunpack.c.l.b16 %v2829
        %v2839 = vunpack.c.l.b16 %v2830
        %v2840 = vunpack.c.l.b16 %v2831
        %v2841 = vunpack.c.l.b16 %v2832
        %v2842 = vpack.c.b16 %v2839, %v2838
        %v2843 = vpack.c.b16 %v2841, %v2840
        %v2847 = vsel %vm1926, %v2833, 0
        %2849 = vmatprep.subr.bf16.mxu0 0
        %2850 = vmatpush1.bf16.msra.mxu0 %v2842
        %2851 = vmatprep.subr.bf16.mxu0 0
        %2852 = vmatpush1.bf16.msra.mxu0 %v2843
        %2853 = vmatprep.subr.bf16.mxu0 0
        %2854 = vmatpush1.bf16.msra.mxu0 0
        %2855 = vmatprep.subr.bf16.mxu0 0
        %2856 = vmatpush1.bf16.msra.mxu0 0
        %2857 = vmatprep.subr.bf16.mxu0 0
        %2858 = vmatpush1.bf16.msra.mxu0 0
        %2859 = vmatprep.subr.bf16.mxu0 0
        %2860 = vmatpush1.bf16.msra.mxu0 0
        %2861 = vmatprep.subr.bf16.mxu0 0
        %2862 = vmatpush1.bf16.msra.mxu0 0
        %2863 = vmatprep.subr.bf16.mxu0 0
        %2864 = vmatpush1.bf16.msra.mxu0 0
        %2865 = vmatprep.subr.bf16.mxu0 0
        %2866 = vmatpush1.bf16.msra.mxu0 0
        %2867 = vmatprep.subr.bf16.mxu0 0
        %2868 = vmatpush1.bf16.msra.mxu0 0
        %2869 = vmatprep.subr.bf16.mxu0 0
        %2870 = vmatpush1.bf16.msra.mxu0 0
        %2871 = vmatprep.subr.bf16.mxu0 0
        %2872 = vmatpush1.bf16.msra.mxu0 0
        %2873 = vmatprep.subr.bf16.mxu0 0
        %2874 = vmatpush1.bf16.msra.mxu0 0
        %2875 = vmatprep.subr.bf16.mxu0 0
        %2876 = vmatpush1.bf16.msra.mxu0 0
        %2877 = vmatprep.subr.bf16.mxu0 0
        %2878 = vmatpush1.bf16.msra.mxu0 0
        %2879 = vmatprep.subr.bf16.mxu0 0
        %2880 = vmatpush1.bf16.msra.mxu0 0
        %2881 = vmatprep.mubr.bf16.mxu0 0
        %2882 = vmatmul.mubr.bf16.gmra.mrb[0].mxu0 %v2847
        %v2883 = vpop.f32.mrb[0].mxu0
        %v2884 = vadd.f32 0.0, %v2883
        %v2885 = vpop.f32.mrb[0].mxu0
        %v2886 = vpop.f32.mrb[0].mxu0
        %v2887 = vpop.f32.mrb[0].mxu0
        %2888 = vdwg.mxu0
        %v2889 = vadd.f32 %v2827, %v2884
        %s2890 = scalar_lea.vmem %s3, 240
        %v2891 = vld [vmem:[%s2890] sm:$0xf]
        %v2892 = vld [vmem:[%s2890 + $0x4] sm:$0xf]
        %v2893 = vld [vmem:[%s2890 + $0x8] sm:$0xf]
        %v2894 = vld [vmem:[%s2890 + $0xc] sm:$0xf]
        %v2895 = vrot.slane %v2699, 5
        %v2900 = vunpack.c.l.b16 %v2891
        %v2901 = vunpack.c.l.b16 %v2892
        %v2902 = vunpack.c.l.b16 %v2893
        %v2903 = vunpack.c.l.b16 %v2894
        %v2904 = vpack.c.b16 %v2901, %v2900
        %v2905 = vpack.c.b16 %v2903, %v2902
        %v2909 = vsel %vm1926, %v2895, 0
        %2911 = vmatprep.subr.bf16.mxu0 0
        %2912 = vmatpush1.bf16.msra.mxu0 %v2904
        %2913 = vmatprep.subr.bf16.mxu0 0
        %2914 = vmatpush1.bf16.msra.mxu0 %v2905
        %2915 = vmatprep.subr.bf16.mxu0 0
        %2916 = vmatpush1.bf16.msra.mxu0 0
        %2917 = vmatprep.subr.bf16.mxu0 0
        %2918 = vmatpush1.bf16.msra.mxu0 0
        %2919 = vmatprep.subr.bf16.mxu0 0
        %2920 = vmatpush1.bf16.msra.mxu0 0
        %2921 = vmatprep.subr.bf16.mxu0 0
        %2922 = vmatpush1.bf16.msra.mxu0 0
        %2923 = vmatprep.subr.bf16.mxu0 0
        %2924 = vmatpush1.bf16.msra.mxu0 0
        %2925 = vmatprep.subr.bf16.mxu0 0
        %2926 = vmatpush1.bf16.msra.mxu0 0
        %2927 = vmatprep.subr.bf16.mxu0 0
        %2928 = vmatpush1.bf16.msra.mxu0 0
        %2929 = vmatprep.subr.bf16.mxu0 0
        %2930 = vmatpush1.bf16.msra.mxu0 0
        %2931 = vmatprep.subr.bf16.mxu0 0
        %2932 = vmatpush1.bf16.msra.mxu0 0
        %2933 = vmatprep.subr.bf16.mxu0 0
        %2934 = vmatpush1.bf16.msra.mxu0 0
        %2935 = vmatprep.subr.bf16.mxu0 0
        %2936 = vmatpush1.bf16.msra.mxu0 0
        %2937 = vmatprep.subr.bf16.mxu0 0
        %2938 = vmatpush1.bf16.msra.mxu0 0
        %2939 = vmatprep.subr.bf16.mxu0 0
        %2940 = vmatpush1.bf16.msra.mxu0 0
        %2941 = vmatprep.subr.bf16.mxu0 0
        %2942 = vmatpush1.bf16.msra.mxu0 0
        %2943 = vmatprep.mubr.bf16.mxu0 0
        %2944 = vmatmul.mubr.bf16.gmra.mrb[0].mxu0 %v2909
        %v2945 = vpop.f32.mrb[0].mxu0
        %v2946 = vadd.f32 0.0, %v2945
        %v2947 = vpop.f32.mrb[0].mxu0
        %v2948 = vpop.f32.mrb[0].mxu0
        %v2949 = vpop.f32.mrb[0].mxu0
        %2950 = vdwg.mxu0
        %v2951 = vadd.f32 %v2889, %v2946
        %v2952 = vmax.f32 %v2951, 0.0
        %v2953 = vpack.c.bf16 %v2952, %v2952
        %v2954 = vld [vmem:[%s5] sm:$0xf]
        %v2955 = vld [vmem:[%s5 + $0x4] sm:$0xf]
        %v2956 = vld [vmem:[%s5 + $0x8] sm:$0xf]
        %v2957 = vld [vmem:[%s5 + $0xc] sm:$0xf]
        %v2958 = vld [vmem:[%s6] sm:$0x1]
        %v2963 = vunpack.c.l.b16 %v2954
        %v2964 = vunpack.c.l.b16 %v2955
        %v2965 = vunpack.c.l.b16 %v2956
        %v2966 = vunpack.c.l.b16 %v2957
        %v2967 = vpack.c.b16 %v2964, %v2963
        %v2968 = vpack.c.b16 %v2966, %v2965
        %v2972 = vsel %vm1926, %v2953, 0
        %2974 = vmatprep.subr.bf16.mxu0 0
        %2975 = vmatpush1.bf16.msra.mxu0 %v2967
        %2976 = vmatprep.subr.bf16.mxu0 0
        %2977 = vmatpush1.bf16.msra.mxu0 %v2968
        %2978 = vmatprep.subr.bf16.mxu0 0
        %2979 = vmatpush1.bf16.msra.mxu0 0
        %2980 = vmatprep.subr.bf16.mxu0 0
        %2981 = vmatpush1.bf16.msra.mxu0 0
        %2982 = vmatprep.subr.bf16.mxu0 0
        %2983 = vmatpush1.bf16.msra.mxu0 0
        %2984 = vmatprep.subr.bf16.mxu0 0
        %2985 = vmatpush1.bf16.msra.mxu0 0
        %2986 = vmatprep.subr.bf16.mxu0 0
        %2987 = vmatpush1.bf16.msra.mxu0 0
        %2988 = vmatprep.subr.bf16.mxu0 0
        %2989 = vmatpush1.bf16.msra.mxu0 0
        %2990 = vmatprep.subr.bf16.mxu0 0
        %2991 = vmatpush1.bf16.msra.mxu0 0
        %2992 = vmatprep.subr.bf16.mxu0 0
        %2993 = vmatpush1.bf16.msra.mxu0 0
        %2994 = vmatprep.subr.bf16.mxu0 0
        %2995 = vmatpush1.bf16.msra.mxu0 0
        %2996 = vmatprep.subr.bf16.mxu0 0
        %2997 = vmatpush1.bf16.msra.mxu0 0
        %2998 = vmatprep.subr.bf16.mxu0 0
        %2999 = vmatpush1.bf16.msra.mxu0 0
        %3000 = vmatprep.subr.bf16.mxu0 0
        %3001 = vmatpush1.bf16.msra.mxu0 0
        %3002 = vmatprep.subr.bf16.mxu0 0
        %3003 = vmatpush1.bf16.msra.mxu0 0
        %3004 = vmatprep.subr.bf16.mxu0 0
        %3005 = vmatpush1.bf16.msra.mxu0 0
        %3006 = vmatprep.mubr.bf16.mxu0 0
        %3007 = vmatmul.mubr.bf16.gmra.mrb[0].mxu0 %v2972
        %v3008 = vpop.f32.mrb[0].mxu0
        %v3009 = vadd.f32 %v2958, %v3008
        %v3010 = vpop.f32.mrb[0].mxu0
        %v3011 = vpop.f32.mrb[0].mxu0
        %v3012 = vpop.f32.mrb[0].mxu0
        %3013 = vdwg.mxu0
        %vm3014 = vcmask 73728
        %3015 = vst.msk [vmem:[%s270] sm:$0x1] %vm3014, %v3009
        %s3016 = sand.u32 %s181, 1
        %s3017 = scalar_lea.sflag [#allocation3], %s3016
        %s3018 = sand.u32 %s181, 1
        %s3019 = scalar_lea.vmem [#allocation2], %s3018
        // Predicated region
        $region49: #{cnn_mnist_forward.3} parent=47 // pred_check
          %p3020 = pneg %p191
        $region50: #{cnn_mnist_forward.3} parent=47 // pred_check_branch
          %3022 = sbr.rel (%p3020) target = $region52
        $region51: #{cnn_mnist_forward.3} parent=47 // pred_region
          %s3024 = ssub.s32 16, 16
          %3025 = vsyncadd %s3017, %s3024
          %s3026 = smul.addr %s21, 16
          %s3027 = scalar_lea.hbm %s7, %s3026
          %s3029 = sshll.u32 %s3019, 4
          %s3030 = int_to_ptr.vmem [resolvable:$true] %s3029
          %3032 = dma.vmem_to_hbm [thread:$0]  %s3030, 16, %s3027, %s3017
        $region52: #{cnn_mnist_forward.3} parent=47 // pred_fallthru
          _
      $region48: #{cnn_mnist_forward.3} parent=5 // pred_fallthru
        _
      %p3033 = scmp.le.s32.totalorder 2, %s16
      // Predicated region
      $region53: #{cnn_mnist_forward.3} parent=5 // pred_check
        %p3034 = pneg %p3033
      $region54: #{cnn_mnist_forward.3} parent=5 // pred_check_branch
        %3036 = sbr.rel (%p3034) target = $region56
      $region55: #{cnn_mnist_forward.3} parent=5 // pred_region
        %s3037 = ssub.s32 %s16, 2
        // Predicated region
        $region57: #{cnn_mnist_forward.3} parent=55 // pred_check
          %p3038 = pneg %p197
        $region58: #{cnn_mnist_forward.3} parent=55 // pred_check_branch
          %3040 = sbr.rel (%p3038) target = $region60
        $region59: #{cnn_mnist_forward.3} parent=55 // pred_region
          %s3041 = sand.u32 %s182, 1
          %s3042 = scalar_lea.sflag [#allocation3], %s3041
          %s3043 = sand.u32 %s182, 1
          %s3044 = scalar_lea.vmem [#allocation2], %s3043
          %3045 = dma.done %s3042, 16
        $region60: #{cnn_mnist_forward.3} parent=55 // pred_fallthru
          _
      $region56: #{cnn_mnist_forward.3} parent=5 // pred_fallthru
        _
    $region6: #{cnn_mnist_forward.3} parent=1 // loop_footer
      %s20 = sadd.s32 1, %s16
    $region7: #{cnn_mnist_forward.3} parent=1 // loop_footer_branch
      %15 = sbr.rel target = $region3
    $region8: #{cnn_mnist_forward.3} parent=1 // loop_exit
      _
    %3046 = vsyncpa [#allocation3], 1
    %s3047 = scalar_lea.sflag [#allocation3], 1
    %3048 = vsyncpa %s3047, 1

</llo_original>
